<compile_context>
chip_gen: v6e
topology: v6e:2x2x1
jax: 0.10.0
libtpu: 0.0.40
codegen_flags: <defaults>
</compile_context>

<pallas_src>
import jax
import jax.numpy as jnp
import numpy as np
from jax.experimental import pallas as pl
from jax.experimental.pallas import tpu as pltpu

KH = KW = 4
STRIDE = 2
PAD = 1
BN_EPS = 1e-5
NEG_SLOPE = 0.2

LANE = 128        # conv/linear OUTPUT channels padded to 128 -> unmasked vst
CIN_ALIGN = 32    # contraction-side channel padding: 16*32 = 512-feature rows
MAX_TM = 256      # GEMM rows per grid step


def _round_up(x, m):
    return ((x + m - 1) // m) * m


def _leaky(v):
    return jnp.where(v > 0, v, NEG_SLOPE * v)


def _pick_tm(m, max_tm=MAX_TM):
    """Largest power-of-two row tile <= max_tm dividing m (fallback: all of m).
    If a single tile would cover everything but there is plenty of work, split
    once so v7x's two TensorCores both get a grid block."""
    tm = max_tm
    while tm > 8 and m % tm:
        tm //= 2
    if m % tm:
        tm = m
    if tm == m and tm >= 2 * LANE and m % (tm // 2) == 0:
        tm //= 2
    return tm


def _vmem_limit(step_bytes):
    # double-buffered per-step working set + headroom, kept under v7x's 64 MiB.
    return int(min(max(4 * step_bytes + (4 << 20), 16 << 20), 56 << 20))


# ---------------------------------------------------------------------------
# Kernel 1: conv-as-GEMM (single long-K dot) + per-tile BatchNorm partial sums
# ---------------------------------------------------------------------------
def _conv_gemm_kernel(x_ref, w_ref, y_ref, sum_ref, sq_ref):
    # x_ref: (TM, K)   bf16 im2col rows        (K = 16 * cin32, multiple of 128)
    # w_ref: (K, 128)  bf16 weight tile (grid-resident along the row axis)
    # y_ref: (TM, 128) bf16 raw conv output (pre-BatchNorm), lane-dense
    # sum/sq: (1,1,1,128) f32 per-tile partial BatchNorm statistics
    acc = jnp.dot(x_ref[...], w_ref[...], preferred_element_type=jnp.float32)
    y_ref[...] = acc.astype(y_ref.dtype)
    sum_ref[0, 0] = jnp.sum(acc, axis=0, keepdims=True)
    sq_ref[0, 0] = jnp.sum(acc * acc, axis=0, keepdims=True)


def conv_layer(xcol, w_mat):
    """xcol (M, K) bf16, w_mat (K, Cp) bf16 -> y (M, Cp) bf16 + partial stats."""
    m, kt = xcol.shape
    kt2, cp = w_mat.shape
    assert kt == kt2 and kt % LANE == 0 and cp % LANE == 0
    tm = _pick_tm(m)
    mt, nt = m // tm, cp // LANE
    step_bytes = (tm * kt + kt * LANE + tm * LANE) * 2 + 2 * LANE * 4
    return pl.pallas_call(
        _conv_gemm_kernel,
        out_shape=(
            jax.ShapeDtypeStruct((m, cp), jnp.bfloat16),
            jax.ShapeDtypeStruct((mt, nt, 1, LANE), jnp.float32),
            jax.ShapeDtypeStruct((mt, nt, 1, LANE), jnp.float32),
        ),
        grid=(mt, nt),
        in_specs=[
            pl.BlockSpec((tm, kt), lambda i, j: (i, 0)),
            pl.BlockSpec((kt, LANE), lambda i, j: (0, j)),
        ],
        out_specs=(
            pl.BlockSpec((tm, LANE), lambda i, j: (i, j)),
            pl.BlockSpec((1, 1, 1, LANE), lambda i, j: (i, j, 0, 0)),
            pl.BlockSpec((1, 1, 1, LANE), lambda i, j: (i, j, 0, 0)),
        ),
        compiler_params=pltpu.CompilerParams(
            dimension_semantics=("parallel", "parallel"),
            vmem_limit_bytes=_vmem_limit(step_bytes),
        ),
    )(xcol, w_mat)


# ---------------------------------------------------------------------------
# Kernel 2: final Linear with the last BatchNorm + LeakyReLU fused on the
#           input side (per-feature affine) and the bias added on the output.
# ---------------------------------------------------------------------------
def _linear_kernel(x_ref, scale_ref, shift_ref, w_ref, b_ref, o_ref):
    x = x_ref[...].astype(jnp.float32)
    x = _leaky(x * scale_ref[...] + shift_ref[...])
    acc = jnp.dot(x.astype(jnp.bfloat16), w_ref[...],
                  preferred_element_type=jnp.float32)
    o_ref[...] = (acc + b_ref[...]).astype(o_ref.dtype)


def linear_layer(x, in_scale, in_shift, w_mat, bias):
    n, k = x.shape
    k2, dp = w_mat.shape
    assert k == k2
    tb = _pick_tm(n)
    step_bytes = (tb * k + k * dp) * 2 + (2 * k + dp + tb * dp) * 4
    return pl.pallas_call(
        _linear_kernel,
        out_shape=jax.ShapeDtypeStruct((n, dp), jnp.float32),
        grid=(n // tb,),
        in_specs=[
            pl.BlockSpec((tb, k), lambda i: (i, 0)),
            pl.BlockSpec((1, k), lambda i: (0, 0)),
            pl.BlockSpec((1, k), lambda i: (0, 0)),
            pl.BlockSpec((k, dp), lambda i: (0, 0)),
            pl.BlockSpec((1, dp), lambda i: (0, 0)),
        ],
        out_specs=pl.BlockSpec((tb, dp), lambda i: (i, 0)),
        compiler_params=pltpu.CompilerParams(
            dimension_semantics=("parallel",),
            vmem_limit_bytes=_vmem_limit(step_bytes),
        ),
    )(x, in_scale.reshape(1, k).astype(jnp.float32),
      in_shift.reshape(1, k).astype(jnp.float32),
      w_mat, bias.reshape(1, dp).astype(jnp.float32))


# ---------------------------------------------------------------------------
# Layout glue (plain JAX, fused by XLA): producer affine + LeakyReLU applied
# once per element, exact zero spatial padding, im2col with batch collapsed
# into the GEMM row dimension.
# ---------------------------------------------------------------------------
def _affine_leaky_act(y_flat, n, ho, wo, scale, shift, cin_use):
    y = y_flat.reshape(n, ho, wo, -1)[..., :cin_use].astype(jnp.float32)
    a = y * scale[:cin_use] + shift[:cin_use]
    return _leaky(a).astype(jnp.bfloat16)


def _im2col(a):
    """im2col for Conv2d(k=4, s=2, p=1) in NHWC; feature order (kh, kw, c),
    row order (image, out_row, out_col)."""
    n, h, w, c = a.shape
    ho, wo = h // 2, w // 2
    ap = jnp.pad(a, ((0, 0), (1, 1), (1, 1), (0, 0)))          # exact zeros
    cols = [ap[:, kh:kh + 2 * ho:2, kw:kw + 2 * wo:2, :]
            for kh in range(KH) for kw in range(KW)]
    xcol = jnp.concatenate(cols, axis=-1)                       # (n,ho,wo,16c)
    return xcol.reshape(n * ho * wo, KH * KW * c)


# ---------------------------------------------------------------------------
# Parameter preparation (host / trace-time, one-off)
# ---------------------------------------------------------------------------
def _pad_vec(v, size):
    return jnp.zeros((size,), jnp.float32).at[: v.shape[0]].set(v.astype(jnp.float32))


def _conv_w_to_mat(w_oihw, cin_p, cout_p):
    cout, cin, kh, kw = w_oihw.shape
    wp = jnp.zeros((cout_p, cin_p, kh, kw), jnp.float32)
    wp = wp.at[:cout, :cin].set(w_oihw.astype(jnp.float32))
    wp = wp.transpose(2, 3, 1, 0)                                # (kh,kw,ci,co)
    return wp.reshape(kh * kw * cin_p, cout_p).astype(jnp.bfloat16)


def _linear_w_to_mat(w_out, c_real, c_pad, hf, wf, dout_p):
    dout = w_out.shape[0]
    wm = w_out.reshape(dout, c_real, hf, wf).transpose(2, 3, 1, 0)  # (h,w,c,do)
    full = jnp.zeros((hf, wf, c_pad, dout_p), jnp.float32)
    full = full.at[:, :, :c_real, :dout].set(wm.astype(jnp.float32))
    return full.reshape(hf * wf * c_pad, dout_p).astype(jnp.bfloat16)


def prepare_params(params, in_chan, image_res, hidden_dims, latent_dim):
    cin0 = _round_up(in_chan, CIN_ALIGN)
    cout_pads = [_round_up(c, LANE) for c in hidden_dims]
    prep = {
        "w_mats": [_conv_w_to_mat(params["w_in"], cin0, cout_pads[0])],
        "b_in_p": _pad_vec(params["b_in"], cout_pads[0]),
        "gammas": [],
        "betas": [],
    }
    for i, (w, gamma, beta) in enumerate(params["mid"]):
        cin_p = _round_up(hidden_dims[i], CIN_ALIGN)
        prep["w_mats"].append(_conv_w_to_mat(w, cin_p, cout_pads[i + 1]))
        prep["gammas"].append(_pad_vec(gamma, cout_pads[i + 1]))
        prep["betas"].append(_pad_vec(beta, cout_pads[i + 1]))
    mult = image_res // 16
    dout_p = _round_up(2 * latent_dim, LANE)
    prep["w_out_mat"] = _linear_w_to_mat(params["w_out"], hidden_dims[-1],
                                         cout_pads[-1], mult, mult, dout_p)
    prep["b_out_p"] = _pad_vec(params["b_out"], dout_p)
    return prep


# ---------------------------------------------------------------------------
# Full Encoder forward
# ---------------------------------------------------------------------------
def _encoder_forward(x_nchw, prep, dout):
    n = x_nchw.shape[0]
    x = jnp.transpose(x_nchw, (0, 2, 3, 1)).astype(jnp.bfloat16)     # NHWC bf16
    cin0 = prep["w_mats"][0].shape[0] // (KH * KW)
    if cin0 > x.shape[-1]:
        x = jnp.pad(x, ((0, 0), (0, 0), (0, 0), (0, cin0 - x.shape[-1])))
    h = x.shape[1]

    # in_layer conv (its bias + LeakyReLU are deferred into the next glue pass)
    y, _, _ = conv_layer(_im2col(x), prep["w_mats"][0])
    ho = wo = h // 2
    scale = jnp.ones((prep["w_mats"][0].shape[1],), jnp.float32)
    shift = prep["b_in_p"]

    # mid_layers: Conv(no bias) -> BatchNorm(train) -> LeakyReLU
    for i in range(len(prep["w_mats"]) - 1):
        wm = prep["w_mats"][i + 1]
        cin_use = wm.shape[0] // (KH * KW)
        a = _affine_leaky_act(y, n, ho, wo, scale, shift, cin_use)
        y, psum, psq = conv_layer(_im2col(a), wm)
        ho, wo = ho // 2, wo // 2
        # finalize training-mode BatchNorm statistics (biased var, eps=1e-5)
        count = n * ho * wo
        mean = psum.sum(axis=(0, 2)).reshape(-1) / count
        var = jnp.maximum(psq.sum(axis=(0, 2)).reshape(-1) / count - mean * mean, 0.0)
        scale = prep["gammas"][i] * jax.lax.rsqrt(var + BN_EPS)
        shift = prep["betas"][i] - mean * scale

    # out_layer: Flatten (NHWC order, weights permuted host-side) + Linear,
    # with the last BN + LeakyReLU fused on the input side of the kernel.
    cp_last = prep["w_mats"][-1].shape[1]
    xf = y.reshape(n, ho * wo * cp_last)
    out = linear_layer(xf, jnp.tile(scale, ho * wo), jnp.tile(shift, ho * wo),
                       prep["w_out_mat"], prep["b_out_p"])
    return out[:, :dout]


encoder_forward = jax.jit(_encoder_forward, static_argnums=(2,))


# ---------------------------------------------------------------------------
# Deterministic synthetic parameters (shapes from Encoder.__init__)
# ---------------------------------------------------------------------------
def init_params(key, in_chan, latent_dim, hidden_dims, image_res):
    keys = iter(jax.random.split(key, 32))
    params = {}
    params["w_in"] = 0.1 * jax.random.normal(
        next(keys), (hidden_dims[0], in_chan, KH, KW), jnp.float32)
    params["b_in"] = 0.1 * jax.random.normal(next(keys), (hidden_dims[0],), jnp.float32)
    params["mid"] = []
    for i in range(len(hidden_dims) - 1):
        w = 0.1 * jax.random.normal(
            next(keys), (hidden_dims[i + 1], hidden_dims[i], KH, KW), jnp.float32)
        gamma = 1.0 + 0.1 * jax.random.normal(next(keys), (hidden_dims[i + 1],), jnp.float32)
        beta = 0.1 * jax.random.normal(next(keys), (hidden_dims[i + 1],), jnp.float32)
        params["mid"].append((w, gamma, beta))
    mult = image_res // 16
    feat = mult * mult * hidden_dims[-1]
    params["w_out"] = 0.1 * jax.random.normal(next(keys), (2 * latent_dim, feat), jnp.float32)
    params["b_out"] = 0.1 * jax.random.normal(next(keys), (2 * latent_dim,), jnp.float32)
    return params


# ---------------------------------------------------------------------------
# Pure-JAX f32 reference (correctness check only; training-mode BatchNorm)
# ---------------------------------------------------------------------------
def reference_forward(x, params):
    def conv(v, w):
        return jax.lax.conv_general_dilated(
            v, w, (STRIDE, STRIDE), [(PAD, PAD), (PAD, PAD)],
            dimension_numbers=("NCHW", "OIHW", "NCHW"),
            precision=jax.lax.Precision.HIGHEST,
        )

    y = conv(x, params["w_in"]) + params["b_in"][None, :, None, None]
    y = _leaky(y)
    for (w, gamma, beta) in params["mid"]:
        y = conv(y, w)
        mean = jnp.mean(y, axis=(0, 2, 3), keepdims=True)
        var = jnp.mean(jnp.square(y - mean), axis=(0, 2, 3), keepdims=True)
        y = (y - mean) * jax.lax.rsqrt(var + BN_EPS)
        y = y * gamma[None, :, None, None] + beta[None, :, None, None]
        y = _leaky(y)
    y = y.reshape(y.shape[0], -1)
    return y @ params["w_out"].T + params["b_out"]


if __name__ == "__main__":
    # 4 stride-2 convs halve 32 -> 2; Flatten feeds
    # Linear((image_res//16)^2 * hidden_dims[-1], 2*latent_dim).
    N, in_chan, latent_dim, image_res = 4, 4, 8, 32
    hidden_dims = [8, 16, 32, 32]

    key = jax.random.PRNGKey(0)
    kx, kp = jax.random.split(key)
    x = jax.random.normal(kx, (N, in_chan, image_res, image_res), jnp.float32)
    params = init_params(kp, in_chan, latent_dim, hidden_dims, image_res)
    prep = prepare_params(params, in_chan, image_res, hidden_dims, latent_dim)

    out = jax.block_until_ready(encoder_forward(x, prep, 2 * latent_dim))
    ref = jax.block_until_ready(reference_forward(x, params))

    assert out.shape == (N, 2 * latent_dim), out.shape
    # Tolerance reflects bf16 MXU operands / bf16 inter-layer activations.
    np.testing.assert_allclose(np.asarray(out), np.asarray(ref), rtol=3e-2, atol=3e-2)
    print("KERNEL_OK")
</pallas_src>

<mosaic_0001>
module attributes {stable_mosaic.version = 11 : i64} {
  func.func @_conv_gemm_kernel(%arg0: i32, %arg1: i32, %arg2: memref<256x512xbf16, #tpu.memory_space<vmem>>, %arg3: memref<512x128xbf16, #tpu.memory_space<vmem>>, %arg4: memref<256x128xbf16, #tpu.memory_space<vmem>>, %arg5: memref<1x1x1x128xf32, #tpu.memory_space<vmem>>, %arg6: memref<1x1x1x128xf32, #tpu.memory_space<vmem>>) attributes {dimension_semantics = [#tpu.dimension_semantics<parallel>, #tpu.dimension_semantics<parallel>], iteration_bounds = array<i64: 4, 1>, scalar_prefetch = 0 : i64, scratch_operands = 0 : i64, tpu.core_type = #tpu.core_type<tc>, window_params = [{transform_indices = @transform_0, window_bounds = array<i64: 256, 512>}, {transform_indices = @transform_1, window_bounds = array<i64: 512, 128>}, {transform_indices = @transform_2, window_bounds = array<i64: 256, 128>}, {transform_indices = @transform_3, window_bounds = array<i64: 1, 1, 1, 128>}, {transform_indices = @transform_4, window_bounds = array<i64: 1, 1, 1, 128>}]} {
    %c0 = arith.constant 0 : index
    %c0_0 = arith.constant 0 : index
    %0 = vector.load %arg2[%c0, %c0_0] : memref<256x512xbf16, #tpu.memory_space<vmem>>, vector<256x512xbf16>
    %c0_1 = arith.constant 0 : index
    %c0_2 = arith.constant 0 : index
    %1 = vector.load %arg3[%c0_1, %c0_2] : memref<512x128xbf16, #tpu.memory_space<vmem>>, vector<512x128xbf16>
    %cst = arith.constant dense<0.000000e+00> : vector<256x128xf32>
    %2 = tpu.matmul %0, %1, %cst {dimension_numbers = #tpu.dot_dimension_numbers<[1], [0], [0], [1], [0, 0, 1, 1], [], []>} : vector<256x512xbf16>, vector<512x128xbf16>, vector<256x128xf32> -> vector<256x128xf32>
    %3 = arith.truncf %2 : vector<256x128xf32> to vector<256x128xbf16>
    %c0_3 = arith.constant 0 : index
    %c0_4 = arith.constant 0 : index
    %4 = vector.load %arg4[%c0_3, %c0_4] : memref<256x128xbf16, #tpu.memory_space<vmem>>, vector<256x128xbf16>
    tpu.vector_store %arg4[%c0_3, %c0_4], %3 {strides = array<i32>} : memref<256x128xbf16, #tpu.memory_space<vmem>>, vector<256x128xbf16>,
    %cst_5 = arith.constant dense<0.000000e+00> : vector<128xf32>
    %5 = vector.multi_reduction <add>, %2, %cst_5 [0] : vector<256x128xf32> to vector<128xf32>
    %6 = vector.shape_cast %5 : vector<128xf32> to vector<1x128xf32>
    %c0_6 = arith.constant 0 : index
    %c0_7 = arith.constant 0 : index
    %c0_8 = arith.constant 0 : index
    %c0_9 = arith.constant 0 : index
    %7 = vector.load %arg5[%c0_6, %c0_7, %c0_8, %c0_9] : memref<1x1x1x128xf32, #tpu.memory_space<vmem>>, vector<1x1x1x128xf32>
    %8 = vector.shape_cast %7 : vector<1x1x1x128xf32> to vector<1x128xf32>
    %9 = vector.shape_cast %6 : vector<1x128xf32> to vector<1x1x1x128xf32>
    tpu.vector_store %arg5[%c0_6, %c0_7, %c0_8, %c0_9], %9 {strides = array<i32>} : memref<1x1x1x128xf32, #tpu.memory_space<vmem>>, vector<1x1x1x128xf32>,
    %10 = arith.mulf %2, %2 : vector<256x128xf32>
    %cst_10 = arith.constant dense<0.000000e+00> : vector<128xf32>
    %11 = vector.multi_reduction <add>, %10, %cst_10 [0] : vector<256x128xf32> to vector<128xf32>
    %12 = vector.shape_cast %11 : vector<128xf32> to vector<1x128xf32>
    %c0_11 = arith.constant 0 : index
    %c0_12 = arith.constant 0 : index
    %c0_13 = arith.constant 0 : index
    %c0_14 = arith.constant 0 : index
    %13 = vector.load %arg6[%c0_11, %c0_12, %c0_13, %c0_14] : memref<1x1x1x128xf32, #tpu.memory_space<vmem>>, vector<1x1x1x128xf32>
    %14 = vector.shape_cast %13 : vector<1x1x1x128xf32> to vector<1x128xf32>
    %15 = vector.shape_cast %12 : vector<1x128xf32> to vector<1x1x1x128xf32>
    tpu.vector_store %arg6[%c0_11, %c0_12, %c0_13, %c0_14], %15 {strides = array<i32>} : memref<1x1x1x128xf32, #tpu.memory_space<vmem>>, vector<1x1x1x128xf32>,
    return
  }
  func.func @transform_0(%arg0: i32, %arg1: i32) -> (i32, i32) {
    %c0_i32 = arith.constant 0 : i32
    %c0_i32_0 = arith.constant 0 : i32
    return %arg0, %c0_i32 : i32, i32
  }
  func.func @transform_1(%arg0: i32, %arg1: i32) -> (i32, i32) {
    %c0_i32 = arith.constant 0 : i32
    %c0_i32_0 = arith.constant 0 : i32
    return %c0_i32, %arg1 : i32, i32
  }
  func.func @transform_2(%arg0: i32, %arg1: i32) -> (i32, i32) {
    %c0_i32 = arith.constant 0 : i32
    return %arg0, %arg1 : i32, i32
  }
  func.func @transform_3(%arg0: i32, %arg1: i32) -> (i32, i32, i32, i32) {
    %c0_i32 = arith.constant 0 : i32
    %c0_i32_0 = arith.constant 0 : i32
    %c0_i32_1 = arith.constant 0 : i32
    return %arg0, %arg1, %c0_i32, %c0_i32_0 : i32, i32, i32, i32
  }
  func.func @transform_4(%arg0: i32, %arg1: i32) -> (i32, i32, i32, i32) {
    %c0_i32 = arith.constant 0 : i32
    %c0_i32_0 = arith.constant 0 : i32
    %c0_i32_1 = arith.constant 0 : i32
    return %arg0, %arg1, %c0_i32, %c0_i32_0 : i32, i32, i32, i32
  }
}

module attributes {stable_mosaic.version = 11 : i64} {
  func.func @_conv_gemm_kernel(%arg0: i32, %arg1: i32, %arg2: memref<128x512xbf16, #tpu.memory_space<vmem>>, %arg3: memref<512x128xbf16, #tpu.memory_space<vmem>>, %arg4: memref<128x128xbf16, #tpu.memory_space<vmem>>, %arg5: memref<1x1x1x128xf32, #tpu.memory_space<vmem>>, %arg6: memref<1x1x1x128xf32, #tpu.memory_space<vmem>>) attributes {dimension_semantics = [#tpu.dimension_semantics<parallel>, #tpu.dimension_semantics<parallel>], iteration_bounds = array<i64: 2, 1>, scalar_prefetch = 0 : i64, scratch_operands = 0 : i64, tpu.core_type = #tpu.core_type<tc>, window_params = [{transform_indices = @transform_0, window_bounds = array<i64: 128, 512>}, {transform_indices = @transform_1, window_bounds = array<i64: 512, 128>}, {transform_indices = @transform_2, window_bounds = array<i64: 128, 128>}, {transform_indices = @transform_3, window_bounds = array<i64: 1, 1, 1, 128>}, {transform_indices = @transform_4, window_bounds = array<i64: 1, 1, 1, 128>}]} {
    %c0 = arith.constant 0 : index
    %c0_0 = arith.constant 0 : index
    %0 = vector.load %arg2[%c0, %c0_0] : memref<128x512xbf16, #tpu.memory_space<vmem>>, vector<128x512xbf16>
    %c0_1 = arith.constant 0 : index
    %c0_2 = arith.constant 0 : index
    %1 = vector.load %arg3[%c0_1, %c0_2] : memref<512x128xbf16, #tpu.memory_space<vmem>>, vector<512x128xbf16>
    %cst = arith.constant dense<0.000000e+00> : vector<128x128xf32>
    %2 = tpu.matmul %0, %1, %cst {dimension_numbers = #tpu.dot_dimension_numbers<[1], [0], [0], [1], [0, 0, 1, 1], [], []>} : vector<128x512xbf16>, vector<512x128xbf16>, vector<128x128xf32> -> vector<128x128xf32>
    %3 = arith.truncf %2 : vector<128x128xf32> to vector<128x128xbf16>
    %c0_3 = arith.constant 0 : index
    %c0_4 = arith.constant 0 : index
    %4 = vector.load %arg4[%c0_3, %c0_4] : memref<128x128xbf16, #tpu.memory_space<vmem>>, vector<128x128xbf16>
    tpu.vector_store %arg4[%c0_3, %c0_4], %3 {strides = array<i32>} : memref<128x128xbf16, #tpu.memory_space<vmem>>, vector<128x128xbf16>,
    %cst_5 = arith.constant dense<0.000000e+00> : vector<128xf32>
    %5 = vector.multi_reduction <add>, %2, %cst_5 [0] : vector<128x128xf32> to vector<128xf32>
    %6 = vector.shape_cast %5 : vector<128xf32> to vector<1x128xf32>
    %c0_6 = arith.constant 0 : index
    %c0_7 = arith.constant 0 : index
    %c0_8 = arith.constant 0 : index
    %c0_9 = arith.constant 0 : index
    %7 = vector.load %arg5[%c0_6, %c0_7, %c0_8, %c0_9] : memref<1x1x1x128xf32, #tpu.memory_space<vmem>>, vector<1x1x1x128xf32>
    %8 = vector.shape_cast %7 : vector<1x1x1x128xf32> to vector<1x128xf32>
    %9 = vector.shape_cast %6 : vector<1x128xf32> to vector<1x1x1x128xf32>
    tpu.vector_store %arg5[%c0_6, %c0_7, %c0_8, %c0_9], %9 {strides = array<i32>} : memref<1x1x1x128xf32, #tpu.memory_space<vmem>>, vector<1x1x1x128xf32>,
    %10 = arith.mulf %2, %2 : vector<128x128xf32>
    %cst_10 = arith.constant dense<0.000000e+00> : vector<128xf32>
    %11 = vector.multi_reduction <add>, %10, %cst_10 [0] : vector<128x128xf32> to vector<128xf32>
    %12 = vector.shape_cast %11 : vector<128xf32> to vector<1x128xf32>
    %c0_11 = arith.constant 0 : index
    %c0_12 = arith.constant 0 : index
    %c0_13 = arith.constant 0 : index
    %c0_14 = arith.constant 0 : index
    %13 = vector.load %arg6[%c0_11, %c0_12, %c0_13, %c0_14] : memref<1x1x1x128xf32, #tpu.memory_space<vmem>>, vector<1x1x1x128xf32>
    %14 = vector.shape_cast %13 : vector<1x1x1x128xf32> to vector<1x128xf32>
    %15 = vector.shape_cast %12 : vector<1x128xf32> to vector<1x1x1x128xf32>
    tpu.vector_store %arg6[%c0_11, %c0_12, %c0_13, %c0_14], %15 {strides = array<i32>} : memref<1x1x1x128xf32, #tpu.memory_space<vmem>>, vector<1x1x1x128xf32>,
    return
  }
  func.func @transform_0(%arg0: i32, %arg1: i32) -> (i32, i32) {
    %c0_i32 = arith.constant 0 : i32
    %c0_i32_0 = arith.constant 0 : i32
    return %arg0, %c0_i32 : i32, i32
  }
  func.func @transform_1(%arg0: i32, %arg1: i32) -> (i32, i32) {
    %c0_i32 = arith.constant 0 : i32
    %c0_i32_0 = arith.constant 0 : i32
    return %c0_i32, %arg1 : i32, i32
  }
  func.func @transform_2(%arg0: i32, %arg1: i32) -> (i32, i32) {
    %c0_i32 = arith.constant 0 : i32
    return %arg0, %arg1 : i32, i32
  }
  func.func @transform_3(%arg0: i32, %arg1: i32) -> (i32, i32, i32, i32) {
    %c0_i32 = arith.constant 0 : i32
    %c0_i32_0 = arith.constant 0 : i32
    %c0_i32_1 = arith.constant 0 : i32
    return %arg0, %arg1, %c0_i32, %c0_i32_0 : i32, i32, i32, i32
  }
  func.func @transform_4(%arg0: i32, %arg1: i32) -> (i32, i32, i32, i32) {
    %c0_i32 = arith.constant 0 : i32
    %c0_i32_0 = arith.constant 0 : i32
    %c0_i32_1 = arith.constant 0 : i32
    return %arg0, %arg1, %c0_i32, %c0_i32_0 : i32, i32, i32, i32
  }
}

module attributes {stable_mosaic.version = 11 : i64} {
  func.func @_conv_gemm_kernel(%arg0: i32, %arg1: i32, %arg2: memref<64x512xbf16, #tpu.memory_space<vmem>>, %arg3: memref<512x128xbf16, #tpu.memory_space<vmem>>, %arg4: memref<64x128xbf16, #tpu.memory_space<vmem>>, %arg5: memref<1x1x1x128xf32, #tpu.memory_space<vmem>>, %arg6: memref<1x1x1x128xf32, #tpu.memory_space<vmem>>) attributes {dimension_semantics = [#tpu.dimension_semantics<parallel>, #tpu.dimension_semantics<parallel>], iteration_bounds = array<i64: 1, 1>, scalar_prefetch = 0 : i64, scratch_operands = 0 : i64, tpu.core_type = #tpu.core_type<tc>, window_params = [{transform_indices = @transform_0, window_bounds = array<i64: 64, 512>}, {transform_indices = @transform_1, window_bounds = array<i64: 512, 128>}, {transform_indices = @transform_2, window_bounds = array<i64: 64, 128>}, {transform_indices = @transform_3, window_bounds = array<i64: 1, 1, 1, 128>}, {transform_indices = @transform_4, window_bounds = array<i64: 1, 1, 1, 128>}]} {
    %c0 = arith.constant 0 : index
    %c0_0 = arith.constant 0 : index
    %0 = vector.load %arg2[%c0, %c0_0] : memref<64x512xbf16, #tpu.memory_space<vmem>>, vector<64x512xbf16>
    %c0_1 = arith.constant 0 : index
    %c0_2 = arith.constant 0 : index
    %1 = vector.load %arg3[%c0_1, %c0_2] : memref<512x128xbf16, #tpu.memory_space<vmem>>, vector<512x128xbf16>
    %cst = arith.constant dense<0.000000e+00> : vector<64x128xf32>
    %2 = tpu.matmul %0, %1, %cst {dimension_numbers = #tpu.dot_dimension_numbers<[1], [0], [0], [1], [0, 0, 1, 1], [], []>} : vector<64x512xbf16>, vector<512x128xbf16>, vector<64x128xf32> -> vector<64x128xf32>
    %3 = arith.truncf %2 : vector<64x128xf32> to vector<64x128xbf16>
    %c0_3 = arith.constant 0 : index
    %c0_4 = arith.constant 0 : index
    %4 = vector.load %arg4[%c0_3, %c0_4] : memref<64x128xbf16, #tpu.memory_space<vmem>>, vector<64x128xbf16>
    tpu.vector_store %arg4[%c0_3, %c0_4], %3 {strides = array<i32>} : memref<64x128xbf16, #tpu.memory_space<vmem>>, vector<64x128xbf16>,
    %cst_5 = arith.constant dense<0.000000e+00> : vector<128xf32>
    %5 = vector.multi_reduction <add>, %2, %cst_5 [0] : vector<64x128xf32> to vector<128xf32>
    %6 = vector.shape_cast %5 : vector<128xf32> to vector<1x128xf32>
    %c0_6 = arith.constant 0 : index
    %c0_7 = arith.constant 0 : index
    %c0_8 = arith.constant 0 : index
    %c0_9 = arith.constant 0 : index
    %7 = vector.load %arg5[%c0_6, %c0_7, %c0_8, %c0_9] : memref<1x1x1x128xf32, #tpu.memory_space<vmem>>, vector<1x1x1x128xf32>
    %8 = vector.shape_cast %7 : vector<1x1x1x128xf32> to vector<1x128xf32>
    %9 = vector.shape_cast %6 : vector<1x128xf32> to vector<1x1x1x128xf32>
    tpu.vector_store %arg5[%c0_6, %c0_7, %c0_8, %c0_9], %9 {strides = array<i32>} : memref<1x1x1x128xf32, #tpu.memory_space<vmem>>, vector<1x1x1x128xf32>,
    %10 = arith.mulf %2, %2 : vector<64x128xf32>
    %cst_10 = arith.constant dense<0.000000e+00> : vector<128xf32>
    %11 = vector.multi_reduction <add>, %10, %cst_10 [0] : vector<64x128xf32> to vector<128xf32>
    %12 = vector.shape_cast %11 : vector<128xf32> to vector<1x128xf32>
    %c0_11 = arith.constant 0 : index
    %c0_12 = arith.constant 0 : index
    %c0_13 = arith.constant 0 : index
    %c0_14 = arith.constant 0 : index
    %13 = vector.load %arg6[%c0_11, %c0_12, %c0_13, %c0_14] : memref<1x1x1x128xf32, #tpu.memory_space<vmem>>, vector<1x1x1x128xf32>
    %14 = vector.shape_cast %13 : vector<1x1x1x128xf32> to vector<1x128xf32>
    %15 = vector.shape_cast %12 : vector<1x128xf32> to vector<1x1x1x128xf32>
    tpu.vector_store %arg6[%c0_11, %c0_12, %c0_13, %c0_14], %15 {strides = array<i32>} : memref<1x1x1x128xf32, #tpu.memory_space<vmem>>, vector<1x1x1x128xf32>,
    return
  }
  func.func @transform_0(%arg0: i32, %arg1: i32) -> (i32, i32) {
    %c0_i32 = arith.constant 0 : i32
    %c0_i32_0 = arith.constant 0 : i32
    return %arg0, %c0_i32 : i32, i32
  }
  func.func @transform_1(%arg0: i32, %arg1: i32) -> (i32, i32) {
    %c0_i32 = arith.constant 0 : i32
    %c0_i32_0 = arith.constant 0 : i32
    return %c0_i32, %arg1 : i32, i32
  }
  func.func @transform_2(%arg0: i32, %arg1: i32) -> (i32, i32) {
    %c0_i32 = arith.constant 0 : i32
    return %arg0, %arg1 : i32, i32
  }
  func.func @transform_3(%arg0: i32, %arg1: i32) -> (i32, i32, i32, i32) {
    %c0_i32 = arith.constant 0 : i32
    %c0_i32_0 = arith.constant 0 : i32
    %c0_i32_1 = arith.constant 0 : i32
    return %arg0, %arg1, %c0_i32, %c0_i32_0 : i32, i32, i32, i32
  }
  func.func @transform_4(%arg0: i32, %arg1: i32) -> (i32, i32, i32, i32) {
    %c0_i32 = arith.constant 0 : i32
    %c0_i32_0 = arith.constant 0 : i32
    %c0_i32_1 = arith.constant 0 : i32
    return %arg0, %arg1, %c0_i32, %c0_i32_0 : i32, i32, i32, i32
  }
}

module attributes {stable_mosaic.version = 11 : i64} {
  func.func @_conv_gemm_kernel(%arg0: i32, %arg1: i32, %arg2: memref<16x512xbf16, #tpu.memory_space<vmem>>, %arg3: memref<512x128xbf16, #tpu.memory_space<vmem>>, %arg4: memref<16x128xbf16, #tpu.memory_space<vmem>>, %arg5: memref<1x1x1x128xf32, #tpu.memory_space<vmem>>, %arg6: memref<1x1x1x128xf32, #tpu.memory_space<vmem>>) attributes {dimension_semantics = [#tpu.dimension_semantics<parallel>, #tpu.dimension_semantics<parallel>], iteration_bounds = array<i64: 1, 1>, scalar_prefetch = 0 : i64, scratch_operands = 0 : i64, tpu.core_type = #tpu.core_type<tc>, window_params = [{transform_indices = @transform_0, window_bounds = array<i64: 16, 512>}, {transform_indices = @transform_1, window_bounds = array<i64: 512, 128>}, {transform_indices = @transform_2, window_bounds = array<i64: 16, 128>}, {transform_indices = @transform_3, window_bounds = array<i64: 1, 1, 1, 128>}, {transform_indices = @transform_4, window_bounds = array<i64: 1, 1, 1, 128>}]} {
    %c0 = arith.constant 0 : index
    %c0_0 = arith.constant 0 : index
    %0 = vector.load %arg2[%c0, %c0_0] : memref<16x512xbf16, #tpu.memory_space<vmem>>, vector<16x512xbf16>
    %c0_1 = arith.constant 0 : index
    %c0_2 = arith.constant 0 : index
    %1 = vector.load %arg3[%c0_1, %c0_2] : memref<512x128xbf16, #tpu.memory_space<vmem>>, vector<512x128xbf16>
    %cst = arith.constant dense<0.000000e+00> : vector<16x128xf32>
    %2 = tpu.matmul %0, %1, %cst {dimension_numbers = #tpu.dot_dimension_numbers<[1], [0], [0], [1], [0, 0, 1, 1], [], []>} : vector<16x512xbf16>, vector<512x128xbf16>, vector<16x128xf32> -> vector<16x128xf32>
    %3 = arith.truncf %2 : vector<16x128xf32> to vector<16x128xbf16>
    %c0_3 = arith.constant 0 : index
    %c0_4 = arith.constant 0 : index
    %4 = vector.load %arg4[%c0_3, %c0_4] : memref<16x128xbf16, #tpu.memory_space<vmem>>, vector<16x128xbf16>
    tpu.vector_store %arg4[%c0_3, %c0_4], %3 {strides = array<i32>} : memref<16x128xbf16, #tpu.memory_space<vmem>>, vector<16x128xbf16>,
    %cst_5 = arith.constant dense<0.000000e+00> : vector<128xf32>
    %5 = vector.multi_reduction <add>, %2, %cst_5 [0] : vector<16x128xf32> to vector<128xf32>
    %6 = vector.shape_cast %5 : vector<128xf32> to vector<1x128xf32>
    %c0_6 = arith.constant 0 : index
    %c0_7 = arith.constant 0 : index
    %c0_8 = arith.constant 0 : index
    %c0_9 = arith.constant 0 : index
    %7 = vector.load %arg5[%c0_6, %c0_7, %c0_8, %c0_9] : memref<1x1x1x128xf32, #tpu.memory_space<vmem>>, vector<1x1x1x128xf32>
    %8 = vector.shape_cast %7 : vector<1x1x1x128xf32> to vector<1x128xf32>
    %9 = vector.shape_cast %6 : vector<1x128xf32> to vector<1x1x1x128xf32>
    tpu.vector_store %arg5[%c0_6, %c0_7, %c0_8, %c0_9], %9 {strides = array<i32>} : memref<1x1x1x128xf32, #tpu.memory_space<vmem>>, vector<1x1x1x128xf32>,
    %10 = arith.mulf %2, %2 : vector<16x128xf32>
    %cst_10 = arith.constant dense<0.000000e+00> : vector<128xf32>
    %11 = vector.multi_reduction <add>, %10, %cst_10 [0] : vector<16x128xf32> to vector<128xf32>
    %12 = vector.shape_cast %11 : vector<128xf32> to vector<1x128xf32>
    %c0_11 = arith.constant 0 : index
    %c0_12 = arith.constant 0 : index
    %c0_13 = arith.constant 0 : index
    %c0_14 = arith.constant 0 : index
    %13 = vector.load %arg6[%c0_11, %c0_12, %c0_13, %c0_14] : memref<1x1x1x128xf32, #tpu.memory_space<vmem>>, vector<1x1x1x128xf32>
    %14 = vector.shape_cast %13 : vector<1x1x1x128xf32> to vector<1x128xf32>
    %15 = vector.shape_cast %12 : vector<1x128xf32> to vector<1x1x1x128xf32>
    tpu.vector_store %arg6[%c0_11, %c0_12, %c0_13, %c0_14], %15 {strides = array<i32>} : memref<1x1x1x128xf32, #tpu.memory_space<vmem>>, vector<1x1x1x128xf32>,
    return
  }
  func.func @transform_0(%arg0: i32, %arg1: i32) -> (i32, i32) {
    %c0_i32 = arith.constant 0 : i32
    %c0_i32_0 = arith.constant 0 : i32
    return %arg0, %c0_i32 : i32, i32
  }
  func.func @transform_1(%arg0: i32, %arg1: i32) -> (i32, i32) {
    %c0_i32 = arith.constant 0 : i32
    %c0_i32_0 = arith.constant 0 : i32
    return %c0_i32, %arg1 : i32, i32
  }
  func.func @transform_2(%arg0: i32, %arg1: i32) -> (i32, i32) {
    %c0_i32 = arith.constant 0 : i32
    return %arg0, %arg1 : i32, i32
  }
  func.func @transform_3(%arg0: i32, %arg1: i32) -> (i32, i32, i32, i32) {
    %c0_i32 = arith.constant 0 : i32
    %c0_i32_0 = arith.constant 0 : i32
    %c0_i32_1 = arith.constant 0 : i32
    return %arg0, %arg1, %c0_i32, %c0_i32_0 : i32, i32, i32, i32
  }
  func.func @transform_4(%arg0: i32, %arg1: i32) -> (i32, i32, i32, i32) {
    %c0_i32 = arith.constant 0 : i32
    %c0_i32_0 = arith.constant 0 : i32
    %c0_i32_1 = arith.constant 0 : i32
    return %arg0, %arg1, %c0_i32, %c0_i32_0 : i32, i32, i32, i32
  }
}

module attributes {stable_mosaic.version = 11 : i64} {
  func.func @_linear_kernel(%arg0: i32, %arg1: memref<4x512xbf16, #tpu.memory_space<vmem>>, %arg2: memref<1x512xf32, #tpu.memory_space<vmem>>, %arg3: memref<1x512xf32, #tpu.memory_space<vmem>>, %arg4: memref<512x128xbf16, #tpu.memory_space<vmem>>, %arg5: memref<1x128xf32, #tpu.memory_space<vmem>>, %arg6: memref<4x128xf32, #tpu.memory_space<vmem>>) attributes {dimension_semantics = [#tpu.dimension_semantics<parallel>], iteration_bounds = array<i64: 1>, scalar_prefetch = 0 : i64, scratch_operands = 0 : i64, tpu.core_type = #tpu.core_type<tc>, window_params = [{transform_indices = @transform_0, window_bounds = array<i64: 4, 512>}, {pipeline_mode = #tpu.pipeline_mode<synchronous>, transform_indices = @transform_1, window_bounds = array<i64: 1, 512>}, {pipeline_mode = #tpu.pipeline_mode<synchronous>, transform_indices = @transform_2, window_bounds = array<i64: 1, 512>}, {pipeline_mode = #tpu.pipeline_mode<synchronous>, transform_indices = @transform_3, window_bounds = array<i64: 512, 128>}, {pipeline_mode = #tpu.pipeline_mode<synchronous>, transform_indices = @transform_4, window_bounds = array<i64: 1, 128>}, {transform_indices = @transform_5, window_bounds = array<i64: 4, 128>}]} {
    %c0 = arith.constant 0 : index
    %c0_0 = arith.constant 0 : index
    %0 = vector.load %arg1[%c0, %c0_0] : memref<4x512xbf16, #tpu.memory_space<vmem>>, vector<4x512xbf16>
    %1 = arith.extf %0 : vector<4x512xbf16> to vector<4x512xf32>
    %c0_1 = arith.constant 0 : index
    %c0_2 = arith.constant 0 : index
    %2 = vector.load %arg2[%c0_1, %c0_2] : memref<1x512xf32, #tpu.memory_space<vmem>>, vector<1x512xf32>
    %3 = vector.broadcast %2 : vector<1x512xf32> to vector<4x512xf32>
    %4 = arith.mulf %1, %3 : vector<4x512xf32>
    %c0_3 = arith.constant 0 : index
    %c0_4 = arith.constant 0 : index
    %5 = vector.load %arg3[%c0_3, %c0_4] : memref<1x512xf32, #tpu.memory_space<vmem>>, vector<1x512xf32>
    %6 = vector.broadcast %5 : vector<1x512xf32> to vector<4x512xf32>
    %7 = arith.addf %4, %6 : vector<4x512xf32>
    %cst = arith.constant 0.000000e+00 : f32
    %8 = vector.broadcast %cst : f32 to vector<4x512xf32>
    %9 = arith.cmpf ogt, %7, %8 : vector<4x512xf32>
    %cst_5 = arith.constant 2.000000e-01 : f32
    %10 = vector.broadcast %cst_5 : f32 to vector<4x512xf32>
    %11 = arith.mulf %10, %7 : vector<4x512xf32>
    %12 = arith.select %9, %7, %11 : vector<4x512xi1>, vector<4x512xf32>
    %13 = arith.truncf %12 : vector<4x512xf32> to vector<4x512xbf16>
    %c0_6 = arith.constant 0 : index
    %c0_7 = arith.constant 0 : index
    %14 = vector.load %arg4[%c0_6, %c0_7] : memref<512x128xbf16, #tpu.memory_space<vmem>>, vector<512x128xbf16>
    %cst_8 = arith.constant dense<0.000000e+00> : vector<4x128xf32>
    %15 = tpu.matmul %13, %14, %cst_8 {dimension_numbers = #tpu.dot_dimension_numbers<[1], [0], [0], [1], [0, 0, 1, 1], [], []>} : vector<4x512xbf16>, vector<512x128xbf16>, vector<4x128xf32> -> vector<4x128xf32>
    %c0_9 = arith.constant 0 : index
    %c0_10 = arith.constant 0 : index
    %16 = vector.load %arg5[%c0_9, %c0_10] : memref<1x128xf32, #tpu.memory_space<vmem>>, vector<1x128xf32>
    %17 = vector.broadcast %16 : vector<1x128xf32> to vector<4x128xf32>
    %18 = arith.addf %15, %17 : vector<4x128xf32>
    %c0_11 = arith.constant 0 : index
    %c0_12 = arith.constant 0 : index
    %19 = vector.load %arg6[%c0_11, %c0_12] : memref<4x128xf32, #tpu.memory_space<vmem>>, vector<4x128xf32>
    tpu.vector_store %arg6[%c0_11, %c0_12], %18 {strides = array<i32>} : memref<4x128xf32, #tpu.memory_space<vmem>>, vector<4x128xf32>,
    return
  }
  func.func @transform_0(%arg0: i32) -> (i32, i32) {
    %c0_i32 = arith.constant 0 : i32
    %c0_i32_0 = arith.constant 0 : i32
    return %arg0, %c0_i32 : i32, i32
  }
  func.func @transform_1(%arg0: i32) -> (i32, i32) {
    %c0_i32 = arith.constant 0 : i32
    %c0_i32_0 = arith.constant 0 : i32
    %c0_i32_1 = arith.constant 0 : i32
    return %c0_i32, %c0_i32_0 : i32, i32
  }
  func.func @transform_2(%arg0: i32) -> (i32, i32) {
    %c0_i32 = arith.constant 0 : i32
    %c0_i32_0 = arith.constant 0 : i32
    %c0_i32_1 = arith.constant 0 : i32
    return %c0_i32, %c0_i32_0 : i32, i32
  }
  func.func @transform_3(%arg0: i32) -> (i32, i32) {
    %c0_i32 = arith.constant 0 : i32
    %c0_i32_0 = arith.constant 0 : i32
    %c0_i32_1 = arith.constant 0 : i32
    return %c0_i32, %c0_i32_0 : i32, i32
  }
  func.func @transform_4(%arg0: i32) -> (i32, i32) {
    %c0_i32 = arith.constant 0 : i32
    %c0_i32_0 = arith.constant 0 : i32
    %c0_i32_1 = arith.constant 0 : i32
    return %c0_i32, %c0_i32_0 : i32, i32
  }
  func.func @transform_5(%arg0: i32) -> (i32, i32) {
    %c0_i32 = arith.constant 0 : i32
    %c0_i32_0 = arith.constant 0 : i32
    return %arg0, %c0_i32 : i32, i32
  }
}

</mosaic_0001>

<llo_original>
// kernel: _encoder_forward.5
$region0: #{_encoder_forward.5}
  #allocation0 [shape = 'u32[]', space=smem, size = 0x4, offset = 0x4, fixed_abs, tag = 'smem constant byte address 0x4 - core index']
  #allocation1 [shape = 'u32[144,128]{1,0:T(1,128)}', space=vmem, size = 0x12000, scoped, tag = 'internal scratch']
  %s0 = inlined_call_operand.vmem [shape: bf16[1024,512], index: 0, kind: input, shape index: {}]
  %s1 = inlined_call_operand.vmem [shape: bf16[512,128], index: 1, kind: input, shape index: {}]
  %s2 = inlined_call_operand.vmem [shape: bf16[1024,128], index: 2, kind: output, shape index: {0}]
  %s3 = inlined_call_operand.hbm [shape: f32[4,1,1,128], index: 3, kind: output, shape index: {1}]
  %s4 = inlined_call_operand.hbm [shape: f32[4,1,1,128], index: 4, kind: output, shape index: {2}]
  %5 = xla_tuple %s2, %s3, %s4
  %s6 = sld [smem:[#allocation0]]
  $region57: #{_encoder_forward.5} parent=0
    _
  %s8 = ssub.s32 1, %s6
  %s9 = scalar_select 0, %s8, %s6
  $region1: #{_encoder_forward.5} parent=0
    #allocation2 [shape = 'u8[1024]{0}', space=vmem, size = 0x400, scoped, tag = 'output window, operand 1']
    #allocation3 [shape = 's32[2]{0}', space=sflag, size = 0x8, scoped, tag = 'scoped memory for _encoder_forward.5']
    #allocation4 [shape = 'u8[1024]{0}', space=vmem, size = 0x400, scoped, tag = 'output window, operand 2']
    #allocation5 [shape = 's32[2]{0}', space=sflag, size = 0x8, scoped, tag = 'scoped memory for _encoder_forward.5']
    %10 = vsyncpa [#allocation3], 0
    %s11 = scalar_lea.sflag [#allocation3], 1
    %12 = vsyncpa %s11, 0
    %13 = vsyncpa [#allocation5], 0
    %s14 = scalar_lea.sflag [#allocation5], 1
    %15 = vsyncpa %s14, 0
    loop: start=0, step=1, limit=6
    $region2: #{_encoder_forward.5} parent=1 // loop_pre_header
      _
    $region3: #{_encoder_forward.5} parent=1 // loop_header
      %s17 = sphi 0, %s21
      %p18 = scmp.ge.s32.totalorder %s17, 6
      %s24 = sphi 0, %s36
      %s25 = sphi 0, %s32
      %s26 = sphi 0, %s24
      %s27 = sphi 0, %s25
      %s28 = sphi 0, %s26
      %s29 = sphi 0, %s27
      %s39 = sphi 0, %s41
      %s42 = sphi 0, %s39
      %s43 = sphi 0, %s42
      %s59 = sphi 0, %s43
      %s65 = sphi 0, %s67
      %s68 = sphi 0, %s65
      %s69 = sphi 0, %s68
      %s85 = sphi 0, %s69
      %s93 = sphi 0, %s95
      %s96 = sphi 0, %s93
      %s97 = sphi 0, %s96
      %s113 = sphi 0, %s97
      %s121 = sphi 0, %s123
      %s124 = sphi 0, %s121
      %s125 = sphi 0, %s124
      %s141 = sphi 0, %s125
      %s149 = sphi 0, %s151
      %s152 = sphi 0, %s149
      %s153 = sphi 0, %s152
      %s169 = sphi 0, %s153
    $region4: #{_encoder_forward.5} parent=1 // loop_header_branch
      %20 = sbr.rel (%p18) target = $region8
    $region5: #{_encoder_forward.5} parent=1 // loop_body
      %s22 = ssub.s32 %s17, 1
      %s23 = ssub.s32 %s17, 2
      %s30 = sadd.s32 1, %s25
      %p31 = scmp.ge.s32.totalorder %s30, 1
      %s32 = scalar_select %p31, 0, %s30
      %s33 = sadd.s32 1, %s24
      %s34 = scalar_select %p31, %s33, %s24
      %p35 = scmp.ge.s32.totalorder %s34, 4
      %s36 = scalar_select %p35, 0, %s34
      %s37 = ssub.s32 %s24, %s36
      %p38 = scmp.eq.s32.totalorder %s37, 0
      %s40 = sadd.s32 %s39, 1
      %s41 = scalar_select %p38, %s39, %s40
      %p44 = pneg %p38
      %p45 = scmp.eq.s32.totalorder %s17, 3
      %p46 = por %p44, %p45
      %p47 = scmp.ne.s32.totalorder %s39, %s42
      %p48 = scmp.eq.s32.totalorder %s17, 0
      %p49 = por %p47, %p48
      %p50 = scmp.ne.s32.totalorder %s39, %s42
      %p51 = scmp.eq.s32.totalorder %s22, 3
      %p52 = por %p50, %p51
      %p53 = scmp.ne.s32.totalorder %s42, %s43
      %p54 = scmp.eq.s32.totalorder %s22, 0
      %p55 = por %p53, %p54
      %p56 = scmp.ne.s32.totalorder %s42, %s43
      %p57 = scmp.eq.s32.totalorder %s23, 3
      %p58 = por %p56, %p57
      %p60 = scmp.ne.s32.totalorder %s43, %s59
      %p61 = scmp.eq.s32.totalorder %s23, 0
      %p62 = por %p60, %p61
      %s63 = ssub.s32 %s25, %s32
      %p64 = scmp.eq.s32.totalorder %s63, 0
      %s66 = sadd.s32 %s65, 1
      %s67 = scalar_select %p64, %s65, %s66
      %p70 = pneg %p64
      %p71 = scmp.eq.s32.totalorder %s17, 3
      %p72 = por %p70, %p71
      %p73 = scmp.ne.s32.totalorder %s65, %s68
      %p74 = scmp.eq.s32.totalorder %s17, 0
      %p75 = por %p73, %p74
      %p76 = scmp.ne.s32.totalorder %s65, %s68
      %p77 = scmp.eq.s32.totalorder %s22, 3
      %p78 = por %p76, %p77
      %p79 = scmp.ne.s32.totalorder %s68, %s69
      %p80 = scmp.eq.s32.totalorder %s22, 0
      %p81 = por %p79, %p80
      %p82 = scmp.ne.s32.totalorder %s68, %s69
      %p83 = scmp.eq.s32.totalorder %s23, 3
      %p84 = por %p82, %p83
      %p86 = scmp.ne.s32.totalorder %s69, %s85
      %p87 = scmp.eq.s32.totalorder %s23, 0
      %p88 = por %p86, %p87
      %s89 = ssub.s32 %s24, %s36
      %s90 = ssub.s32 %s25, %s32
      %s91 = sor.u32 %s89, %s90
      %p92 = scmp.eq.s32.totalorder %s91, 0
      %s94 = sadd.s32 %s93, 1
      %s95 = scalar_select %p92, %s93, %s94
      %p98 = pneg %p92
      %p99 = scmp.eq.s32.totalorder %s17, 3
      %p100 = por %p98, %p99
      %p101 = scmp.ne.s32.totalorder %s93, %s96
      %p102 = scmp.eq.s32.totalorder %s17, 0
      %p103 = por %p101, %p102
      %p104 = scmp.ne.s32.totalorder %s93, %s96
      %p105 = scmp.eq.s32.totalorder %s22, 3
      %p106 = por %p104, %p105
      %p107 = scmp.ne.s32.totalorder %s96, %s97
      %p108 = scmp.eq.s32.totalorder %s22, 0
      %p109 = por %p107, %p108
      %p110 = scmp.ne.s32.totalorder %s96, %s97
      %p111 = scmp.eq.s32.totalorder %s23, 3
      %p112 = por %p110, %p111
      %p114 = scmp.ne.s32.totalorder %s97, %s113
      %p115 = scmp.eq.s32.totalorder %s23, 0
      %p116 = por %p114, %p115
      %s117 = ssub.s32 %s24, %s36
      %s118 = ssub.s32 %s25, %s32
      %s119 = sor.u32 %s117, %s118
      %p120 = scmp.eq.s32.totalorder %s119, 0
      %s122 = sadd.s32 %s121, 1
      %s123 = scalar_select %p120, %s121, %s122
      %p126 = pneg %p120
      %p127 = scmp.eq.s32.totalorder %s17, 3
      %p128 = por %p126, %p127
      %p129 = scmp.ne.s32.totalorder %s121, %s124
      %p130 = scmp.eq.s32.totalorder %s17, 0
      %p131 = por %p129, %p130
      %p132 = scmp.ne.s32.totalorder %s121, %s124
      %p133 = scmp.eq.s32.totalorder %s22, 3
      %p134 = por %p132, %p133
      %p135 = scmp.ne.s32.totalorder %s124, %s125
      %p136 = scmp.eq.s32.totalorder %s22, 0
      %p137 = por %p135, %p136
      %p138 = scmp.ne.s32.totalorder %s124, %s125
      %p139 = scmp.eq.s32.totalorder %s23, 3
      %p140 = por %p138, %p139
      %p142 = scmp.ne.s32.totalorder %s125, %s141
      %p143 = scmp.eq.s32.totalorder %s23, 0
      %p144 = por %p142, %p143
      %s145 = ssub.s32 %s24, %s36
      %s146 = ssub.s32 %s25, %s32
      %s147 = sor.u32 %s145, %s146
      %p148 = scmp.eq.s32.totalorder %s147, 0
      %s150 = sadd.s32 %s149, 1
      %s151 = scalar_select %p148, %s149, %s150
      %p154 = pneg %p148
      %p155 = scmp.eq.s32.totalorder %s17, 3
      %p156 = por %p154, %p155
      %p157 = scmp.ne.s32.totalorder %s149, %s152
      %p158 = scmp.eq.s32.totalorder %s17, 0
      %p159 = por %p157, %p158
      %p160 = scmp.ne.s32.totalorder %s149, %s152
      %p161 = scmp.eq.s32.totalorder %s22, 3
      %p162 = por %p160, %p161
      %p163 = scmp.ne.s32.totalorder %s152, %s153
      %p164 = scmp.eq.s32.totalorder %s22, 0
      %p165 = por %p163, %p164
      %p166 = scmp.ne.s32.totalorder %s152, %s153
      %p167 = scmp.eq.s32.totalorder %s23, 3
      %p168 = por %p166, %p167
      %p170 = scmp.ne.s32.totalorder %s153, %s169
      %p171 = scmp.eq.s32.totalorder %s23, 0
      %p172 = por %p170, %p171
      %p173 = scmp.le.s32.totalorder 1, %s17
      %p174 = scmp.lt.s32.totalorder %s17, 5
      %p175 = pnand %p173, %p174
      %p176 = pneg %p175
      // Predicated region
      $region9: #{_encoder_forward.5} parent=5 // pred_check
        _
      $region10: #{_encoder_forward.5} parent=5 // pred_check_branch
        %178 = sbr.rel (%p175) target = $region12
      $region11: #{_encoder_forward.5} parent=5 // pred_region
        %s179 = ssub.s32 %s17, 1
        // Predicated region
        $region13: #{_encoder_forward.5} parent=11 // pred_check
          %p180 = pneg %p81
        $region14: #{_encoder_forward.5} parent=11 // pred_check_branch
          %182 = sbr.rel (%p180) target = $region16
        $region15: #{_encoder_forward.5} parent=11 // pred_region
          %p183 = scmp.lt.s32.totalorder %s27, 0
          %s184 = scalar_select %p183, %s27, 0
          %s185 = smul.addr %s184, 4
          %s186 = scalar_lea.vmem %s1, %s185
        $region16: #{_encoder_forward.5} parent=11 // pred_fallthru
          _
      $region12: #{_encoder_forward.5} parent=5 // pred_fallthru
        _
      %p187 = scmp.lt.s32.totalorder %s17, 4
      // Predicated region
      $region17: #{_encoder_forward.5} parent=5 // pred_check
        %p188 = pneg %p187
      $region18: #{_encoder_forward.5} parent=5 // pred_check_branch
        %190 = sbr.rel (%p188) target = $region20
      $region19: #{_encoder_forward.5} parent=5 // pred_region
        // Predicated region
        $region21: #{_encoder_forward.5} parent=19 // pred_check
          %p191 = pneg %p49
        $region22: #{_encoder_forward.5} parent=19 // pred_check_branch
          %193 = sbr.rel (%p191) target = $region24
        $region23: #{_encoder_forward.5} parent=19 // pred_region
          %s194 = smul.u32 32, %s24
          %p195 = scmp.lt.s32.totalorder %s194, 127
          %s196 = scalar_select %p195, %s194, 127
          %s197 = smul.addr %s196, 4
          %s198 = smul.addr %s197, 4
          %s199 = scalar_lea.vmem %s0, %s198
          %s200 = smul.u32 32, %s24
        $region24: #{_encoder_forward.5} parent=19 // pred_fallthru
          _
      $region20: #{_encoder_forward.5} parent=5 // pred_fallthru
        _
      %p201 = scmp.le.s32.totalorder 1, %s17
      %p202 = scmp.lt.s32.totalorder %s17, 5
      %p203 = pnand %p201, %p202
      %p204 = pneg %p203
      // Predicated region
      $region25: #{_encoder_forward.5} parent=5 // pred_check
        _
      $region26: #{_encoder_forward.5} parent=5 // pred_check_branch
        %206 = sbr.rel (%p203) target = $region28
      $region27: #{_encoder_forward.5} parent=5 // pred_region
        %s207 = ssub.s32 %s17, 1
        %s208 = smul.u32 32, %s26
        %p209 = scmp.lt.s32.totalorder %s208, 127
        %s210 = scalar_select %p209, %s208, 127
        %s211 = smul.addr %s210, 4
        %s212 = smul.addr %s211, 4
        %s213 = scalar_lea.vmem %s0, %s212
        %p214 = pneg %p55
        %p215 = pneg %p52
        %p216 = scmp.lt.s32.totalorder %s27, 0
        %s217 = scalar_select %p216, %s27, 0
        %s218 = smul.addr %s217, 4
        %s219 = scalar_lea.vmem %s1, %s218
        %p220 = pneg %p81
        %p221 = pneg %p78
        %p222 = pneg %p109
        %p223 = pneg %p106
        %s224 = smul.u32 32, %s26
        %p225 = scmp.lt.s32.totalorder %s224, 127
        %s226 = scalar_select %p225, %s224, 127
        %p227 = scmp.lt.s32.totalorder %s27, 0
        %s228 = scalar_select %p227, %s27, 0
        %s229 = sadd.s32 %s228, %s226
        %s230 = smul.addr %s229, 4
        %s231 = scalar_lea.vmem %s2, %s230
        %p232 = pneg %p137
        %p233 = pneg %p134
        %s234 = sand.u32 %s124, 1
        %s235 = scalar_lea.sflag [#allocation3], %s234
        %s236 = sand.u32 %s124, 1
        %s237 = scalar_lea.vmem [#allocation2], %s236
        %p238 = pneg %p165
        %p239 = pneg %p162
        %s240 = sand.u32 %s152, 1
        %s241 = scalar_lea.sflag [#allocation5], %s240
        %s242 = sand.u32 %s152, 1
        %s243 = scalar_lea.vmem [#allocation4], %s242
        %s244 = smul.u32 32, %s26
        %p245 = scmp.lt.s32.totalorder %s244, 127
        %s246 = scalar_select %p245, %s244, 127
        %s247 = smul.addr %s246, 4
        %s248 = smul.addr %s247, 4
        %s249 = scalar_lea.vmem %s0, %s248
        %s250 = smul.u32 32, %s26
        %p251 = scmp.lt.s32.totalorder %s27, 0
        %s252 = scalar_select %p251, %s27, 0
        %s253 = smul.addr %s252, 4
        %s254 = scalar_lea.vmem %s1, %s253
        %s255 = smul.u32 32, %s26
        %p256 = scmp.lt.s32.totalorder %s255, 127
        %s257 = scalar_select %p256, %s255, 127
        %p258 = scmp.lt.s32.totalorder %s27, 0
        %s259 = scalar_select %p258, %s27, 0
        %s260 = sadd.s32 %s259, %s257
        %s261 = smul.addr %s260, 4
        %s262 = scalar_lea.vmem %s2, %s261
        %s263 = smul.u32 32, %s26
        %v265 = vld [vmem:[%s249] sm:$0xff]
        %v266 = vld [vmem:[%s249 + $0x8] sm:$0xff]
        %v267 = vld [vmem:[%s249 + $0x10] sm:$0xff]
        %v268 = vld [vmem:[%s249 + $0x18] sm:$0xff]
        %v269 = vld [vmem:[%s249 + $0x20] sm:$0xff]
        %v270 = vld [vmem:[%s249 + $0x28] sm:$0xff]
        %v271 = vld [vmem:[%s249 + $0x30] sm:$0xff]
        %v272 = vld [vmem:[%s249 + $0x38] sm:$0xff]
        %v273 = vld [vmem:[%s249 + $0x40] sm:$0xff]
        %v274 = vld [vmem:[%s249 + $0x48] sm:$0xff]
        %v275 = vld [vmem:[%s249 + $0x50] sm:$0xff]
        %v276 = vld [vmem:[%s249 + $0x58] sm:$0xff]
        %v277 = vld [vmem:[%s249 + $0x60] sm:$0xff]
        %v278 = vld [vmem:[%s249 + $0x68] sm:$0xff]
        %v279 = vld [vmem:[%s249 + $0x70] sm:$0xff]
        %v280 = vld [vmem:[%s249 + $0x78] sm:$0xff]
        %v281 = vld [vmem:[%s249 + $0x80] sm:$0xff]
        %v282 = vld [vmem:[%s249 + $0x88] sm:$0xff]
        %v283 = vld [vmem:[%s249 + $0x90] sm:$0xff]
        %v284 = vld [vmem:[%s249 + $0x98] sm:$0xff]
        %v285 = vld [vmem:[%s249 + $0xa0] sm:$0xff]
        %v286 = vld [vmem:[%s249 + $0xa8] sm:$0xff]
        %v287 = vld [vmem:[%s249 + $0xb0] sm:$0xff]
        %v288 = vld [vmem:[%s249 + $0xb8] sm:$0xff]
        %v289 = vld [vmem:[%s249 + $0xc0] sm:$0xff]
        %v290 = vld [vmem:[%s249 + $0xc8] sm:$0xff]
        %v291 = vld [vmem:[%s249 + $0xd0] sm:$0xff]
        %v292 = vld [vmem:[%s249 + $0xd8] sm:$0xff]
        %v293 = vld [vmem:[%s249 + $0xe0] sm:$0xff]
        %v294 = vld [vmem:[%s249 + $0xe8] sm:$0xff]
        %v295 = vld [vmem:[%s249 + $0xf0] sm:$0xff]
        %v296 = vld [vmem:[%s249 + $0xf8] sm:$0xff]
        %v297 = vld [vmem:[%s249 + $0x100] sm:$0xff]
        %v298 = vld [vmem:[%s249 + $0x108] sm:$0xff]
        %v299 = vld [vmem:[%s249 + $0x110] sm:$0xff]
        %v300 = vld [vmem:[%s249 + $0x118] sm:$0xff]
        %v301 = vld [vmem:[%s249 + $0x120] sm:$0xff]
        %v302 = vld [vmem:[%s249 + $0x128] sm:$0xff]
        %v303 = vld [vmem:[%s249 + $0x130] sm:$0xff]
        %v304 = vld [vmem:[%s249 + $0x138] sm:$0xff]
        %v305 = vld [vmem:[%s249 + $0x140] sm:$0xff]
        %v306 = vld [vmem:[%s249 + $0x148] sm:$0xff]
        %v307 = vld [vmem:[%s249 + $0x150] sm:$0xff]
        %v308 = vld [vmem:[%s249 + $0x158] sm:$0xff]
        %v309 = vld [vmem:[%s249 + $0x160] sm:$0xff]
        %v310 = vld [vmem:[%s249 + $0x168] sm:$0xff]
        %v311 = vld [vmem:[%s249 + $0x170] sm:$0xff]
        %v312 = vld [vmem:[%s249 + $0x178] sm:$0xff]
        %v313 = vld [vmem:[%s249 + $0x180] sm:$0xff]
        %v314 = vld [vmem:[%s249 + $0x188] sm:$0xff]
        %v315 = vld [vmem:[%s249 + $0x190] sm:$0xff]
        %v316 = vld [vmem:[%s249 + $0x198] sm:$0xff]
        %v317 = vld [vmem:[%s249 + $0x1a0] sm:$0xff]
        %v318 = vld [vmem:[%s249 + $0x1a8] sm:$0xff]
        %v319 = vld [vmem:[%s249 + $0x1b0] sm:$0xff]
        %v320 = vld [vmem:[%s249 + $0x1b8] sm:$0xff]
        %v321 = vld [vmem:[%s249 + $0x1c0] sm:$0xff]
        %v322 = vld [vmem:[%s249 + $0x1c8] sm:$0xff]
        %v323 = vld [vmem:[%s249 + $0x1d0] sm:$0xff]
        %v324 = vld [vmem:[%s249 + $0x1d8] sm:$0xff]
        %v325 = vld [vmem:[%s249 + $0x1e0] sm:$0xff]
        %v326 = vld [vmem:[%s249 + $0x1e8] sm:$0xff]
        %v327 = vld [vmem:[%s249 + $0x1f0] sm:$0xff]
        %v328 = vld [vmem:[%s249 + $0x1f8] sm:$0xff]
        %v329 = vld [vmem:[%s254] sm:$0xf]
        %v330 = vld [vmem:[%s254 + $0x4] sm:$0xf]
        %v331 = vld [vmem:[%s254 + $0x8] sm:$0xf]
        %v332 = vld [vmem:[%s254 + $0xc] sm:$0xf]
        %v333 = vld [vmem:[%s254 + $0x10] sm:$0xf]
        %v334 = vld [vmem:[%s254 + $0x14] sm:$0xf]
        %v335 = vld [vmem:[%s254 + $0x18] sm:$0xf]
        %v336 = vld [vmem:[%s254 + $0x1c] sm:$0xf]
        %v337 = vld [vmem:[%s254 + $0x20] sm:$0xf]
        %v338 = vld [vmem:[%s254 + $0x24] sm:$0xf]
        %v339 = vld [vmem:[%s254 + $0x28] sm:$0xf]
        %v340 = vld [vmem:[%s254 + $0x2c] sm:$0xf]
        %v341 = vld [vmem:[%s254 + $0x30] sm:$0xf]
        %v342 = vld [vmem:[%s254 + $0x34] sm:$0xf]
        %v343 = vld [vmem:[%s254 + $0x38] sm:$0xf]
        %v344 = vld [vmem:[%s254 + $0x3c] sm:$0xf]
        %v345 = vld [vmem:[%s254 + $0x40] sm:$0xf]
        %v346 = vld [vmem:[%s254 + $0x44] sm:$0xf]
        %v347 = vld [vmem:[%s254 + $0x48] sm:$0xf]
        %v348 = vld [vmem:[%s254 + $0x4c] sm:$0xf]
        %v349 = vld [vmem:[%s254 + $0x50] sm:$0xf]
        %v350 = vld [vmem:[%s254 + $0x54] sm:$0xf]
        %v351 = vld [vmem:[%s254 + $0x58] sm:$0xf]
        %v352 = vld [vmem:[%s254 + $0x5c] sm:$0xf]
        %v353 = vld [vmem:[%s254 + $0x60] sm:$0xf]
        %v354 = vld [vmem:[%s254 + $0x64] sm:$0xf]
        %v355 = vld [vmem:[%s254 + $0x68] sm:$0xf]
        %v356 = vld [vmem:[%s254 + $0x6c] sm:$0xf]
        %v357 = vld [vmem:[%s254 + $0x70] sm:$0xf]
        %v358 = vld [vmem:[%s254 + $0x74] sm:$0xf]
        %v359 = vld [vmem:[%s254 + $0x78] sm:$0xf]
        %v360 = vld [vmem:[%s254 + $0x7c] sm:$0xf]
        %v361 = vld [vmem:[%s254 + $0x80] sm:$0xf]
        %v362 = vld [vmem:[%s254 + $0x84] sm:$0xf]
        %v363 = vld [vmem:[%s254 + $0x88] sm:$0xf]
        %v364 = vld [vmem:[%s254 + $0x8c] sm:$0xf]
        %v365 = vld [vmem:[%s254 + $0x90] sm:$0xf]
        %v366 = vld [vmem:[%s254 + $0x94] sm:$0xf]
        %v367 = vld [vmem:[%s254 + $0x98] sm:$0xf]
        %v368 = vld [vmem:[%s254 + $0x9c] sm:$0xf]
        %v369 = vld [vmem:[%s254 + $0xa0] sm:$0xf]
        %v370 = vld [vmem:[%s254 + $0xa4] sm:$0xf]
        %v371 = vld [vmem:[%s254 + $0xa8] sm:$0xf]
        %v372 = vld [vmem:[%s254 + $0xac] sm:$0xf]
        %v373 = vld [vmem:[%s254 + $0xb0] sm:$0xf]
        %v374 = vld [vmem:[%s254 + $0xb4] sm:$0xf]
        %v375 = vld [vmem:[%s254 + $0xb8] sm:$0xf]
        %v376 = vld [vmem:[%s254 + $0xbc] sm:$0xf]
        %v377 = vld [vmem:[%s254 + $0xc0] sm:$0xf]
        %v378 = vld [vmem:[%s254 + $0xc4] sm:$0xf]
        %v379 = vld [vmem:[%s254 + $0xc8] sm:$0xf]
        %v380 = vld [vmem:[%s254 + $0xcc] sm:$0xf]
        %v381 = vld [vmem:[%s254 + $0xd0] sm:$0xf]
        %v382 = vld [vmem:[%s254 + $0xd4] sm:$0xf]
        %v383 = vld [vmem:[%s254 + $0xd8] sm:$0xf]
        %v384 = vld [vmem:[%s254 + $0xdc] sm:$0xf]
        %v385 = vld [vmem:[%s254 + $0xe0] sm:$0xf]
        %v386 = vld [vmem:[%s254 + $0xe4] sm:$0xf]
        %v387 = vld [vmem:[%s254 + $0xe8] sm:$0xf]
        %v388 = vld [vmem:[%s254 + $0xec] sm:$0xf]
        %v389 = vld [vmem:[%s254 + $0xf0] sm:$0xf]
        %v390 = vld [vmem:[%s254 + $0xf4] sm:$0xf]
        %v391 = vld [vmem:[%s254 + $0xf8] sm:$0xf]
        %v392 = vld [vmem:[%s254 + $0xfc] sm:$0xf]
        %v457 = vunpack.c.l.b16 %v265
        %v458 = vunpack.c.h.b16 %v265
        %v459 = vunpack.c.l.b16 %v266
        %v460 = vunpack.c.h.b16 %v266
        %v461 = vunpack.c.l.b16 %v267
        %v462 = vunpack.c.h.b16 %v267
        %v463 = vunpack.c.l.b16 %v268
        %v464 = vunpack.c.h.b16 %v268
        %v465 = vunpack.c.l.b16 %v269
        %v466 = vunpack.c.h.b16 %v269
        %v467 = vunpack.c.l.b16 %v270
        %v468 = vunpack.c.h.b16 %v270
        %v469 = vunpack.c.l.b16 %v271
        %v470 = vunpack.c.h.b16 %v271
        %v471 = vunpack.c.l.b16 %v272
        %v472 = vunpack.c.h.b16 %v272
        %v473 = vunpack.c.l.b16 %v273
        %v474 = vunpack.c.h.b16 %v273
        %v475 = vunpack.c.l.b16 %v274
        %v476 = vunpack.c.h.b16 %v274
        %v477 = vunpack.c.l.b16 %v275
        %v478 = vunpack.c.h.b16 %v275
        %v479 = vunpack.c.l.b16 %v276
        %v480 = vunpack.c.h.b16 %v276
        %v481 = vunpack.c.l.b16 %v277
        %v482 = vunpack.c.h.b16 %v277
        %v483 = vunpack.c.l.b16 %v278
        %v484 = vunpack.c.h.b16 %v278
        %v485 = vunpack.c.l.b16 %v279
        %v486 = vunpack.c.h.b16 %v279
        %v487 = vunpack.c.l.b16 %v280
        %v488 = vunpack.c.h.b16 %v280
        %v489 = vunpack.c.l.b16 %v281
        %v490 = vunpack.c.h.b16 %v281
        %v491 = vunpack.c.l.b16 %v282
        %v492 = vunpack.c.h.b16 %v282
        %v493 = vunpack.c.l.b16 %v283
        %v494 = vunpack.c.h.b16 %v283
        %v495 = vunpack.c.l.b16 %v284
        %v496 = vunpack.c.h.b16 %v284
        %v497 = vunpack.c.l.b16 %v285
        %v498 = vunpack.c.h.b16 %v285
        %v499 = vunpack.c.l.b16 %v286
        %v500 = vunpack.c.h.b16 %v286
        %v501 = vunpack.c.l.b16 %v287
        %v502 = vunpack.c.h.b16 %v287
        %v503 = vunpack.c.l.b16 %v288
        %v504 = vunpack.c.h.b16 %v288
        %v505 = vunpack.c.l.b16 %v289
        %v506 = vunpack.c.h.b16 %v289
        %v507 = vunpack.c.l.b16 %v290
        %v508 = vunpack.c.h.b16 %v290
        %v509 = vunpack.c.l.b16 %v291
        %v510 = vunpack.c.h.b16 %v291
        %v511 = vunpack.c.l.b16 %v292
        %v512 = vunpack.c.h.b16 %v292
        %v513 = vunpack.c.l.b16 %v293
        %v514 = vunpack.c.h.b16 %v293
        %v515 = vunpack.c.l.b16 %v294
        %v516 = vunpack.c.h.b16 %v294
        %v517 = vunpack.c.l.b16 %v295
        %v518 = vunpack.c.h.b16 %v295
        %v519 = vunpack.c.l.b16 %v296
        %v520 = vunpack.c.h.b16 %v296
        %v521 = vunpack.c.l.b16 %v297
        %v522 = vunpack.c.h.b16 %v297
        %v523 = vunpack.c.l.b16 %v298
        %v524 = vunpack.c.h.b16 %v298
        %v525 = vunpack.c.l.b16 %v299
        %v526 = vunpack.c.h.b16 %v299
        %v527 = vunpack.c.l.b16 %v300
        %v528 = vunpack.c.h.b16 %v300
        %v529 = vunpack.c.l.b16 %v301
        %v530 = vunpack.c.h.b16 %v301
        %v531 = vunpack.c.l.b16 %v302
        %v532 = vunpack.c.h.b16 %v302
        %v533 = vunpack.c.l.b16 %v303
        %v534 = vunpack.c.h.b16 %v303
        %v535 = vunpack.c.l.b16 %v304
        %v536 = vunpack.c.h.b16 %v304
        %v537 = vunpack.c.l.b16 %v305
        %v538 = vunpack.c.h.b16 %v305
        %v539 = vunpack.c.l.b16 %v306
        %v540 = vunpack.c.h.b16 %v306
        %v541 = vunpack.c.l.b16 %v307
        %v542 = vunpack.c.h.b16 %v307
        %v543 = vunpack.c.l.b16 %v308
        %v544 = vunpack.c.h.b16 %v308
        %v545 = vunpack.c.l.b16 %v309
        %v546 = vunpack.c.h.b16 %v309
        %v547 = vunpack.c.l.b16 %v310
        %v548 = vunpack.c.h.b16 %v310
        %v549 = vunpack.c.l.b16 %v311
        %v550 = vunpack.c.h.b16 %v311
        %v551 = vunpack.c.l.b16 %v312
        %v552 = vunpack.c.h.b16 %v312
        %v553 = vunpack.c.l.b16 %v313
        %v554 = vunpack.c.h.b16 %v313
        %v555 = vunpack.c.l.b16 %v314
        %v556 = vunpack.c.h.b16 %v314
        %v557 = vunpack.c.l.b16 %v315
        %v558 = vunpack.c.h.b16 %v315
        %v559 = vunpack.c.l.b16 %v316
        %v560 = vunpack.c.h.b16 %v316
        %v561 = vunpack.c.l.b16 %v317
        %v562 = vunpack.c.h.b16 %v317
        %v563 = vunpack.c.l.b16 %v318
        %v564 = vunpack.c.h.b16 %v318
        %v565 = vunpack.c.l.b16 %v319
        %v566 = vunpack.c.h.b16 %v319
        %v567 = vunpack.c.l.b16 %v320
        %v568 = vunpack.c.h.b16 %v320
        %v569 = vunpack.c.l.b16 %v321
        %v570 = vunpack.c.h.b16 %v321
        %v571 = vunpack.c.l.b16 %v322
        %v572 = vunpack.c.h.b16 %v322
        %v573 = vunpack.c.l.b16 %v323
        %v574 = vunpack.c.h.b16 %v323
        %v575 = vunpack.c.l.b16 %v324
        %v576 = vunpack.c.h.b16 %v324
        %v577 = vunpack.c.l.b16 %v325
        %v578 = vunpack.c.h.b16 %v325
        %v579 = vunpack.c.l.b16 %v326
        %v580 = vunpack.c.h.b16 %v326
        %v581 = vunpack.c.l.b16 %v327
        %v582 = vunpack.c.h.b16 %v327
        %v583 = vunpack.c.l.b16 %v328
        %v584 = vunpack.c.h.b16 %v328
        %v585 = vpack.c.b16 %v461, %v457
        %v586 = vpack.c.b16 %v462, %v458
        %v587 = vpack.c.b16 %v463, %v459
        %v588 = vpack.c.b16 %v464, %v460
        %v589 = vpack.c.b16 %v469, %v465
        %v590 = vpack.c.b16 %v470, %v466
        %v591 = vpack.c.b16 %v471, %v467
        %v592 = vpack.c.b16 %v472, %v468
        %v593 = vpack.c.b16 %v477, %v473
        %v594 = vpack.c.b16 %v478, %v474
        %v595 = vpack.c.b16 %v479, %v475
        %v596 = vpack.c.b16 %v480, %v476
        %v597 = vpack.c.b16 %v485, %v481
        %v598 = vpack.c.b16 %v486, %v482
        %v599 = vpack.c.b16 %v487, %v483
        %v600 = vpack.c.b16 %v488, %v484
        %v601 = vpack.c.b16 %v493, %v489
        %v602 = vpack.c.b16 %v494, %v490
        %v603 = vpack.c.b16 %v495, %v491
        %v604 = vpack.c.b16 %v496, %v492
        %v605 = vpack.c.b16 %v501, %v497
        %v606 = vpack.c.b16 %v502, %v498
        %v607 = vpack.c.b16 %v503, %v499
        %v608 = vpack.c.b16 %v504, %v500
        %v609 = vpack.c.b16 %v509, %v505
        %v610 = vpack.c.b16 %v510, %v506
        %v611 = vpack.c.b16 %v511, %v507
        %v612 = vpack.c.b16 %v512, %v508
        %v613 = vpack.c.b16 %v517, %v513
        %v614 = vpack.c.b16 %v518, %v514
        %v615 = vpack.c.b16 %v519, %v515
        %v616 = vpack.c.b16 %v520, %v516
        %v617 = vpack.c.b16 %v525, %v521
        %v618 = vpack.c.b16 %v526, %v522
        %v619 = vpack.c.b16 %v527, %v523
        %v620 = vpack.c.b16 %v528, %v524
        %v621 = vpack.c.b16 %v533, %v529
        %v622 = vpack.c.b16 %v534, %v530
        %v623 = vpack.c.b16 %v535, %v531
        %v624 = vpack.c.b16 %v536, %v532
        %v625 = vpack.c.b16 %v541, %v537
        %v626 = vpack.c.b16 %v542, %v538
        %v627 = vpack.c.b16 %v543, %v539
        %v628 = vpack.c.b16 %v544, %v540
        %v629 = vpack.c.b16 %v549, %v545
        %v630 = vpack.c.b16 %v550, %v546
        %v631 = vpack.c.b16 %v551, %v547
        %v632 = vpack.c.b16 %v552, %v548
        %v633 = vpack.c.b16 %v557, %v553
        %v634 = vpack.c.b16 %v558, %v554
        %v635 = vpack.c.b16 %v559, %v555
        %v636 = vpack.c.b16 %v560, %v556
        %v637 = vpack.c.b16 %v565, %v561
        %v638 = vpack.c.b16 %v566, %v562
        %v639 = vpack.c.b16 %v567, %v563
        %v640 = vpack.c.b16 %v568, %v564
        %v641 = vpack.c.b16 %v573, %v569
        %v642 = vpack.c.b16 %v574, %v570
        %v643 = vpack.c.b16 %v575, %v571
        %v644 = vpack.c.b16 %v576, %v572
        %v645 = vpack.c.b16 %v581, %v577
        %v646 = vpack.c.b16 %v582, %v578
        %v647 = vpack.c.b16 %v583, %v579
        %v648 = vpack.c.b16 %v584, %v580
        %v777 = vunpack.c.l.b16 %v329
        %v778 = vunpack.c.l.b16 %v330
        %v779 = vunpack.c.l.b16 %v331
        %v780 = vunpack.c.l.b16 %v332
        %v781 = vunpack.c.l.b16 %v333
        %v782 = vunpack.c.l.b16 %v334
        %v783 = vunpack.c.l.b16 %v335
        %v784 = vunpack.c.l.b16 %v336
        %v785 = vunpack.c.l.b16 %v337
        %v786 = vunpack.c.l.b16 %v338
        %v787 = vunpack.c.l.b16 %v339
        %v788 = vunpack.c.l.b16 %v340
        %v789 = vunpack.c.l.b16 %v341
        %v790 = vunpack.c.l.b16 %v342
        %v791 = vunpack.c.l.b16 %v343
        %v792 = vunpack.c.l.b16 %v344
        %v793 = vunpack.c.l.b16 %v345
        %v794 = vunpack.c.l.b16 %v346
        %v795 = vunpack.c.l.b16 %v347
        %v796 = vunpack.c.l.b16 %v348
        %v797 = vunpack.c.l.b16 %v349
        %v798 = vunpack.c.l.b16 %v350
        %v799 = vunpack.c.l.b16 %v351
        %v800 = vunpack.c.l.b16 %v352
        %v801 = vunpack.c.l.b16 %v353
        %v802 = vunpack.c.l.b16 %v354
        %v803 = vunpack.c.l.b16 %v355
        %v804 = vunpack.c.l.b16 %v356
        %v805 = vunpack.c.l.b16 %v357
        %v806 = vunpack.c.l.b16 %v358
        %v807 = vunpack.c.l.b16 %v359
        %v808 = vunpack.c.l.b16 %v360
        %v809 = vunpack.c.l.b16 %v361
        %v810 = vunpack.c.l.b16 %v362
        %v811 = vunpack.c.l.b16 %v363
        %v812 = vunpack.c.l.b16 %v364
        %v813 = vunpack.c.l.b16 %v365
        %v814 = vunpack.c.l.b16 %v366
        %v815 = vunpack.c.l.b16 %v367
        %v816 = vunpack.c.l.b16 %v368
        %v817 = vunpack.c.l.b16 %v369
        %v818 = vunpack.c.l.b16 %v370
        %v819 = vunpack.c.l.b16 %v371
        %v820 = vunpack.c.l.b16 %v372
        %v821 = vunpack.c.l.b16 %v373
        %v822 = vunpack.c.l.b16 %v374
        %v823 = vunpack.c.l.b16 %v375
        %v824 = vunpack.c.l.b16 %v376
        %v825 = vunpack.c.l.b16 %v377
        %v826 = vunpack.c.l.b16 %v378
        %v827 = vunpack.c.l.b16 %v379
        %v828 = vunpack.c.l.b16 %v380
        %v829 = vunpack.c.l.b16 %v381
        %v830 = vunpack.c.l.b16 %v382
        %v831 = vunpack.c.l.b16 %v383
        %v832 = vunpack.c.l.b16 %v384
        %v833 = vunpack.c.l.b16 %v385
        %v834 = vunpack.c.l.b16 %v386
        %v835 = vunpack.c.l.b16 %v387
        %v836 = vunpack.c.l.b16 %v388
        %v837 = vunpack.c.l.b16 %v389
        %v838 = vunpack.c.l.b16 %v390
        %v839 = vunpack.c.l.b16 %v391
        %v840 = vunpack.c.l.b16 %v392
        %v841 = vpack.c.b16 %v778, %v777
        %v842 = vpack.c.b16 %v780, %v779
        %v843 = vpack.c.b16 %v782, %v781
        %v844 = vpack.c.b16 %v784, %v783
        %v845 = vpack.c.b16 %v786, %v785
        %v846 = vpack.c.b16 %v788, %v787
        %v847 = vpack.c.b16 %v790, %v789
        %v848 = vpack.c.b16 %v792, %v791
        %v849 = vpack.c.b16 %v794, %v793
        %v850 = vpack.c.b16 %v796, %v795
        %v851 = vpack.c.b16 %v798, %v797
        %v852 = vpack.c.b16 %v800, %v799
        %v853 = vpack.c.b16 %v802, %v801
        %v854 = vpack.c.b16 %v804, %v803
        %v855 = vpack.c.b16 %v806, %v805
        %v856 = vpack.c.b16 %v808, %v807
        %v857 = vpack.c.b16 %v810, %v809
        %v858 = vpack.c.b16 %v812, %v811
        %v859 = vpack.c.b16 %v814, %v813
        %v860 = vpack.c.b16 %v816, %v815
        %v861 = vpack.c.b16 %v818, %v817
        %v862 = vpack.c.b16 %v820, %v819
        %v863 = vpack.c.b16 %v822, %v821
        %v864 = vpack.c.b16 %v824, %v823
        %v865 = vpack.c.b16 %v826, %v825
        %v866 = vpack.c.b16 %v828, %v827
        %v867 = vpack.c.b16 %v830, %v829
        %v868 = vpack.c.b16 %v832, %v831
        %v869 = vpack.c.b16 %v834, %v833
        %v870 = vpack.c.b16 %v836, %v835
        %v871 = vpack.c.b16 %v838, %v837
        %v872 = vpack.c.b16 %v840, %v839
        %905 = vmatprep.subr.bf16.mxu0 0
        %906 = vmatpush1.bf16.msra.mxu0 %v848
        %907 = vmatprep.subr.bf16.mxu0 0
        %908 = vmatpush1.bf16.msra.mxu0 %v847
        %909 = vmatprep.subr.bf16.mxu0 0
        %910 = vmatpush1.bf16.msra.mxu0 %v846
        %911 = vmatprep.subr.bf16.mxu0 0
        %912 = vmatpush1.bf16.msra.mxu0 %v845
        %913 = vmatprep.subr.bf16.mxu0 0
        %914 = vmatpush1.bf16.msra.mxu0 %v844
        %915 = vmatprep.subr.bf16.mxu0 0
        %916 = vmatpush1.bf16.msra.mxu0 %v843
        %917 = vmatprep.subr.bf16.mxu0 0
        %918 = vmatpush1.bf16.msra.mxu0 %v842
        %919 = vmatprep.subr.bf16.mxu0 0
        %920 = vmatpush1.bf16.msra.mxu0 %v841
        %921 = vmatprep.subr.bf16.mxu0 0
        %922 = vmatpush2.bf16.msra.mxu0 %v856
        %923 = vmatprep.subr.bf16.mxu0 0
        %924 = vmatpush2.bf16.msra.mxu0 %v855
        %925 = vmatprep.subr.bf16.mxu0 0
        %926 = vmatpush2.bf16.msra.mxu0 %v854
        %927 = vmatprep.subr.bf16.mxu0 0
        %928 = vmatpush2.bf16.msra.mxu0 %v853
        %929 = vmatprep.subr.bf16.mxu0 0
        %930 = vmatpush2.bf16.msra.mxu0 %v852
        %931 = vmatprep.subr.bf16.mxu0 0
        %932 = vmatpush2.bf16.msra.mxu0 %v851
        %933 = vmatprep.subr.bf16.mxu0 0
        %934 = vmatpush2.bf16.msra.mxu0 %v850
        %935 = vmatprep.subr.bf16.mxu0 0
        %936 = vmatpush2.bf16.msra.mxu0 %v849
        %937 = vmatprep.mubr.bf16.mxu0 %v586
        %938 = vmatmul.mubr.bf16.gmra.mxu0 %v585
        %v939 = vpop.f32.mrf.mxu0
        %v940 = vadd.f32 0.0, %v939
        %v941 = vpop.f32.mrf.mxu0
        %v942 = vpop.f32.mrf.mxu0
        %v943 = vadd.f32 0.0, %v942
        %v944 = vpop.f32.mrf.mxu0
        %945 = vmatprep.mubr.bf16.mxu0 %v590
        %946 = vmatmul.mubr.bf16.gmra.mxu0 %v589
        %v947 = vpop.f32.mrf.mxu0
        %v948 = vadd.f32 0.0, %v947
        %v949 = vpop.f32.mrf.mxu0
        %v950 = vpop.f32.mrf.mxu0
        %v951 = vadd.f32 0.0, %v950
        %v952 = vpop.f32.mrf.mxu0
        %953 = vmatprep.mubr.bf16.mxu0 %v594
        %954 = vmatmul.mubr.bf16.gmra.mxu0 %v593
        %v955 = vpop.f32.mrf.mxu0
        %v956 = vadd.f32 0.0, %v955
        %v957 = vpop.f32.mrf.mxu0
        %v958 = vpop.f32.mrf.mxu0
        %v959 = vadd.f32 0.0, %v958
        %v960 = vpop.f32.mrf.mxu0
        %961 = vmatprep.mubr.bf16.mxu0 %v598
        %962 = vmatmul.mubr.bf16.gmra.mxu0 %v597
        %v963 = vpop.f32.mrf.mxu0
        %v964 = vadd.f32 0.0, %v963
        %v965 = vpop.f32.mrf.mxu0
        %v966 = vpop.f32.mrf.mxu0
        %v967 = vadd.f32 0.0, %v966
        %v968 = vpop.f32.mrf.mxu0
        %969 = vmatprep.mubr.bf16.mxu0 %v602
        %970 = vmatmul.mubr.bf16.gmra.mxu0 %v601
        %v971 = vpop.f32.mrf.mxu0
        %v972 = vadd.f32 0.0, %v971
        %v973 = vpop.f32.mrf.mxu0
        %v974 = vpop.f32.mrf.mxu0
        %v975 = vadd.f32 0.0, %v974
        %v976 = vpop.f32.mrf.mxu0
        %977 = vmatprep.mubr.bf16.mxu0 %v606
        %978 = vmatmul.mubr.bf16.gmra.mxu0 %v605
        %v979 = vpop.f32.mrf.mxu0
        %v980 = vadd.f32 0.0, %v979
        %v981 = vpop.f32.mrf.mxu0
        %v982 = vpop.f32.mrf.mxu0
        %v983 = vadd.f32 0.0, %v982
        %v984 = vpop.f32.mrf.mxu0
        %985 = vmatprep.mubr.bf16.mxu0 %v610
        %986 = vmatmul.mubr.bf16.gmra.mxu0 %v609
        %v987 = vpop.f32.mrf.mxu0
        %v988 = vadd.f32 0.0, %v987
        %v989 = vpop.f32.mrf.mxu0
        %v990 = vpop.f32.mrf.mxu0
        %v991 = vadd.f32 0.0, %v990
        %v992 = vpop.f32.mrf.mxu0
        %993 = vmatprep.mubr.bf16.mxu0 %v614
        %994 = vmatmul.mubr.bf16.gmra.mxu0 %v613
        %v995 = vpop.f32.mrf.mxu0
        %v996 = vadd.f32 0.0, %v995
        %v997 = vpop.f32.mrf.mxu0
        %v998 = vpop.f32.mrf.mxu0
        %v999 = vadd.f32 0.0, %v998
        %v1000 = vpop.f32.mrf.mxu0
        %1001 = vmatprep.mubr.bf16.mxu0 %v618
        %1002 = vmatmul.mubr.bf16.gmra.mxu0 %v617
        %v1003 = vpop.f32.mrf.mxu0
        %v1004 = vadd.f32 0.0, %v1003
        %v1005 = vpop.f32.mrf.mxu0
        %v1006 = vpop.f32.mrf.mxu0
        %v1007 = vadd.f32 0.0, %v1006
        %v1008 = vpop.f32.mrf.mxu0
        %1009 = vmatprep.mubr.bf16.mxu0 %v622
        %1010 = vmatmul.mubr.bf16.gmra.mxu0 %v621
        %v1011 = vpop.f32.mrf.mxu0
        %v1012 = vadd.f32 0.0, %v1011
        %v1013 = vpop.f32.mrf.mxu0
        %v1014 = vpop.f32.mrf.mxu0
        %v1015 = vadd.f32 0.0, %v1014
        %v1016 = vpop.f32.mrf.mxu0
        %1017 = vmatprep.mubr.bf16.mxu0 %v626
        %1018 = vmatmul.mubr.bf16.gmra.mxu0 %v625
        %v1019 = vpop.f32.mrf.mxu0
        %v1020 = vadd.f32 0.0, %v1019
        %v1021 = vpop.f32.mrf.mxu0
        %v1022 = vpop.f32.mrf.mxu0
        %v1023 = vadd.f32 0.0, %v1022
        %v1024 = vpop.f32.mrf.mxu0
        %1025 = vmatprep.mubr.bf16.mxu0 %v630
        %1026 = vmatmul.mubr.bf16.gmra.mxu0 %v629
        %v1027 = vpop.f32.mrf.mxu0
        %v1028 = vadd.f32 0.0, %v1027
        %v1029 = vpop.f32.mrf.mxu0
        %v1030 = vpop.f32.mrf.mxu0
        %v1031 = vadd.f32 0.0, %v1030
        %v1032 = vpop.f32.mrf.mxu0
        %1033 = vmatprep.mubr.bf16.mxu0 %v634
        %1034 = vmatmul.mubr.bf16.gmra.mxu0 %v633
        %v1035 = vpop.f32.mrf.mxu0
        %v1036 = vadd.f32 0.0, %v1035
        %v1037 = vpop.f32.mrf.mxu0
        %v1038 = vpop.f32.mrf.mxu0
        %v1039 = vadd.f32 0.0, %v1038
        %v1040 = vpop.f32.mrf.mxu0
        %1041 = vmatprep.mubr.bf16.mxu0 %v638
        %1042 = vmatmul.mubr.bf16.gmra.mxu0 %v637
        %v1043 = vpop.f32.mrf.mxu0
        %v1044 = vadd.f32 0.0, %v1043
        %v1045 = vpop.f32.mrf.mxu0
        %v1046 = vpop.f32.mrf.mxu0
        %v1047 = vadd.f32 0.0, %v1046
        %v1048 = vpop.f32.mrf.mxu0
        %1049 = vmatprep.mubr.bf16.mxu0 %v642
        %1050 = vmatmul.mubr.bf16.gmra.mxu0 %v641
        %v1051 = vpop.f32.mrf.mxu0
        %v1052 = vadd.f32 0.0, %v1051
        %v1053 = vpop.f32.mrf.mxu0
        %v1054 = vpop.f32.mrf.mxu0
        %v1055 = vadd.f32 0.0, %v1054
        %v1056 = vpop.f32.mrf.mxu0
        %1057 = vmatprep.mubr.bf16.mxu0 %v646
        %1058 = vmatmul.mubr.bf16.gmra.mxu0 %v645
        %v1059 = vpop.f32.mrf.mxu0
        %v1060 = vadd.f32 0.0, %v1059
        %v1061 = vpop.f32.mrf.mxu0
        %v1062 = vpop.f32.mrf.mxu0
        %v1063 = vadd.f32 0.0, %v1062
        %v1064 = vpop.f32.mrf.mxu0
        %1065 = vdwg.mxu0
        %1066 = vmatprep.subr.bf16.mxu0 0
        %1067 = vmatpush1.bf16.msra.mxu0 %v864
        %1068 = vmatprep.subr.bf16.mxu0 0
        %1069 = vmatpush1.bf16.msra.mxu0 %v863
        %1070 = vmatprep.subr.bf16.mxu0 0
        %1071 = vmatpush1.bf16.msra.mxu0 %v862
        %1072 = vmatprep.subr.bf16.mxu0 0
        %1073 = vmatpush1.bf16.msra.mxu0 %v861
        %1074 = vmatprep.subr.bf16.mxu0 0
        %1075 = vmatpush1.bf16.msra.mxu0 %v860
        %1076 = vmatprep.subr.bf16.mxu0 0
        %1077 = vmatpush1.bf16.msra.mxu0 %v859
        %1078 = vmatprep.subr.bf16.mxu0 0
        %1079 = vmatpush1.bf16.msra.mxu0 %v858
        %1080 = vmatprep.subr.bf16.mxu0 0
        %1081 = vmatpush1.bf16.msra.mxu0 %v857
        %1082 = vmatprep.subr.bf16.mxu0 0
        %1083 = vmatpush2.bf16.msra.mxu0 %v872
        %1084 = vmatprep.subr.bf16.mxu0 0
        %1085 = vmatpush2.bf16.msra.mxu0 %v871
        %1086 = vmatprep.subr.bf16.mxu0 0
        %1087 = vmatpush2.bf16.msra.mxu0 %v870
        %1088 = vmatprep.subr.bf16.mxu0 0
        %1089 = vmatpush2.bf16.msra.mxu0 %v869
        %1090 = vmatprep.subr.bf16.mxu0 0
        %1091 = vmatpush2.bf16.msra.mxu0 %v868
        %1092 = vmatprep.subr.bf16.mxu0 0
        %1093 = vmatpush2.bf16.msra.mxu0 %v867
        %1094 = vmatprep.subr.bf16.mxu0 0
        %1095 = vmatpush2.bf16.msra.mxu0 %v866
        %1096 = vmatprep.subr.bf16.mxu0 0
        %1097 = vmatpush2.bf16.msra.mxu0 %v865
        %1098 = vmatprep.mubr.bf16.mxu0 %v588
        %1099 = vmatmul.mubr.bf16.gmra.mxu0 %v587
        %v1100 = vpop.f32.mrf.mxu0
        %v1101 = vadd.f32 %v940, %v1100
        %v1102 = vpop.f32.mrf.mxu0
        %v1103 = vpop.f32.mrf.mxu0
        %v1104 = vadd.f32 %v943, %v1103
        %v1105 = vpop.f32.mrf.mxu0
        %1106 = vmatprep.mubr.bf16.mxu0 %v592
        %1107 = vmatmul.mubr.bf16.gmra.mxu0 %v591
        %v1108 = vpop.f32.mrf.mxu0
        %v1109 = vadd.f32 %v948, %v1108
        %v1110 = vpop.f32.mrf.mxu0
        %v1111 = vpop.f32.mrf.mxu0
        %v1112 = vadd.f32 %v951, %v1111
        %v1113 = vpop.f32.mrf.mxu0
        %1114 = vmatprep.mubr.bf16.mxu0 %v596
        %1115 = vmatmul.mubr.bf16.gmra.mxu0 %v595
        %v1116 = vpop.f32.mrf.mxu0
        %v1117 = vadd.f32 %v956, %v1116
        %v1118 = vpop.f32.mrf.mxu0
        %v1119 = vpop.f32.mrf.mxu0
        %v1120 = vadd.f32 %v959, %v1119
        %v1121 = vpop.f32.mrf.mxu0
        %1122 = vmatprep.mubr.bf16.mxu0 %v600
        %1123 = vmatmul.mubr.bf16.gmra.mxu0 %v599
        %v1124 = vpop.f32.mrf.mxu0
        %v1125 = vadd.f32 %v964, %v1124
        %v1126 = vpop.f32.mrf.mxu0
        %v1127 = vpop.f32.mrf.mxu0
        %v1128 = vadd.f32 %v967, %v1127
        %v1129 = vpop.f32.mrf.mxu0
        %1130 = vmatprep.mubr.bf16.mxu0 %v604
        %1131 = vmatmul.mubr.bf16.gmra.mxu0 %v603
        %v1132 = vpop.f32.mrf.mxu0
        %v1133 = vadd.f32 %v972, %v1132
        %v1134 = vpop.f32.mrf.mxu0
        %v1135 = vpop.f32.mrf.mxu0
        %v1136 = vadd.f32 %v975, %v1135
        %v1137 = vpop.f32.mrf.mxu0
        %1138 = vmatprep.mubr.bf16.mxu0 %v608
        %1139 = vmatmul.mubr.bf16.gmra.mxu0 %v607
        %v1140 = vpop.f32.mrf.mxu0
        %v1141 = vadd.f32 %v980, %v1140
        %v1142 = vpop.f32.mrf.mxu0
        %v1143 = vpop.f32.mrf.mxu0
        %v1144 = vadd.f32 %v983, %v1143
        %v1145 = vpop.f32.mrf.mxu0
        %1146 = vmatprep.mubr.bf16.mxu0 %v612
        %1147 = vmatmul.mubr.bf16.gmra.mxu0 %v611
        %v1148 = vpop.f32.mrf.mxu0
        %v1149 = vadd.f32 %v988, %v1148
        %v1150 = vpop.f32.mrf.mxu0
        %v1151 = vpop.f32.mrf.mxu0
        %v1152 = vadd.f32 %v991, %v1151
        %v1153 = vpop.f32.mrf.mxu0
        %1154 = vmatprep.mubr.bf16.mxu0 %v616
        %1155 = vmatmul.mubr.bf16.gmra.mxu0 %v615
        %v1156 = vpop.f32.mrf.mxu0
        %v1157 = vadd.f32 %v996, %v1156
        %v1158 = vpop.f32.mrf.mxu0
        %v1159 = vpop.f32.mrf.mxu0
        %v1160 = vadd.f32 %v999, %v1159
        %v1161 = vpop.f32.mrf.mxu0
        %1162 = vmatprep.mubr.bf16.mxu0 %v620
        %1163 = vmatmul.mubr.bf16.gmra.mxu0 %v619
        %v1164 = vpop.f32.mrf.mxu0
        %v1165 = vadd.f32 %v1004, %v1164
        %v1166 = vpop.f32.mrf.mxu0
        %v1167 = vpop.f32.mrf.mxu0
        %v1168 = vadd.f32 %v1007, %v1167
        %v1169 = vpop.f32.mrf.mxu0
        %1170 = vmatprep.mubr.bf16.mxu0 %v624
        %1171 = vmatmul.mubr.bf16.gmra.mxu0 %v623
        %v1172 = vpop.f32.mrf.mxu0
        %v1173 = vadd.f32 %v1012, %v1172
        %v1174 = vpop.f32.mrf.mxu0
        %v1175 = vpop.f32.mrf.mxu0
        %v1176 = vadd.f32 %v1015, %v1175
        %v1177 = vpop.f32.mrf.mxu0
        %1178 = vmatprep.mubr.bf16.mxu0 %v628
        %1179 = vmatmul.mubr.bf16.gmra.mxu0 %v627
        %v1180 = vpop.f32.mrf.mxu0
        %v1181 = vadd.f32 %v1020, %v1180
        %v1182 = vpop.f32.mrf.mxu0
        %v1183 = vpop.f32.mrf.mxu0
        %v1184 = vadd.f32 %v1023, %v1183
        %v1185 = vpop.f32.mrf.mxu0
        %1186 = vmatprep.mubr.bf16.mxu0 %v632
        %1187 = vmatmul.mubr.bf16.gmra.mxu0 %v631
        %v1188 = vpop.f32.mrf.mxu0
        %v1189 = vadd.f32 %v1028, %v1188
        %v1190 = vpop.f32.mrf.mxu0
        %v1191 = vpop.f32.mrf.mxu0
        %v1192 = vadd.f32 %v1031, %v1191
        %v1193 = vpop.f32.mrf.mxu0
        %1194 = vmatprep.mubr.bf16.mxu0 %v636
        %1195 = vmatmul.mubr.bf16.gmra.mxu0 %v635
        %v1196 = vpop.f32.mrf.mxu0
        %v1197 = vadd.f32 %v1036, %v1196
        %v1198 = vpop.f32.mrf.mxu0
        %v1199 = vpop.f32.mrf.mxu0
        %v1200 = vadd.f32 %v1039, %v1199
        %v1201 = vpop.f32.mrf.mxu0
        %1202 = vmatprep.mubr.bf16.mxu0 %v640
        %1203 = vmatmul.mubr.bf16.gmra.mxu0 %v639
        %v1204 = vpop.f32.mrf.mxu0
        %v1205 = vadd.f32 %v1044, %v1204
        %v1206 = vpop.f32.mrf.mxu0
        %v1207 = vpop.f32.mrf.mxu0
        %v1208 = vadd.f32 %v1047, %v1207
        %v1209 = vpop.f32.mrf.mxu0
        %1210 = vmatprep.mubr.bf16.mxu0 %v644
        %1211 = vmatmul.mubr.bf16.gmra.mxu0 %v643
        %v1212 = vpop.f32.mrf.mxu0
        %v1213 = vadd.f32 %v1052, %v1212
        %v1214 = vpop.f32.mrf.mxu0
        %v1215 = vpop.f32.mrf.mxu0
        %v1216 = vadd.f32 %v1055, %v1215
        %v1217 = vpop.f32.mrf.mxu0
        %1218 = vmatprep.mubr.bf16.mxu0 %v648
        %1219 = vmatmul.mubr.bf16.gmra.mxu0 %v647
        %v1220 = vpop.f32.mrf.mxu0
        %v1221 = vadd.f32 %v1060, %v1220
        %v1222 = vpop.f32.mrf.mxu0
        %v1223 = vpop.f32.mrf.mxu0
        %v1224 = vadd.f32 %v1063, %v1223
        %v1225 = vpop.f32.mrf.mxu0
        %1226 = vdwg.mxu0
        %v1227 = vpack.c.bf16 %v1104, %v1101
        %v1228 = vpack.c.bf16 %v1112, %v1109
        %v1229 = vpack.c.bf16 %v1120, %v1117
        %v1230 = vpack.c.bf16 %v1128, %v1125
        %v1231 = vpack.c.bf16 %v1136, %v1133
        %v1232 = vpack.c.bf16 %v1144, %v1141
        %v1233 = vpack.c.bf16 %v1152, %v1149
        %v1234 = vpack.c.bf16 %v1160, %v1157
        %v1235 = vpack.c.bf16 %v1168, %v1165
        %v1236 = vpack.c.bf16 %v1176, %v1173
        %v1237 = vpack.c.bf16 %v1184, %v1181
        %v1238 = vpack.c.bf16 %v1192, %v1189
        %v1239 = vpack.c.bf16 %v1200, %v1197
        %v1240 = vpack.c.bf16 %v1208, %v1205
        %v1241 = vpack.c.bf16 %v1216, %v1213
        %v1242 = vpack.c.bf16 %v1224, %v1221
        %v1259 = vunpack.c.l.b16 %v1227
        %v1260 = vunpack.c.h.b16 %v1227
        %v1261 = vunpack.c.l.b16 %v1228
        %v1262 = vunpack.c.h.b16 %v1228
        %v1263 = vunpack.c.l.b16 %v1229
        %v1264 = vunpack.c.h.b16 %v1229
        %v1265 = vunpack.c.l.b16 %v1230
        %v1266 = vunpack.c.h.b16 %v1230
        %v1267 = vunpack.c.l.b16 %v1231
        %v1268 = vunpack.c.h.b16 %v1231
        %v1269 = vunpack.c.l.b16 %v1232
        %v1270 = vunpack.c.h.b16 %v1232
        %v1271 = vunpack.c.l.b16 %v1233
        %v1272 = vunpack.c.h.b16 %v1233
        %v1273 = vunpack.c.l.b16 %v1234
        %v1274 = vunpack.c.h.b16 %v1234
        %v1275 = vunpack.c.l.b16 %v1235
        %v1276 = vunpack.c.h.b16 %v1235
        %v1277 = vunpack.c.l.b16 %v1236
        %v1278 = vunpack.c.h.b16 %v1236
        %v1279 = vunpack.c.l.b16 %v1237
        %v1280 = vunpack.c.h.b16 %v1237
        %v1281 = vunpack.c.l.b16 %v1238
        %v1282 = vunpack.c.h.b16 %v1238
        %v1283 = vunpack.c.l.b16 %v1239
        %v1284 = vunpack.c.h.b16 %v1239
        %v1285 = vunpack.c.l.b16 %v1240
        %v1286 = vunpack.c.h.b16 %v1240
        %v1287 = vunpack.c.l.b16 %v1241
        %v1288 = vunpack.c.h.b16 %v1241
        %v1289 = vunpack.c.l.b16 %v1242
        %v1290 = vunpack.c.h.b16 %v1242
        %v1291 = vpack.c.b16 %v1259, %v1259
        %v1292 = vpack.c.b16 %v1260, %v1260
        %v1293 = vpack.c.b16 %v1261, %v1261
        %v1294 = vpack.c.b16 %v1262, %v1262
        %v1295 = vpack.c.b16 %v1263, %v1263
        %v1296 = vpack.c.b16 %v1264, %v1264
        %v1297 = vpack.c.b16 %v1265, %v1265
        %v1298 = vpack.c.b16 %v1266, %v1266
        %v1299 = vpack.c.b16 %v1267, %v1267
        %v1300 = vpack.c.b16 %v1268, %v1268
        %v1301 = vpack.c.b16 %v1269, %v1269
        %v1302 = vpack.c.b16 %v1270, %v1270
        %v1303 = vpack.c.b16 %v1271, %v1271
        %v1304 = vpack.c.b16 %v1272, %v1272
        %v1305 = vpack.c.b16 %v1273, %v1273
        %v1306 = vpack.c.b16 %v1274, %v1274
        %v1307 = vpack.c.b16 %v1275, %v1275
        %v1308 = vpack.c.b16 %v1276, %v1276
        %v1309 = vpack.c.b16 %v1277, %v1277
        %v1310 = vpack.c.b16 %v1278, %v1278
        %v1311 = vpack.c.b16 %v1279, %v1279
        %v1312 = vpack.c.b16 %v1280, %v1280
        %v1313 = vpack.c.b16 %v1281, %v1281
        %v1314 = vpack.c.b16 %v1282, %v1282
        %v1315 = vpack.c.b16 %v1283, %v1283
        %v1316 = vpack.c.b16 %v1284, %v1284
        %v1317 = vpack.c.b16 %v1285, %v1285
        %v1318 = vpack.c.b16 %v1286, %v1286
        %v1319 = vpack.c.b16 %v1287, %v1287
        %v1320 = vpack.c.b16 %v1288, %v1288
        %v1321 = vpack.c.b16 %v1289, %v1289
        %v1322 = vpack.c.b16 %v1290, %v1290
        %1355 = vst [vmem:[%s262] sm:$0xf] %v1291
        %1356 = vst [vmem:[%s262 + $0x4] sm:$0xf] %v1292
        %1357 = vst [vmem:[%s262 + $0x8] sm:$0xf] %v1293
        %1358 = vst [vmem:[%s262 + $0xc] sm:$0xf] %v1294
        %1359 = vst [vmem:[%s262 + $0x10] sm:$0xf] %v1295
        %1360 = vst [vmem:[%s262 + $0x14] sm:$0xf] %v1296
        %1361 = vst [vmem:[%s262 + $0x18] sm:$0xf] %v1297
        %1362 = vst [vmem:[%s262 + $0x1c] sm:$0xf] %v1298
        %1363 = vst [vmem:[%s262 + $0x20] sm:$0xf] %v1299
        %1364 = vst [vmem:[%s262 + $0x24] sm:$0xf] %v1300
        %1365 = vst [vmem:[%s262 + $0x28] sm:$0xf] %v1301
        %1366 = vst [vmem:[%s262 + $0x2c] sm:$0xf] %v1302
        %1367 = vst [vmem:[%s262 + $0x30] sm:$0xf] %v1303
        %1368 = vst [vmem:[%s262 + $0x34] sm:$0xf] %v1304
        %1369 = vst [vmem:[%s262 + $0x38] sm:$0xf] %v1305
        %1370 = vst [vmem:[%s262 + $0x3c] sm:$0xf] %v1306
        %1371 = vst [vmem:[%s262 + $0x40] sm:$0xf] %v1307
        %1372 = vst [vmem:[%s262 + $0x44] sm:$0xf] %v1308
        %1373 = vst [vmem:[%s262 + $0x48] sm:$0xf] %v1309
        %1374 = vst [vmem:[%s262 + $0x4c] sm:$0xf] %v1310
        %1375 = vst [vmem:[%s262 + $0x50] sm:$0xf] %v1311
        %1376 = vst [vmem:[%s262 + $0x54] sm:$0xf] %v1312
        %1377 = vst [vmem:[%s262 + $0x58] sm:$0xf] %v1313
        %1378 = vst [vmem:[%s262 + $0x5c] sm:$0xf] %v1314
        %1379 = vst [vmem:[%s262 + $0x60] sm:$0xf] %v1315
        %1380 = vst [vmem:[%s262 + $0x64] sm:$0xf] %v1316
        %1381 = vst [vmem:[%s262 + $0x68] sm:$0xf] %v1317
        %1382 = vst [vmem:[%s262 + $0x6c] sm:$0xf] %v1318
        %1383 = vst [vmem:[%s262 + $0x70] sm:$0xf] %v1319
        %1384 = vst [vmem:[%s262 + $0x74] sm:$0xf] %v1320
        %1385 = vst [vmem:[%s262 + $0x78] sm:$0xf] %v1321
        %1386 = vst [vmem:[%s262 + $0x7c] sm:$0xf] %v1322
        %v1387 = vadd.f32 %v1101, %v1104
        %v1388 = vadd.f32 %v1387, %v1109
        %v1389 = vadd.f32 %v1388, %v1112
        %v1390 = vadd.f32 %v1389, %v1117
        %v1391 = vadd.f32 %v1390, %v1120
        %v1392 = vadd.f32 %v1391, %v1125
        %v1393 = vadd.f32 %v1392, %v1128
        %v1394 = vadd.f32 %v1393, %v1133
        %v1395 = vadd.f32 %v1394, %v1136
        %v1396 = vadd.f32 %v1395, %v1141
        %v1397 = vadd.f32 %v1396, %v1144
        %v1398 = vadd.f32 %v1397, %v1149
        %v1399 = vadd.f32 %v1398, %v1152
        %v1400 = vadd.f32 %v1399, %v1157
        %v1401 = vadd.f32 %v1400, %v1160
        %v1402 = vadd.f32 %v1401, %v1165
        %v1403 = vadd.f32 %v1402, %v1168
        %v1404 = vadd.f32 %v1403, %v1173
        %v1405 = vadd.f32 %v1404, %v1176
        %v1406 = vadd.f32 %v1405, %v1181
        %v1407 = vadd.f32 %v1406, %v1184
        %v1408 = vadd.f32 %v1407, %v1189
        %v1409 = vadd.f32 %v1408, %v1192
        %v1410 = vadd.f32 %v1409, %v1197
        %v1411 = vadd.f32 %v1410, %v1200
        %v1412 = vadd.f32 %v1411, %v1205
        %v1413 = vadd.f32 %v1412, %v1208
        %v1414 = vadd.f32 %v1413, %v1213
        %v1415 = vadd.f32 %v1414, %v1216
        %v1416 = vadd.f32 %v1415, %v1221
        %v1417 = vadd.f32 %v1416, %v1224
        %v1418 = vrot.slane %v1417, 4
        %v1419 = vadd.f32 %v1417, %v1418
        %v1420 = vrot.slane %v1419, 2
        %v1421 = vadd.f32 %v1419, %v1420
        %v1422 = vrot.slane %v1421, 1
        %v1423 = vadd.f32 %v1421, %v1422
        %1424 = vst [vmem:[%s237] sm:$0x1] %v1423
        %v1425 = vmul.f32 %v1101, %v1101
        %v1426 = vmul.f32 %v1104, %v1104
        %v1427 = vmul.f32 %v1109, %v1109
        %v1428 = vmul.f32 %v1112, %v1112
        %v1429 = vmul.f32 %v1117, %v1117
        %v1430 = vmul.f32 %v1120, %v1120
        %v1431 = vmul.f32 %v1125, %v1125
        %v1432 = vmul.f32 %v1128, %v1128
        %v1433 = vmul.f32 %v1133, %v1133
        %v1434 = vmul.f32 %v1136, %v1136
        %v1435 = vmul.f32 %v1141, %v1141
        %v1436 = vmul.f32 %v1144, %v1144
        %v1437 = vmul.f32 %v1149, %v1149
        %v1438 = vmul.f32 %v1152, %v1152
        %v1439 = vmul.f32 %v1157, %v1157
        %v1440 = vmul.f32 %v1160, %v1160
        %v1441 = vmul.f32 %v1165, %v1165
        %v1442 = vmul.f32 %v1168, %v1168
        %v1443 = vmul.f32 %v1173, %v1173
        %v1444 = vmul.f32 %v1176, %v1176
        %v1445 = vmul.f32 %v1181, %v1181
        %v1446 = vmul.f32 %v1184, %v1184
        %v1447 = vmul.f32 %v1189, %v1189
        %v1448 = vmul.f32 %v1192, %v1192
        %v1449 = vmul.f32 %v1197, %v1197
        %v1450 = vmul.f32 %v1200, %v1200
        %v1451 = vmul.f32 %v1205, %v1205
        %v1452 = vmul.f32 %v1208, %v1208
        %v1453 = vmul.f32 %v1213, %v1213
        %v1454 = vmul.f32 %v1216, %v1216
        %v1455 = vmul.f32 %v1221, %v1221
        %v1456 = vmul.f32 %v1224, %v1224
        %v1457 = vadd.f32 %v1425, %v1426
        %v1458 = vadd.f32 %v1457, %v1427
        %v1459 = vadd.f32 %v1458, %v1428
        %v1460 = vadd.f32 %v1459, %v1429
        %v1461 = vadd.f32 %v1460, %v1430
        %v1462 = vadd.f32 %v1461, %v1431
        %v1463 = vadd.f32 %v1462, %v1432
        %v1464 = vadd.f32 %v1463, %v1433
        %v1465 = vadd.f32 %v1464, %v1434
        %v1466 = vadd.f32 %v1465, %v1435
        %v1467 = vadd.f32 %v1466, %v1436
        %v1468 = vadd.f32 %v1467, %v1437
        %v1469 = vadd.f32 %v1468, %v1438
        %v1470 = vadd.f32 %v1469, %v1439
        %v1471 = vadd.f32 %v1470, %v1440
        %v1472 = vadd.f32 %v1471, %v1441
        %v1473 = vadd.f32 %v1472, %v1442
        %v1474 = vadd.f32 %v1473, %v1443
        %v1475 = vadd.f32 %v1474, %v1444
        %v1476 = vadd.f32 %v1475, %v1445
        %v1477 = vadd.f32 %v1476, %v1446
        %v1478 = vadd.f32 %v1477, %v1447
        %v1479 = vadd.f32 %v1478, %v1448
        %v1480 = vadd.f32 %v1479, %v1449
        %v1481 = vadd.f32 %v1480, %v1450
        %v1482 = vadd.f32 %v1481, %v1451
        %v1483 = vadd.f32 %v1482, %v1452
        %v1484 = vadd.f32 %v1483, %v1453
        %v1485 = vadd.f32 %v1484, %v1454
        %v1486 = vadd.f32 %v1485, %v1455
        %v1487 = vadd.f32 %v1486, %v1456
        %v1488 = vrot.slane %v1487, 4
        %v1489 = vadd.f32 %v1487, %v1488
        %v1490 = vrot.slane %v1489, 2
        %v1491 = vadd.f32 %v1489, %v1490
        %v1492 = vrot.slane %v1491, 1
        %v1493 = vadd.f32 %v1491, %v1492
        %1494 = vst [vmem:[%s243] sm:$0x1] %v1493
        %s1495 = smul.u32 32, %s26
        %p1496 = scmp.lt.s32.totalorder %s1495, 127
        %s1497 = scalar_select %p1496, %s1495, 127
        %p1498 = scmp.lt.s32.totalorder %s27, 0
        %s1499 = scalar_select %p1498, %s27, 0
        %s1500 = sadd.s32 %s1499, %s1497
        %s1501 = smul.addr %s1500, 4
        %s1502 = scalar_lea.vmem %s2, %s1501
        %s1503 = sand.u32 %s124, 1
        %s1504 = scalar_lea.sflag [#allocation3], %s1503
        %s1505 = sand.u32 %s124, 1
        %s1506 = scalar_lea.vmem [#allocation2], %s1505
        %s1507 = sand.u32 %s152, 1
        %s1508 = scalar_lea.sflag [#allocation5], %s1507
        %s1509 = sand.u32 %s152, 1
        %s1510 = scalar_lea.vmem [#allocation4], %s1509
        // Predicated region
        $region29: #{_encoder_forward.5} parent=27 // pred_check
          %p1511 = pneg %p106
        $region30: #{_encoder_forward.5} parent=27 // pred_check_branch
          %1513 = sbr.rel (%p1511) target = $region32
        $region31: #{_encoder_forward.5} parent=27 // pred_region
          %s1514 = smul.u32 32, %s26
        $region32: #{_encoder_forward.5} parent=27 // pred_fallthru
          _
        // Predicated region
        $region33: #{_encoder_forward.5} parent=27 // pred_check
          %p1515 = pneg %p134
        $region34: #{_encoder_forward.5} parent=27 // pred_check_branch
          %1517 = sbr.rel (%p1515) target = $region36
        $region35: #{_encoder_forward.5} parent=27 // pred_region
          %s1519 = ssub.s32 16, 16
          %1520 = vsyncadd %s1504, %s1519
          %s1521 = sadd.s32 %s27, %s26
          %s1522 = smul.addr %s1521, 16
          %s1523 = scalar_lea.hbm %s3, %s1522
          %s1525 = sshll.u32 %s1506, 4
          %s1526 = int_to_ptr.vmem [resolvable:$true] %s1525
          %1528 = dma.vmem_to_hbm [thread:$0]  %s1526, 16, %s1523, %s1504
        $region36: #{_encoder_forward.5} parent=27 // pred_fallthru
          _
        // Predicated region
        $region37: #{_encoder_forward.5} parent=27 // pred_check
          %p1529 = pneg %p162
        $region38: #{_encoder_forward.5} parent=27 // pred_check_branch
          %1531 = sbr.rel (%p1529) target = $region40
        $region39: #{_encoder_forward.5} parent=27 // pred_region
          %s1533 = ssub.s32 16, 16
          %1534 = vsyncadd %s1508, %s1533
          %s1535 = sadd.s32 %s27, %s26
          %s1536 = smul.addr %s1535, 16
          %s1537 = scalar_lea.hbm %s4, %s1536
          %s1539 = sshll.u32 %s1510, 4
          %s1540 = int_to_ptr.vmem [resolvable:$true] %s1539
          %1542 = dma.vmem_to_hbm [thread:$0]  %s1540, 16, %s1537, %s1508
        $region40: #{_encoder_forward.5} parent=27 // pred_fallthru
          _
      $region28: #{_encoder_forward.5} parent=5 // pred_fallthru
        _
      %p1543 = scmp.le.s32.totalorder 2, %s17
      // Predicated region
      $region41: #{_encoder_forward.5} parent=5 // pred_check
        %p1544 = pneg %p1543
      $region42: #{_encoder_forward.5} parent=5 // pred_check_branch
        %1546 = sbr.rel (%p1544) target = $region44
      $region43: #{_encoder_forward.5} parent=5 // pred_region
        %s1547 = ssub.s32 %s17, 2
        // Predicated region
        $region45: #{_encoder_forward.5} parent=43 // pred_check
          %p1548 = pneg %p112
        $region46: #{_encoder_forward.5} parent=43 // pred_check_branch
          %1550 = sbr.rel (%p1548) target = $region48
        $region47: #{_encoder_forward.5} parent=43 // pred_region
          %s1551 = smul.u32 32, %s28
          %p1552 = scmp.lt.s32.totalorder %s1551, 127
          %s1553 = scalar_select %p1552, %s1551, 127
          %p1554 = scmp.lt.s32.totalorder %s29, 0
          %s1555 = scalar_select %p1554, %s29, 0
          %s1556 = sadd.s32 %s1555, %s1553
          %s1557 = smul.addr %s1556, 4
          %s1558 = scalar_lea.vmem %s2, %s1557
        $region48: #{_encoder_forward.5} parent=43 // pred_fallthru
          _
        // Predicated region
        $region49: #{_encoder_forward.5} parent=43 // pred_check
          %p1559 = pneg %p140
        $region50: #{_encoder_forward.5} parent=43 // pred_check_branch
          %1561 = sbr.rel (%p1559) target = $region52
        $region51: #{_encoder_forward.5} parent=43 // pred_region
          %s1562 = sand.u32 %s125, 1
          %s1563 = scalar_lea.sflag [#allocation3], %s1562
          %s1564 = sand.u32 %s125, 1
          %s1565 = scalar_lea.vmem [#allocation2], %s1564
          %1566 = dma.done %s1563, 16
        $region52: #{_encoder_forward.5} parent=43 // pred_fallthru
          _
        // Predicated region
        $region53: #{_encoder_forward.5} parent=43 // pred_check
          %p1567 = pneg %p168
        $region54: #{_encoder_forward.5} parent=43 // pred_check_branch
          %1569 = sbr.rel (%p1567) target = $region56
        $region55: #{_encoder_forward.5} parent=43 // pred_region
          %s1570 = sand.u32 %s153, 1
          %s1571 = scalar_lea.sflag [#allocation5], %s1570
          %s1572 = sand.u32 %s153, 1
          %s1573 = scalar_lea.vmem [#allocation4], %s1572
          %1574 = dma.done %s1571, 16
        $region56: #{_encoder_forward.5} parent=43 // pred_fallthru
          _
      $region44: #{_encoder_forward.5} parent=5 // pred_fallthru
        _
    $region6: #{_encoder_forward.5} parent=1 // loop_footer
      %s21 = sadd.s32 1, %s17
    $region7: #{_encoder_forward.5} parent=1 // loop_footer_branch
      %16 = sbr.rel target = $region3
    $region8: #{_encoder_forward.5} parent=1 // loop_exit
      _
    %1575 = vsyncpa [#allocation3], 1
    %s1576 = scalar_lea.sflag [#allocation3], 1
    %1577 = vsyncpa %s1576, 1
    %1578 = vsyncpa [#allocation5], 1
    %s1579 = scalar_lea.sflag [#allocation5], 1
    %1580 = vsyncpa %s1579, 1

// kernel: _encoder_forward.6
$region0: #{_encoder_forward.6}
  #allocation0 [shape = 'u32[]', space=smem, size = 0x4, offset = 0x4, fixed_abs, tag = 'smem constant byte address 0x4 - core index']
  #allocation1 [shape = 'u32[144,128]{1,0:T(1,128)}', space=vmem, size = 0x12000, scoped, tag = 'internal scratch']
  %s0 = inlined_call_operand.vmem [shape: bf16[256,512], index: 0, kind: input, shape index: {}]
  %s1 = inlined_call_operand.vmem [shape: bf16[512,128], index: 1, kind: input, shape index: {}]
  %s2 = inlined_call_operand.vmem [shape: bf16[256,128], index: 2, kind: output, shape index: {0}]
  %s3 = inlined_call_operand.vmem [shape: f32[2,1,1,128], index: 3, kind: output, shape index: {1}]
  %s4 = inlined_call_operand.vmem [shape: f32[2,1,1,128], index: 4, kind: output, shape index: {2}]
  %5 = xla_tuple %s2, %s3, %s4
  %s6 = sld [smem:[#allocation0]]
  $region57: #{_encoder_forward.6} parent=0
    _
  %s8 = ssub.s32 1, %s6
  %s9 = scalar_select 0, %s8, %s6
  loop: start=0, step=1, limit=4
  $region2: #{_encoder_forward.6} parent=0 // loop_pre_header
    _
  $region3: #{_encoder_forward.6} parent=0 // loop_header
    %s11 = sphi 0, %s15
    %p12 = scmp.ge.s32.totalorder %s11, 4
    %s18 = sphi 0, %s30
    %s19 = sphi 0, %s26
    %s20 = sphi 0, %s18
    %s21 = sphi 0, %s19
    %s22 = sphi 0, %s20
    %s23 = sphi 0, %s21
    %s33 = sphi 0, %s35
    %s36 = sphi 0, %s33
    %s37 = sphi 0, %s36
    %s53 = sphi 0, %s37
    %s59 = sphi 0, %s61
    %s62 = sphi 0, %s59
    %s63 = sphi 0, %s62
    %s79 = sphi 0, %s63
    %s87 = sphi 0, %s89
    %s90 = sphi 0, %s87
    %s91 = sphi 0, %s90
    %s107 = sphi 0, %s91
    %s115 = sphi 0, %s117
    %s118 = sphi 0, %s115
    %s119 = sphi 0, %s118
    %s135 = sphi 0, %s119
    %s143 = sphi 0, %s145
    %s146 = sphi 0, %s143
    %s147 = sphi 0, %s146
    %s163 = sphi 0, %s147
  $region4: #{_encoder_forward.6} parent=0 // loop_header_branch
    %14 = sbr.rel (%p12) target = $region8
  $region5: #{_encoder_forward.6} parent=0 // loop_body
    %s16 = ssub.s32 %s11, 1
    %s17 = ssub.s32 %s11, 2
    %s24 = sadd.s32 1, %s19
    %p25 = scmp.ge.s32.totalorder %s24, 1
    %s26 = scalar_select %p25, 0, %s24
    %s27 = sadd.s32 1, %s18
    %s28 = scalar_select %p25, %s27, %s18
    %p29 = scmp.ge.s32.totalorder %s28, 2
    %s30 = scalar_select %p29, 0, %s28
    %s31 = ssub.s32 %s18, %s30
    %p32 = scmp.eq.s32.totalorder %s31, 0
    %s34 = sadd.s32 %s33, 1
    %s35 = scalar_select %p32, %s33, %s34
    %p38 = pneg %p32
    %p39 = scmp.eq.s32.totalorder %s11, 1
    %p40 = por %p38, %p39
    %p41 = scmp.ne.s32.totalorder %s33, %s36
    %p42 = scmp.eq.s32.totalorder %s11, 0
    %p43 = por %p41, %p42
    %p44 = scmp.ne.s32.totalorder %s33, %s36
    %p45 = scmp.eq.s32.totalorder %s16, 1
    %p46 = por %p44, %p45
    %p47 = scmp.ne.s32.totalorder %s36, %s37
    %p48 = scmp.eq.s32.totalorder %s16, 0
    %p49 = por %p47, %p48
    %p50 = scmp.ne.s32.totalorder %s36, %s37
    %p51 = scmp.eq.s32.totalorder %s17, 1
    %p52 = por %p50, %p51
    %p54 = scmp.ne.s32.totalorder %s37, %s53
    %p55 = scmp.eq.s32.totalorder %s17, 0
    %p56 = por %p54, %p55
    %s57 = ssub.s32 %s19, %s26
    %p58 = scmp.eq.s32.totalorder %s57, 0
    %s60 = sadd.s32 %s59, 1
    %s61 = scalar_select %p58, %s59, %s60
    %p64 = pneg %p58
    %p65 = scmp.eq.s32.totalorder %s11, 1
    %p66 = por %p64, %p65
    %p67 = scmp.ne.s32.totalorder %s59, %s62
    %p68 = scmp.eq.s32.totalorder %s11, 0
    %p69 = por %p67, %p68
    %p70 = scmp.ne.s32.totalorder %s59, %s62
    %p71 = scmp.eq.s32.totalorder %s16, 1
    %p72 = por %p70, %p71
    %p73 = scmp.ne.s32.totalorder %s62, %s63
    %p74 = scmp.eq.s32.totalorder %s16, 0
    %p75 = por %p73, %p74
    %p76 = scmp.ne.s32.totalorder %s62, %s63
    %p77 = scmp.eq.s32.totalorder %s17, 1
    %p78 = por %p76, %p77
    %p80 = scmp.ne.s32.totalorder %s63, %s79
    %p81 = scmp.eq.s32.totalorder %s17, 0
    %p82 = por %p80, %p81
    %s83 = ssub.s32 %s18, %s30
    %s84 = ssub.s32 %s19, %s26
    %s85 = sor.u32 %s83, %s84
    %p86 = scmp.eq.s32.totalorder %s85, 0
    %s88 = sadd.s32 %s87, 1
    %s89 = scalar_select %p86, %s87, %s88
    %p92 = pneg %p86
    %p93 = scmp.eq.s32.totalorder %s11, 1
    %p94 = por %p92, %p93
    %p95 = scmp.ne.s32.totalorder %s87, %s90
    %p96 = scmp.eq.s32.totalorder %s11, 0
    %p97 = por %p95, %p96
    %p98 = scmp.ne.s32.totalorder %s87, %s90
    %p99 = scmp.eq.s32.totalorder %s16, 1
    %p100 = por %p98, %p99
    %p101 = scmp.ne.s32.totalorder %s90, %s91
    %p102 = scmp.eq.s32.totalorder %s16, 0
    %p103 = por %p101, %p102
    %p104 = scmp.ne.s32.totalorder %s90, %s91
    %p105 = scmp.eq.s32.totalorder %s17, 1
    %p106 = por %p104, %p105
    %p108 = scmp.ne.s32.totalorder %s91, %s107
    %p109 = scmp.eq.s32.totalorder %s17, 0
    %p110 = por %p108, %p109
    %s111 = ssub.s32 %s18, %s30
    %s112 = ssub.s32 %s19, %s26
    %s113 = sor.u32 %s111, %s112
    %p114 = scmp.eq.s32.totalorder %s113, 0
    %s116 = sadd.s32 %s115, 1
    %s117 = scalar_select %p114, %s115, %s116
    %p120 = pneg %p114
    %p121 = scmp.eq.s32.totalorder %s11, 1
    %p122 = por %p120, %p121
    %p123 = scmp.ne.s32.totalorder %s115, %s118
    %p124 = scmp.eq.s32.totalorder %s11, 0
    %p125 = por %p123, %p124
    %p126 = scmp.ne.s32.totalorder %s115, %s118
    %p127 = scmp.eq.s32.totalorder %s16, 1
    %p128 = por %p126, %p127
    %p129 = scmp.ne.s32.totalorder %s118, %s119
    %p130 = scmp.eq.s32.totalorder %s16, 0
    %p131 = por %p129, %p130
    %p132 = scmp.ne.s32.totalorder %s118, %s119
    %p133 = scmp.eq.s32.totalorder %s17, 1
    %p134 = por %p132, %p133
    %p136 = scmp.ne.s32.totalorder %s119, %s135
    %p137 = scmp.eq.s32.totalorder %s17, 0
    %p138 = por %p136, %p137
    %s139 = ssub.s32 %s18, %s30
    %s140 = ssub.s32 %s19, %s26
    %s141 = sor.u32 %s139, %s140
    %p142 = scmp.eq.s32.totalorder %s141, 0
    %s144 = sadd.s32 %s143, 1
    %s145 = scalar_select %p142, %s143, %s144
    %p148 = pneg %p142
    %p149 = scmp.eq.s32.totalorder %s11, 1
    %p150 = por %p148, %p149
    %p151 = scmp.ne.s32.totalorder %s143, %s146
    %p152 = scmp.eq.s32.totalorder %s11, 0
    %p153 = por %p151, %p152
    %p154 = scmp.ne.s32.totalorder %s143, %s146
    %p155 = scmp.eq.s32.totalorder %s16, 1
    %p156 = por %p154, %p155
    %p157 = scmp.ne.s32.totalorder %s146, %s147
    %p158 = scmp.eq.s32.totalorder %s16, 0
    %p159 = por %p157, %p158
    %p160 = scmp.ne.s32.totalorder %s146, %s147
    %p161 = scmp.eq.s32.totalorder %s17, 1
    %p162 = por %p160, %p161
    %p164 = scmp.ne.s32.totalorder %s147, %s163
    %p165 = scmp.eq.s32.totalorder %s17, 0
    %p166 = por %p164, %p165
    %p167 = scmp.le.s32.totalorder 1, %s11
    %p168 = scmp.lt.s32.totalorder %s11, 3
    %p169 = pnand %p167, %p168
    %p170 = pneg %p169
    // Predicated region
    $region9: #{_encoder_forward.6} parent=5 // pred_check
      _
    $region10: #{_encoder_forward.6} parent=5 // pred_check_branch
      %172 = sbr.rel (%p169) target = $region12
    $region11: #{_encoder_forward.6} parent=5 // pred_region
      %s173 = ssub.s32 %s11, 1
      // Predicated region
      $region13: #{_encoder_forward.6} parent=11 // pred_check
        %p174 = pneg %p75
      $region14: #{_encoder_forward.6} parent=11 // pred_check_branch
        %176 = sbr.rel (%p174) target = $region16
      $region15: #{_encoder_forward.6} parent=11 // pred_region
        %p177 = scmp.lt.s32.totalorder %s21, 0
        %s178 = scalar_select %p177, %s21, 0
        %s179 = smul.addr %s178, 4
        %s180 = scalar_lea.vmem %s1, %s179
      $region16: #{_encoder_forward.6} parent=11 // pred_fallthru
        _
    $region12: #{_encoder_forward.6} parent=5 // pred_fallthru
      _
    %p181 = scmp.lt.s32.totalorder %s11, 2
    // Predicated region
    $region17: #{_encoder_forward.6} parent=5 // pred_check
      %p182 = pneg %p181
    $region18: #{_encoder_forward.6} parent=5 // pred_check_branch
      %184 = sbr.rel (%p182) target = $region20
    $region19: #{_encoder_forward.6} parent=5 // pred_region
      // Predicated region
      $region21: #{_encoder_forward.6} parent=19 // pred_check
        %p185 = pneg %p43
      $region22: #{_encoder_forward.6} parent=19 // pred_check_branch
        %187 = sbr.rel (%p185) target = $region24
      $region23: #{_encoder_forward.6} parent=19 // pred_region
        %s188 = smul.u32 16, %s18
        %p189 = scmp.lt.s32.totalorder %s188, 31
        %s190 = scalar_select %p189, %s188, 31
        %s191 = smul.addr %s190, 4
        %s192 = smul.addr %s191, 4
        %s193 = scalar_lea.vmem %s0, %s192
        %s194 = smul.u32 16, %s18
      $region24: #{_encoder_forward.6} parent=19 // pred_fallthru
        _
    $region20: #{_encoder_forward.6} parent=5 // pred_fallthru
      _
    %p195 = scmp.le.s32.totalorder 1, %s11
    %p196 = scmp.lt.s32.totalorder %s11, 3
    %p197 = pnand %p195, %p196
    %p198 = pneg %p197
    // Predicated region
    $region25: #{_encoder_forward.6} parent=5 // pred_check
      _
    $region26: #{_encoder_forward.6} parent=5 // pred_check_branch
      %200 = sbr.rel (%p197) target = $region28
    $region27: #{_encoder_forward.6} parent=5 // pred_region
      %s201 = ssub.s32 %s11, 1
      %s202 = smul.u32 16, %s20
      %p203 = scmp.lt.s32.totalorder %s202, 31
      %s204 = scalar_select %p203, %s202, 31
      %s205 = smul.addr %s204, 4
      %s206 = smul.addr %s205, 4
      %s207 = scalar_lea.vmem %s0, %s206
      %p208 = pneg %p49
      %p209 = pneg %p46
      %p210 = scmp.lt.s32.totalorder %s21, 0
      %s211 = scalar_select %p210, %s21, 0
      %s212 = smul.addr %s211, 4
      %s213 = scalar_lea.vmem %s1, %s212
      %p214 = pneg %p75
      %p215 = pneg %p72
      %p216 = pneg %p103
      %p217 = pneg %p100
      %s218 = smul.u32 16, %s20
      %p219 = scmp.lt.s32.totalorder %s218, 31
      %s220 = scalar_select %p219, %s218, 31
      %p221 = scmp.lt.s32.totalorder %s21, 0
      %s222 = scalar_select %p221, %s21, 0
      %s223 = sadd.s32 %s222, %s220
      %s224 = smul.addr %s223, 4
      %s225 = scalar_lea.vmem %s2, %s224
      %p226 = pneg %p131
      %p227 = pneg %p128
      %p228 = scmp.lt.s32.totalorder %s20, 1
      %s229 = scalar_select %p228, %s20, 1
      %p230 = scmp.lt.s32.totalorder %s21, 0
      %s231 = scalar_select %p230, %s21, 0
      %s232 = sadd.s32 %s231, %s229
      %s233 = scalar_lea.vmem %s3, %s232
      %p234 = pneg %p159
      %p235 = pneg %p156
      %p236 = scmp.lt.s32.totalorder %s20, 1
      %s237 = scalar_select %p236, %s20, 1
      %p238 = scmp.lt.s32.totalorder %s21, 0
      %s239 = scalar_select %p238, %s21, 0
      %s240 = sadd.s32 %s239, %s237
      %s241 = scalar_lea.vmem %s4, %s240
      %s242 = smul.u32 16, %s20
      %p243 = scmp.lt.s32.totalorder %s242, 31
      %s244 = scalar_select %p243, %s242, 31
      %s245 = smul.addr %s244, 4
      %s246 = smul.addr %s245, 4
      %s247 = scalar_lea.vmem %s0, %s246
      %s248 = smul.u32 16, %s20
      %p249 = scmp.lt.s32.totalorder %s21, 0
      %s250 = scalar_select %p249, %s21, 0
      %s251 = smul.addr %s250, 4
      %s252 = scalar_lea.vmem %s1, %s251
      %s253 = smul.u32 16, %s20
      %p254 = scmp.lt.s32.totalorder %s253, 31
      %s255 = scalar_select %p254, %s253, 31
      %p256 = scmp.lt.s32.totalorder %s21, 0
      %s257 = scalar_select %p256, %s21, 0
      %s258 = sadd.s32 %s257, %s255
      %s259 = smul.addr %s258, 4
      %s260 = scalar_lea.vmem %s2, %s259
      %s261 = smul.u32 16, %s20
      %p262 = scmp.lt.s32.totalorder %s20, 1
      %s263 = scalar_select %p262, %s20, 1
      %p264 = scmp.lt.s32.totalorder %s21, 0
      %s265 = scalar_select %p264, %s21, 0
      %s266 = sadd.s32 %s265, %s263
      %s267 = scalar_lea.vmem %s3, %s266
      %p268 = scmp.lt.s32.totalorder %s20, 1
      %s269 = scalar_select %p268, %s20, 1
      %p270 = scmp.lt.s32.totalorder %s21, 0
      %s271 = scalar_select %p270, %s21, 0
      %s272 = sadd.s32 %s271, %s269
      %s273 = scalar_lea.vmem %s4, %s272
      %v275 = vld [vmem:[%s247] sm:$0xff]
      %v276 = vld [vmem:[%s247 + $0x8] sm:$0xff]
      %v277 = vld [vmem:[%s247 + $0x10] sm:$0xff]
      %v278 = vld [vmem:[%s247 + $0x18] sm:$0xff]
      %v279 = vld [vmem:[%s247 + $0x20] sm:$0xff]
      %v280 = vld [vmem:[%s247 + $0x28] sm:$0xff]
      %v281 = vld [vmem:[%s247 + $0x30] sm:$0xff]
      %v282 = vld [vmem:[%s247 + $0x38] sm:$0xff]
      %v283 = vld [vmem:[%s247 + $0x40] sm:$0xff]
      %v284 = vld [vmem:[%s247 + $0x48] sm:$0xff]
      %v285 = vld [vmem:[%s247 + $0x50] sm:$0xff]
      %v286 = vld [vmem:[%s247 + $0x58] sm:$0xff]
      %v287 = vld [vmem:[%s247 + $0x60] sm:$0xff]
      %v288 = vld [vmem:[%s247 + $0x68] sm:$0xff]
      %v289 = vld [vmem:[%s247 + $0x70] sm:$0xff]
      %v290 = vld [vmem:[%s247 + $0x78] sm:$0xff]
      %v291 = vld [vmem:[%s247 + $0x80] sm:$0xff]
      %v292 = vld [vmem:[%s247 + $0x88] sm:$0xff]
      %v293 = vld [vmem:[%s247 + $0x90] sm:$0xff]
      %v294 = vld [vmem:[%s247 + $0x98] sm:$0xff]
      %v295 = vld [vmem:[%s247 + $0xa0] sm:$0xff]
      %v296 = vld [vmem:[%s247 + $0xa8] sm:$0xff]
      %v297 = vld [vmem:[%s247 + $0xb0] sm:$0xff]
      %v298 = vld [vmem:[%s247 + $0xb8] sm:$0xff]
      %v299 = vld [vmem:[%s247 + $0xc0] sm:$0xff]
      %v300 = vld [vmem:[%s247 + $0xc8] sm:$0xff]
      %v301 = vld [vmem:[%s247 + $0xd0] sm:$0xff]
      %v302 = vld [vmem:[%s247 + $0xd8] sm:$0xff]
      %v303 = vld [vmem:[%s247 + $0xe0] sm:$0xff]
      %v304 = vld [vmem:[%s247 + $0xe8] sm:$0xff]
      %v305 = vld [vmem:[%s247 + $0xf0] sm:$0xff]
      %v306 = vld [vmem:[%s247 + $0xf8] sm:$0xff]
      %v307 = vld [vmem:[%s252] sm:$0xf]
      %v308 = vld [vmem:[%s252 + $0x4] sm:$0xf]
      %v309 = vld [vmem:[%s252 + $0x8] sm:$0xf]
      %v310 = vld [vmem:[%s252 + $0xc] sm:$0xf]
      %v311 = vld [vmem:[%s252 + $0x10] sm:$0xf]
      %v312 = vld [vmem:[%s252 + $0x14] sm:$0xf]
      %v313 = vld [vmem:[%s252 + $0x18] sm:$0xf]
      %v314 = vld [vmem:[%s252 + $0x1c] sm:$0xf]
      %v315 = vld [vmem:[%s252 + $0x20] sm:$0xf]
      %v316 = vld [vmem:[%s252 + $0x24] sm:$0xf]
      %v317 = vld [vmem:[%s252 + $0x28] sm:$0xf]
      %v318 = vld [vmem:[%s252 + $0x2c] sm:$0xf]
      %v319 = vld [vmem:[%s252 + $0x30] sm:$0xf]
      %v320 = vld [vmem:[%s252 + $0x34] sm:$0xf]
      %v321 = vld [vmem:[%s252 + $0x38] sm:$0xf]
      %v322 = vld [vmem:[%s252 + $0x3c] sm:$0xf]
      %v323 = vld [vmem:[%s252 + $0x40] sm:$0xf]
      %v324 = vld [vmem:[%s252 + $0x44] sm:$0xf]
      %v325 = vld [vmem:[%s252 + $0x48] sm:$0xf]
      %v326 = vld [vmem:[%s252 + $0x4c] sm:$0xf]
      %v327 = vld [vmem:[%s252 + $0x50] sm:$0xf]
      %v328 = vld [vmem:[%s252 + $0x54] sm:$0xf]
      %v329 = vld [vmem:[%s252 + $0x58] sm:$0xf]
      %v330 = vld [vmem:[%s252 + $0x5c] sm:$0xf]
      %v331 = vld [vmem:[%s252 + $0x60] sm:$0xf]
      %v332 = vld [vmem:[%s252 + $0x64] sm:$0xf]
      %v333 = vld [vmem:[%s252 + $0x68] sm:$0xf]
      %v334 = vld [vmem:[%s252 + $0x6c] sm:$0xf]
      %v335 = vld [vmem:[%s252 + $0x70] sm:$0xf]
      %v336 = vld [vmem:[%s252 + $0x74] sm:$0xf]
      %v337 = vld [vmem:[%s252 + $0x78] sm:$0xf]
      %v338 = vld [vmem:[%s252 + $0x7c] sm:$0xf]
      %v339 = vld [vmem:[%s252 + $0x80] sm:$0xf]
      %v340 = vld [vmem:[%s252 + $0x84] sm:$0xf]
      %v341 = vld [vmem:[%s252 + $0x88] sm:$0xf]
      %v342 = vld [vmem:[%s252 + $0x8c] sm:$0xf]
      %v343 = vld [vmem:[%s252 + $0x90] sm:$0xf]
      %v344 = vld [vmem:[%s252 + $0x94] sm:$0xf]
      %v345 = vld [vmem:[%s252 + $0x98] sm:$0xf]
      %v346 = vld [vmem:[%s252 + $0x9c] sm:$0xf]
      %v347 = vld [vmem:[%s252 + $0xa0] sm:$0xf]
      %v348 = vld [vmem:[%s252 + $0xa4] sm:$0xf]
      %v349 = vld [vmem:[%s252 + $0xa8] sm:$0xf]
      %v350 = vld [vmem:[%s252 + $0xac] sm:$0xf]
      %v351 = vld [vmem:[%s252 + $0xb0] sm:$0xf]
      %v352 = vld [vmem:[%s252 + $0xb4] sm:$0xf]
      %v353 = vld [vmem:[%s252 + $0xb8] sm:$0xf]
      %v354 = vld [vmem:[%s252 + $0xbc] sm:$0xf]
      %v355 = vld [vmem:[%s252 + $0xc0] sm:$0xf]
      %v356 = vld [vmem:[%s252 + $0xc4] sm:$0xf]
      %v357 = vld [vmem:[%s252 + $0xc8] sm:$0xf]
      %v358 = vld [vmem:[%s252 + $0xcc] sm:$0xf]
      %v359 = vld [vmem:[%s252 + $0xd0] sm:$0xf]
      %v360 = vld [vmem:[%s252 + $0xd4] sm:$0xf]
      %v361 = vld [vmem:[%s252 + $0xd8] sm:$0xf]
      %v362 = vld [vmem:[%s252 + $0xdc] sm:$0xf]
      %v363 = vld [vmem:[%s252 + $0xe0] sm:$0xf]
      %v364 = vld [vmem:[%s252 + $0xe4] sm:$0xf]
      %v365 = vld [vmem:[%s252 + $0xe8] sm:$0xf]
      %v366 = vld [vmem:[%s252 + $0xec] sm:$0xf]
      %v367 = vld [vmem:[%s252 + $0xf0] sm:$0xf]
      %v368 = vld [vmem:[%s252 + $0xf4] sm:$0xf]
      %v369 = vld [vmem:[%s252 + $0xf8] sm:$0xf]
      %v370 = vld [vmem:[%s252 + $0xfc] sm:$0xf]
      %v403 = vunpack.c.l.b16 %v275
      %v404 = vunpack.c.h.b16 %v275
      %v405 = vunpack.c.l.b16 %v276
      %v406 = vunpack.c.h.b16 %v276
      %v407 = vunpack.c.l.b16 %v277
      %v408 = vunpack.c.h.b16 %v277
      %v409 = vunpack.c.l.b16 %v278
      %v410 = vunpack.c.h.b16 %v278
      %v411 = vunpack.c.l.b16 %v279
      %v412 = vunpack.c.h.b16 %v279
      %v413 = vunpack.c.l.b16 %v280
      %v414 = vunpack.c.h.b16 %v280
      %v415 = vunpack.c.l.b16 %v281
      %v416 = vunpack.c.h.b16 %v281
      %v417 = vunpack.c.l.b16 %v282
      %v418 = vunpack.c.h.b16 %v282
      %v419 = vunpack.c.l.b16 %v283
      %v420 = vunpack.c.h.b16 %v283
      %v421 = vunpack.c.l.b16 %v284
      %v422 = vunpack.c.h.b16 %v284
      %v423 = vunpack.c.l.b16 %v285
      %v424 = vunpack.c.h.b16 %v285
      %v425 = vunpack.c.l.b16 %v286
      %v426 = vunpack.c.h.b16 %v286
      %v427 = vunpack.c.l.b16 %v287
      %v428 = vunpack.c.h.b16 %v287
      %v429 = vunpack.c.l.b16 %v288
      %v430 = vunpack.c.h.b16 %v288
      %v431 = vunpack.c.l.b16 %v289
      %v432 = vunpack.c.h.b16 %v289
      %v433 = vunpack.c.l.b16 %v290
      %v434 = vunpack.c.h.b16 %v290
      %v435 = vunpack.c.l.b16 %v291
      %v436 = vunpack.c.h.b16 %v291
      %v437 = vunpack.c.l.b16 %v292
      %v438 = vunpack.c.h.b16 %v292
      %v439 = vunpack.c.l.b16 %v293
      %v440 = vunpack.c.h.b16 %v293
      %v441 = vunpack.c.l.b16 %v294
      %v442 = vunpack.c.h.b16 %v294
      %v443 = vunpack.c.l.b16 %v295
      %v444 = vunpack.c.h.b16 %v295
      %v445 = vunpack.c.l.b16 %v296
      %v446 = vunpack.c.h.b16 %v296
      %v447 = vunpack.c.l.b16 %v297
      %v448 = vunpack.c.h.b16 %v297
      %v449 = vunpack.c.l.b16 %v298
      %v450 = vunpack.c.h.b16 %v298
      %v451 = vunpack.c.l.b16 %v299
      %v452 = vunpack.c.h.b16 %v299
      %v453 = vunpack.c.l.b16 %v300
      %v454 = vunpack.c.h.b16 %v300
      %v455 = vunpack.c.l.b16 %v301
      %v456 = vunpack.c.h.b16 %v301
      %v457 = vunpack.c.l.b16 %v302
      %v458 = vunpack.c.h.b16 %v302
      %v459 = vunpack.c.l.b16 %v303
      %v460 = vunpack.c.h.b16 %v303
      %v461 = vunpack.c.l.b16 %v304
      %v462 = vunpack.c.h.b16 %v304
      %v463 = vunpack.c.l.b16 %v305
      %v464 = vunpack.c.h.b16 %v305
      %v465 = vunpack.c.l.b16 %v306
      %v466 = vunpack.c.h.b16 %v306
      %v467 = vpack.c.b16 %v407, %v403
      %v468 = vpack.c.b16 %v408, %v404
      %v469 = vpack.c.b16 %v409, %v405
      %v470 = vpack.c.b16 %v410, %v406
      %v471 = vpack.c.b16 %v415, %v411
      %v472 = vpack.c.b16 %v416, %v412
      %v473 = vpack.c.b16 %v417, %v413
      %v474 = vpack.c.b16 %v418, %v414
      %v475 = vpack.c.b16 %v423, %v419
      %v476 = vpack.c.b16 %v424, %v420
      %v477 = vpack.c.b16 %v425, %v421
      %v478 = vpack.c.b16 %v426, %v422
      %v479 = vpack.c.b16 %v431, %v427
      %v480 = vpack.c.b16 %v432, %v428
      %v481 = vpack.c.b16 %v433, %v429
      %v482 = vpack.c.b16 %v434, %v430
      %v483 = vpack.c.b16 %v439, %v435
      %v484 = vpack.c.b16 %v440, %v436
      %v485 = vpack.c.b16 %v441, %v437
      %v486 = vpack.c.b16 %v442, %v438
      %v487 = vpack.c.b16 %v447, %v443
      %v488 = vpack.c.b16 %v448, %v444
      %v489 = vpack.c.b16 %v449, %v445
      %v490 = vpack.c.b16 %v450, %v446
      %v491 = vpack.c.b16 %v455, %v451
      %v492 = vpack.c.b16 %v456, %v452
      %v493 = vpack.c.b16 %v457, %v453
      %v494 = vpack.c.b16 %v458, %v454
      %v495 = vpack.c.b16 %v463, %v459
      %v496 = vpack.c.b16 %v464, %v460
      %v497 = vpack.c.b16 %v465, %v461
      %v498 = vpack.c.b16 %v466, %v462
      %v595 = vunpack.c.l.b16 %v307
      %v596 = vunpack.c.l.b16 %v308
      %v597 = vunpack.c.l.b16 %v309
      %v598 = vunpack.c.l.b16 %v310
      %v599 = vunpack.c.l.b16 %v311
      %v600 = vunpack.c.l.b16 %v312
      %v601 = vunpack.c.l.b16 %v313
      %v602 = vunpack.c.l.b16 %v314
      %v603 = vunpack.c.l.b16 %v315
      %v604 = vunpack.c.l.b16 %v316
      %v605 = vunpack.c.l.b16 %v317
      %v606 = vunpack.c.l.b16 %v318
      %v607 = vunpack.c.l.b16 %v319
      %v608 = vunpack.c.l.b16 %v320
      %v609 = vunpack.c.l.b16 %v321
      %v610 = vunpack.c.l.b16 %v322
      %v611 = vunpack.c.l.b16 %v323
      %v612 = vunpack.c.l.b16 %v324
      %v613 = vunpack.c.l.b16 %v325
      %v614 = vunpack.c.l.b16 %v326
      %v615 = vunpack.c.l.b16 %v327
      %v616 = vunpack.c.l.b16 %v328
      %v617 = vunpack.c.l.b16 %v329
      %v618 = vunpack.c.l.b16 %v330
      %v619 = vunpack.c.l.b16 %v331
      %v620 = vunpack.c.l.b16 %v332
      %v621 = vunpack.c.l.b16 %v333
      %v622 = vunpack.c.l.b16 %v334
      %v623 = vunpack.c.l.b16 %v335
      %v624 = vunpack.c.l.b16 %v336
      %v625 = vunpack.c.l.b16 %v337
      %v626 = vunpack.c.l.b16 %v338
      %v627 = vunpack.c.l.b16 %v339
      %v628 = vunpack.c.l.b16 %v340
      %v629 = vunpack.c.l.b16 %v341
      %v630 = vunpack.c.l.b16 %v342
      %v631 = vunpack.c.l.b16 %v343
      %v632 = vunpack.c.l.b16 %v344
      %v633 = vunpack.c.l.b16 %v345
      %v634 = vunpack.c.l.b16 %v346
      %v635 = vunpack.c.l.b16 %v347
      %v636 = vunpack.c.l.b16 %v348
      %v637 = vunpack.c.l.b16 %v349
      %v638 = vunpack.c.l.b16 %v350
      %v639 = vunpack.c.l.b16 %v351
      %v640 = vunpack.c.l.b16 %v352
      %v641 = vunpack.c.l.b16 %v353
      %v642 = vunpack.c.l.b16 %v354
      %v643 = vunpack.c.l.b16 %v355
      %v644 = vunpack.c.l.b16 %v356
      %v645 = vunpack.c.l.b16 %v357
      %v646 = vunpack.c.l.b16 %v358
      %v647 = vunpack.c.l.b16 %v359
      %v648 = vunpack.c.l.b16 %v360
      %v649 = vunpack.c.l.b16 %v361
      %v650 = vunpack.c.l.b16 %v362
      %v651 = vunpack.c.l.b16 %v363
      %v652 = vunpack.c.l.b16 %v364
      %v653 = vunpack.c.l.b16 %v365
      %v654 = vunpack.c.l.b16 %v366
      %v655 = vunpack.c.l.b16 %v367
      %v656 = vunpack.c.l.b16 %v368
      %v657 = vunpack.c.l.b16 %v369
      %v658 = vunpack.c.l.b16 %v370
      %v659 = vpack.c.b16 %v596, %v595
      %v660 = vpack.c.b16 %v598, %v597
      %v661 = vpack.c.b16 %v600, %v599
      %v662 = vpack.c.b16 %v602, %v601
      %v663 = vpack.c.b16 %v604, %v603
      %v664 = vpack.c.b16 %v606, %v605
      %v665 = vpack.c.b16 %v608, %v607
      %v666 = vpack.c.b16 %v610, %v609
      %v667 = vpack.c.b16 %v612, %v611
      %v668 = vpack.c.b16 %v614, %v613
      %v669 = vpack.c.b16 %v616, %v615
      %v670 = vpack.c.b16 %v618, %v617
      %v671 = vpack.c.b16 %v620, %v619
      %v672 = vpack.c.b16 %v622, %v621
      %v673 = vpack.c.b16 %v624, %v623
      %v674 = vpack.c.b16 %v626, %v625
      %v675 = vpack.c.b16 %v628, %v627
      %v676 = vpack.c.b16 %v630, %v629
      %v677 = vpack.c.b16 %v632, %v631
      %v678 = vpack.c.b16 %v634, %v633
      %v679 = vpack.c.b16 %v636, %v635
      %v680 = vpack.c.b16 %v638, %v637
      %v681 = vpack.c.b16 %v640, %v639
      %v682 = vpack.c.b16 %v642, %v641
      %v683 = vpack.c.b16 %v644, %v643
      %v684 = vpack.c.b16 %v646, %v645
      %v685 = vpack.c.b16 %v648, %v647
      %v686 = vpack.c.b16 %v650, %v649
      %v687 = vpack.c.b16 %v652, %v651
      %v688 = vpack.c.b16 %v654, %v653
      %v689 = vpack.c.b16 %v656, %v655
      %v690 = vpack.c.b16 %v658, %v657
      %723 = vmatprep.subr.bf16.mxu0 0
      %724 = vmatpush1.bf16.msra.mxu0 %v666
      %725 = vmatprep.subr.bf16.mxu0 0
      %726 = vmatpush1.bf16.msra.mxu0 %v665
      %727 = vmatprep.subr.bf16.mxu0 0
      %728 = vmatpush1.bf16.msra.mxu0 %v664
      %729 = vmatprep.subr.bf16.mxu0 0
      %730 = vmatpush1.bf16.msra.mxu0 %v663
      %731 = vmatprep.subr.bf16.mxu0 0
      %732 = vmatpush1.bf16.msra.mxu0 %v662
      %733 = vmatprep.subr.bf16.mxu0 0
      %734 = vmatpush1.bf16.msra.mxu0 %v661
      %735 = vmatprep.subr.bf16.mxu0 0
      %736 = vmatpush1.bf16.msra.mxu0 %v660
      %737 = vmatprep.subr.bf16.mxu0 0
      %738 = vmatpush1.bf16.msra.mxu0 %v659
      %739 = vmatprep.subr.bf16.mxu0 0
      %740 = vmatpush2.bf16.msra.mxu0 %v674
      %741 = vmatprep.subr.bf16.mxu0 0
      %742 = vmatpush2.bf16.msra.mxu0 %v673
      %743 = vmatprep.subr.bf16.mxu0 0
      %744 = vmatpush2.bf16.msra.mxu0 %v672
      %745 = vmatprep.subr.bf16.mxu0 0
      %746 = vmatpush2.bf16.msra.mxu0 %v671
      %747 = vmatprep.subr.bf16.mxu0 0
      %748 = vmatpush2.bf16.msra.mxu0 %v670
      %749 = vmatprep.subr.bf16.mxu0 0
      %750 = vmatpush2.bf16.msra.mxu0 %v669
      %751 = vmatprep.subr.bf16.mxu0 0
      %752 = vmatpush2.bf16.msra.mxu0 %v668
      %753 = vmatprep.subr.bf16.mxu0 0
      %754 = vmatpush2.bf16.msra.mxu0 %v667
      %755 = vmatprep.mubr.bf16.mxu0 %v468
      %756 = vmatmul.mubr.bf16.gmra.mxu0 %v467
      %v757 = vpop.f32.mrf.mxu0
      %v758 = vadd.f32 0.0, %v757
      %v759 = vpop.f32.mrf.mxu0
      %v760 = vpop.f32.mrf.mxu0
      %v761 = vadd.f32 0.0, %v760
      %v762 = vpop.f32.mrf.mxu0
      %763 = vmatprep.mubr.bf16.mxu0 %v472
      %764 = vmatmul.mubr.bf16.gmra.mxu0 %v471
      %v765 = vpop.f32.mrf.mxu0
      %v766 = vadd.f32 0.0, %v765
      %v767 = vpop.f32.mrf.mxu0
      %v768 = vpop.f32.mrf.mxu0
      %v769 = vadd.f32 0.0, %v768
      %v770 = vpop.f32.mrf.mxu0
      %771 = vmatprep.mubr.bf16.mxu0 %v476
      %772 = vmatmul.mubr.bf16.gmra.mxu0 %v475
      %v773 = vpop.f32.mrf.mxu0
      %v774 = vadd.f32 0.0, %v773
      %v775 = vpop.f32.mrf.mxu0
      %v776 = vpop.f32.mrf.mxu0
      %v777 = vadd.f32 0.0, %v776
      %v778 = vpop.f32.mrf.mxu0
      %779 = vmatprep.mubr.bf16.mxu0 %v480
      %780 = vmatmul.mubr.bf16.gmra.mxu0 %v479
      %v781 = vpop.f32.mrf.mxu0
      %v782 = vadd.f32 0.0, %v781
      %v783 = vpop.f32.mrf.mxu0
      %v784 = vpop.f32.mrf.mxu0
      %v785 = vadd.f32 0.0, %v784
      %v786 = vpop.f32.mrf.mxu0
      %787 = vmatprep.mubr.bf16.mxu0 %v484
      %788 = vmatmul.mubr.bf16.gmra.mxu0 %v483
      %v789 = vpop.f32.mrf.mxu0
      %v790 = vadd.f32 0.0, %v789
      %v791 = vpop.f32.mrf.mxu0
      %v792 = vpop.f32.mrf.mxu0
      %v793 = vadd.f32 0.0, %v792
      %v794 = vpop.f32.mrf.mxu0
      %795 = vmatprep.mubr.bf16.mxu0 %v488
      %796 = vmatmul.mubr.bf16.gmra.mxu0 %v487
      %v797 = vpop.f32.mrf.mxu0
      %v798 = vadd.f32 0.0, %v797
      %v799 = vpop.f32.mrf.mxu0
      %v800 = vpop.f32.mrf.mxu0
      %v801 = vadd.f32 0.0, %v800
      %v802 = vpop.f32.mrf.mxu0
      %803 = vmatprep.mubr.bf16.mxu0 %v492
      %804 = vmatmul.mubr.bf16.gmra.mxu0 %v491
      %v805 = vpop.f32.mrf.mxu0
      %v806 = vadd.f32 0.0, %v805
      %v807 = vpop.f32.mrf.mxu0
      %v808 = vpop.f32.mrf.mxu0
      %v809 = vadd.f32 0.0, %v808
      %v810 = vpop.f32.mrf.mxu0
      %811 = vmatprep.mubr.bf16.mxu0 %v496
      %812 = vmatmul.mubr.bf16.gmra.mxu0 %v495
      %v813 = vpop.f32.mrf.mxu0
      %v814 = vadd.f32 0.0, %v813
      %v815 = vpop.f32.mrf.mxu0
      %v816 = vpop.f32.mrf.mxu0
      %v817 = vadd.f32 0.0, %v816
      %v818 = vpop.f32.mrf.mxu0
      %819 = vdwg.mxu0
      %820 = vmatprep.subr.bf16.mxu0 0
      %821 = vmatpush1.bf16.msra.mxu0 %v682
      %822 = vmatprep.subr.bf16.mxu0 0
      %823 = vmatpush1.bf16.msra.mxu0 %v681
      %824 = vmatprep.subr.bf16.mxu0 0
      %825 = vmatpush1.bf16.msra.mxu0 %v680
      %826 = vmatprep.subr.bf16.mxu0 0
      %827 = vmatpush1.bf16.msra.mxu0 %v679
      %828 = vmatprep.subr.bf16.mxu0 0
      %829 = vmatpush1.bf16.msra.mxu0 %v678
      %830 = vmatprep.subr.bf16.mxu0 0
      %831 = vmatpush1.bf16.msra.mxu0 %v677
      %832 = vmatprep.subr.bf16.mxu0 0
      %833 = vmatpush1.bf16.msra.mxu0 %v676
      %834 = vmatprep.subr.bf16.mxu0 0
      %835 = vmatpush1.bf16.msra.mxu0 %v675
      %836 = vmatprep.subr.bf16.mxu0 0
      %837 = vmatpush2.bf16.msra.mxu0 %v690
      %838 = vmatprep.subr.bf16.mxu0 0
      %839 = vmatpush2.bf16.msra.mxu0 %v689
      %840 = vmatprep.subr.bf16.mxu0 0
      %841 = vmatpush2.bf16.msra.mxu0 %v688
      %842 = vmatprep.subr.bf16.mxu0 0
      %843 = vmatpush2.bf16.msra.mxu0 %v687
      %844 = vmatprep.subr.bf16.mxu0 0
      %845 = vmatpush2.bf16.msra.mxu0 %v686
      %846 = vmatprep.subr.bf16.mxu0 0
      %847 = vmatpush2.bf16.msra.mxu0 %v685
      %848 = vmatprep.subr.bf16.mxu0 0
      %849 = vmatpush2.bf16.msra.mxu0 %v684
      %850 = vmatprep.subr.bf16.mxu0 0
      %851 = vmatpush2.bf16.msra.mxu0 %v683
      %852 = vmatprep.mubr.bf16.mxu0 %v470
      %853 = vmatmul.mubr.bf16.gmra.mxu0 %v469
      %v854 = vpop.f32.mrf.mxu0
      %v855 = vadd.f32 %v758, %v854
      %v856 = vpop.f32.mrf.mxu0
      %v857 = vpop.f32.mrf.mxu0
      %v858 = vadd.f32 %v761, %v857
      %v859 = vpop.f32.mrf.mxu0
      %860 = vmatprep.mubr.bf16.mxu0 %v474
      %861 = vmatmul.mubr.bf16.gmra.mxu0 %v473
      %v862 = vpop.f32.mrf.mxu0
      %v863 = vadd.f32 %v766, %v862
      %v864 = vpop.f32.mrf.mxu0
      %v865 = vpop.f32.mrf.mxu0
      %v866 = vadd.f32 %v769, %v865
      %v867 = vpop.f32.mrf.mxu0
      %868 = vmatprep.mubr.bf16.mxu0 %v478
      %869 = vmatmul.mubr.bf16.gmra.mxu0 %v477
      %v870 = vpop.f32.mrf.mxu0
      %v871 = vadd.f32 %v774, %v870
      %v872 = vpop.f32.mrf.mxu0
      %v873 = vpop.f32.mrf.mxu0
      %v874 = vadd.f32 %v777, %v873
      %v875 = vpop.f32.mrf.mxu0
      %876 = vmatprep.mubr.bf16.mxu0 %v482
      %877 = vmatmul.mubr.bf16.gmra.mxu0 %v481
      %v878 = vpop.f32.mrf.mxu0
      %v879 = vadd.f32 %v782, %v878
      %v880 = vpop.f32.mrf.mxu0
      %v881 = vpop.f32.mrf.mxu0
      %v882 = vadd.f32 %v785, %v881
      %v883 = vpop.f32.mrf.mxu0
      %884 = vmatprep.mubr.bf16.mxu0 %v486
      %885 = vmatmul.mubr.bf16.gmra.mxu0 %v485
      %v886 = vpop.f32.mrf.mxu0
      %v887 = vadd.f32 %v790, %v886
      %v888 = vpop.f32.mrf.mxu0
      %v889 = vpop.f32.mrf.mxu0
      %v890 = vadd.f32 %v793, %v889
      %v891 = vpop.f32.mrf.mxu0
      %892 = vmatprep.mubr.bf16.mxu0 %v490
      %893 = vmatmul.mubr.bf16.gmra.mxu0 %v489
      %v894 = vpop.f32.mrf.mxu0
      %v895 = vadd.f32 %v798, %v894
      %v896 = vpop.f32.mrf.mxu0
      %v897 = vpop.f32.mrf.mxu0
      %v898 = vadd.f32 %v801, %v897
      %v899 = vpop.f32.mrf.mxu0
      %900 = vmatprep.mubr.bf16.mxu0 %v494
      %901 = vmatmul.mubr.bf16.gmra.mxu0 %v493
      %v902 = vpop.f32.mrf.mxu0
      %v903 = vadd.f32 %v806, %v902
      %v904 = vpop.f32.mrf.mxu0
      %v905 = vpop.f32.mrf.mxu0
      %v906 = vadd.f32 %v809, %v905
      %v907 = vpop.f32.mrf.mxu0
      %908 = vmatprep.mubr.bf16.mxu0 %v498
      %909 = vmatmul.mubr.bf16.gmra.mxu0 %v497
      %v910 = vpop.f32.mrf.mxu0
      %v911 = vadd.f32 %v814, %v910
      %v912 = vpop.f32.mrf.mxu0
      %v913 = vpop.f32.mrf.mxu0
      %v914 = vadd.f32 %v817, %v913
      %v915 = vpop.f32.mrf.mxu0
      %916 = vdwg.mxu0
      %v917 = vpack.c.bf16 %v858, %v855
      %v918 = vpack.c.bf16 %v866, %v863
      %v919 = vpack.c.bf16 %v874, %v871
      %v920 = vpack.c.bf16 %v882, %v879
      %v921 = vpack.c.bf16 %v890, %v887
      %v922 = vpack.c.bf16 %v898, %v895
      %v923 = vpack.c.bf16 %v906, %v903
      %v924 = vpack.c.bf16 %v914, %v911
      %v933 = vunpack.c.l.b16 %v917
      %v934 = vunpack.c.h.b16 %v917
      %v935 = vunpack.c.l.b16 %v918
      %v936 = vunpack.c.h.b16 %v918
      %v937 = vunpack.c.l.b16 %v919
      %v938 = vunpack.c.h.b16 %v919
      %v939 = vunpack.c.l.b16 %v920
      %v940 = vunpack.c.h.b16 %v920
      %v941 = vunpack.c.l.b16 %v921
      %v942 = vunpack.c.h.b16 %v921
      %v943 = vunpack.c.l.b16 %v922
      %v944 = vunpack.c.h.b16 %v922
      %v945 = vunpack.c.l.b16 %v923
      %v946 = vunpack.c.h.b16 %v923
      %v947 = vunpack.c.l.b16 %v924
      %v948 = vunpack.c.h.b16 %v924
      %v949 = vpack.c.b16 %v933, %v933
      %v950 = vpack.c.b16 %v934, %v934
      %v951 = vpack.c.b16 %v935, %v935
      %v952 = vpack.c.b16 %v936, %v936
      %v953 = vpack.c.b16 %v937, %v937
      %v954 = vpack.c.b16 %v938, %v938
      %v955 = vpack.c.b16 %v939, %v939
      %v956 = vpack.c.b16 %v940, %v940
      %v957 = vpack.c.b16 %v941, %v941
      %v958 = vpack.c.b16 %v942, %v942
      %v959 = vpack.c.b16 %v943, %v943
      %v960 = vpack.c.b16 %v944, %v944
      %v961 = vpack.c.b16 %v945, %v945
      %v962 = vpack.c.b16 %v946, %v946
      %v963 = vpack.c.b16 %v947, %v947
      %v964 = vpack.c.b16 %v948, %v948
      %981 = vst [vmem:[%s260] sm:$0xf] %v949
      %982 = vst [vmem:[%s260 + $0x4] sm:$0xf] %v950
      %983 = vst [vmem:[%s260 + $0x8] sm:$0xf] %v951
      %984 = vst [vmem:[%s260 + $0xc] sm:$0xf] %v952
      %985 = vst [vmem:[%s260 + $0x10] sm:$0xf] %v953
      %986 = vst [vmem:[%s260 + $0x14] sm:$0xf] %v954
      %987 = vst [vmem:[%s260 + $0x18] sm:$0xf] %v955
      %988 = vst [vmem:[%s260 + $0x1c] sm:$0xf] %v956
      %989 = vst [vmem:[%s260 + $0x20] sm:$0xf] %v957
      %990 = vst [vmem:[%s260 + $0x24] sm:$0xf] %v958
      %991 = vst [vmem:[%s260 + $0x28] sm:$0xf] %v959
      %992 = vst [vmem:[%s260 + $0x2c] sm:$0xf] %v960
      %993 = vst [vmem:[%s260 + $0x30] sm:$0xf] %v961
      %994 = vst [vmem:[%s260 + $0x34] sm:$0xf] %v962
      %995 = vst [vmem:[%s260 + $0x38] sm:$0xf] %v963
      %996 = vst [vmem:[%s260 + $0x3c] sm:$0xf] %v964
      %v997 = vadd.f32 %v855, %v858
      %v998 = vadd.f32 %v997, %v863
      %v999 = vadd.f32 %v998, %v866
      %v1000 = vadd.f32 %v999, %v871
      %v1001 = vadd.f32 %v1000, %v874
      %v1002 = vadd.f32 %v1001, %v879
      %v1003 = vadd.f32 %v1002, %v882
      %v1004 = vadd.f32 %v1003, %v887
      %v1005 = vadd.f32 %v1004, %v890
      %v1006 = vadd.f32 %v1005, %v895
      %v1007 = vadd.f32 %v1006, %v898
      %v1008 = vadd.f32 %v1007, %v903
      %v1009 = vadd.f32 %v1008, %v906
      %v1010 = vadd.f32 %v1009, %v911
      %v1011 = vadd.f32 %v1010, %v914
      %v1012 = vrot.slane %v1011, 4
      %v1013 = vadd.f32 %v1011, %v1012
      %v1014 = vrot.slane %v1013, 2
      %v1015 = vadd.f32 %v1013, %v1014
      %v1016 = vrot.slane %v1015, 1
      %v1017 = vadd.f32 %v1015, %v1016
      %1018 = vst [vmem:[%s267] sm:$0x1] %v1017
      %v1019 = vmul.f32 %v855, %v855
      %v1020 = vmul.f32 %v858, %v858
      %v1021 = vmul.f32 %v863, %v863
      %v1022 = vmul.f32 %v866, %v866
      %v1023 = vmul.f32 %v871, %v871
      %v1024 = vmul.f32 %v874, %v874
      %v1025 = vmul.f32 %v879, %v879
      %v1026 = vmul.f32 %v882, %v882
      %v1027 = vmul.f32 %v887, %v887
      %v1028 = vmul.f32 %v890, %v890
      %v1029 = vmul.f32 %v895, %v895
      %v1030 = vmul.f32 %v898, %v898
      %v1031 = vmul.f32 %v903, %v903
      %v1032 = vmul.f32 %v906, %v906
      %v1033 = vmul.f32 %v911, %v911
      %v1034 = vmul.f32 %v914, %v914
      %v1035 = vadd.f32 %v1019, %v1020
      %v1036 = vadd.f32 %v1035, %v1021
      %v1037 = vadd.f32 %v1036, %v1022
      %v1038 = vadd.f32 %v1037, %v1023
      %v1039 = vadd.f32 %v1038, %v1024
      %v1040 = vadd.f32 %v1039, %v1025
      %v1041 = vadd.f32 %v1040, %v1026
      %v1042 = vadd.f32 %v1041, %v1027
      %v1043 = vadd.f32 %v1042, %v1028
      %v1044 = vadd.f32 %v1043, %v1029
      %v1045 = vadd.f32 %v1044, %v1030
      %v1046 = vadd.f32 %v1045, %v1031
      %v1047 = vadd.f32 %v1046, %v1032
      %v1048 = vadd.f32 %v1047, %v1033
      %v1049 = vadd.f32 %v1048, %v1034
      %v1050 = vrot.slane %v1049, 4
      %v1051 = vadd.f32 %v1049, %v1050
      %v1052 = vrot.slane %v1051, 2
      %v1053 = vadd.f32 %v1051, %v1052
      %v1054 = vrot.slane %v1053, 1
      %v1055 = vadd.f32 %v1053, %v1054
      %1056 = vst [vmem:[%s273] sm:$0x1] %v1055
      %s1057 = smul.u32 16, %s20
      %p1058 = scmp.lt.s32.totalorder %s1057, 31
      %s1059 = scalar_select %p1058, %s1057, 31
      %p1060 = scmp.lt.s32.totalorder %s21, 0
      %s1061 = scalar_select %p1060, %s21, 0
      %s1062 = sadd.s32 %s1061, %s1059
      %s1063 = smul.addr %s1062, 4
      %s1064 = scalar_lea.vmem %s2, %s1063
      %p1065 = scmp.lt.s32.totalorder %s20, 1
      %s1066 = scalar_select %p1065, %s20, 1
      %p1067 = scmp.lt.s32.totalorder %s21, 0
      %s1068 = scalar_select %p1067, %s21, 0
      %s1069 = sadd.s32 %s1068, %s1066
      %s1070 = scalar_lea.vmem %s3, %s1069
      %p1071 = scmp.lt.s32.totalorder %s20, 1
      %s1072 = scalar_select %p1071, %s20, 1
      %p1073 = scmp.lt.s32.totalorder %s21, 0
      %s1074 = scalar_select %p1073, %s21, 0
      %s1075 = sadd.s32 %s1074, %s1072
      %s1076 = scalar_lea.vmem %s4, %s1075
      // Predicated region
      $region29: #{_encoder_forward.6} parent=27 // pred_check
        %p1077 = pneg %p100
      $region30: #{_encoder_forward.6} parent=27 // pred_check_branch
        %1079 = sbr.rel (%p1077) target = $region32
      $region31: #{_encoder_forward.6} parent=27 // pred_region
        %s1080 = smul.u32 16, %s20
      $region32: #{_encoder_forward.6} parent=27 // pred_fallthru
        _
      // Predicated region
      $region33: #{_encoder_forward.6} parent=27 // pred_check
        %p1081 = pneg %p128
      $region34: #{_encoder_forward.6} parent=27 // pred_check_branch
        %1083 = sbr.rel (%p1081) target = $region36
      $region35: #{_encoder_forward.6} parent=27 // pred_region
        _
      $region36: #{_encoder_forward.6} parent=27 // pred_fallthru
        _
      // Predicated region
      $region37: #{_encoder_forward.6} parent=27 // pred_check
        %p1084 = pneg %p156
      $region38: #{_encoder_forward.6} parent=27 // pred_check_branch
        %1086 = sbr.rel (%p1084) target = $region40
      $region39: #{_encoder_forward.6} parent=27 // pred_region
        _
      $region40: #{_encoder_forward.6} parent=27 // pred_fallthru
        _
    $region28: #{_encoder_forward.6} parent=5 // pred_fallthru
      _
    %p1087 = scmp.le.s32.totalorder 2, %s11
    // Predicated region
    $region41: #{_encoder_forward.6} parent=5 // pred_check
      %p1088 = pneg %p1087
    $region42: #{_encoder_forward.6} parent=5 // pred_check_branch
      %1090 = sbr.rel (%p1088) target = $region44
    $region43: #{_encoder_forward.6} parent=5 // pred_region
      %s1091 = ssub.s32 %s11, 2
      // Predicated region
      $region45: #{_encoder_forward.6} parent=43 // pred_check
        %p1092 = pneg %p106
      $region46: #{_encoder_forward.6} parent=43 // pred_check_branch
        %1094 = sbr.rel (%p1092) target = $region48
      $region47: #{_encoder_forward.6} parent=43 // pred_region
        %s1095 = smul.u32 16, %s22
        %p1096 = scmp.lt.s32.totalorder %s1095, 31
        %s1097 = scalar_select %p1096, %s1095, 31
        %p1098 = scmp.lt.s32.totalorder %s23, 0
        %s1099 = scalar_select %p1098, %s23, 0
        %s1100 = sadd.s32 %s1099, %s1097
        %s1101 = smul.addr %s1100, 4
        %s1102 = scalar_lea.vmem %s2, %s1101
      $region48: #{_encoder_forward.6} parent=43 // pred_fallthru
        _
      // Predicated region
      $region49: #{_encoder_forward.6} parent=43 // pred_check
        %p1103 = pneg %p134
      $region50: #{_encoder_forward.6} parent=43 // pred_check_branch
        %1105 = sbr.rel (%p1103) target = $region52
      $region51: #{_encoder_forward.6} parent=43 // pred_region
        %p1106 = scmp.lt.s32.totalorder %s22, 1
        %s1107 = scalar_select %p1106, %s22, 1
        %p1108 = scmp.lt.s32.totalorder %s23, 0
        %s1109 = scalar_select %p1108, %s23, 0
        %s1110 = sadd.s32 %s1109, %s1107
        %s1111 = scalar_lea.vmem %s3, %s1110
      $region52: #{_encoder_forward.6} parent=43 // pred_fallthru
        _
      // Predicated region
      $region53: #{_encoder_forward.6} parent=43 // pred_check
        %p1112 = pneg %p162
      $region54: #{_encoder_forward.6} parent=43 // pred_check_branch
        %1114 = sbr.rel (%p1112) target = $region56
      $region55: #{_encoder_forward.6} parent=43 // pred_region
        %p1115 = scmp.lt.s32.totalorder %s22, 1
        %s1116 = scalar_select %p1115, %s22, 1
        %p1117 = scmp.lt.s32.totalorder %s23, 0
        %s1118 = scalar_select %p1117, %s23, 0
        %s1119 = sadd.s32 %s1118, %s1116
        %s1120 = scalar_lea.vmem %s4, %s1119
      $region56: #{_encoder_forward.6} parent=43 // pred_fallthru
        _
    $region44: #{_encoder_forward.6} parent=5 // pred_fallthru
      _
  $region6: #{_encoder_forward.6} parent=0 // loop_footer
    %s15 = sadd.s32 1, %s11
  $region7: #{_encoder_forward.6} parent=0 // loop_footer_branch
    %10 = sbr.rel target = $region3
  $region8: #{_encoder_forward.6} parent=0 // loop_exit
    _

// kernel: _encoder_forward.7
$region0: #{_encoder_forward.7}
  #allocation0 [shape = 'u32[]', space=smem, size = 0x4, offset = 0x4, fixed_abs, tag = 'smem constant byte address 0x4 - core index']
  #allocation1 [shape = 'u32[144,128]{1,0:T(1,128)}', space=vmem, size = 0x12000, scoped, tag = 'internal scratch']
  %s0 = inlined_call_operand.vmem [shape: bf16[64,512], index: 0, kind: input, shape index: {}]
  %s1 = inlined_call_operand.vmem [shape: bf16[512,128], index: 1, kind: input, shape index: {}]
  %s2 = inlined_call_operand.vmem [shape: bf16[64,128], index: 2, kind: output, shape index: {0}]
  %s3 = inlined_call_operand.vmem [shape: f32[1,1,1,128], index: 3, kind: output, shape index: {1}]
  %s4 = inlined_call_operand.vmem [shape: f32[1,1,1,128], index: 4, kind: output, shape index: {2}]
  %5 = xla_tuple %s2, %s3, %s4
  %s6 = sld [smem:[#allocation0]]
  $region34: #{_encoder_forward.7} parent=0
    _
  %s8 = ssub.s32 1, %s6
  %s9 = scalar_select 0, %s8, %s6
  // Predicated region
  $region2: #{_encoder_forward.7} parent=0 // pred_check
    _
  $region3: #{_encoder_forward.7} parent=0 // pred_check_branch
    %11 = sbr.rel (0) target = $region5
  $region4: #{_encoder_forward.7} parent=0 // pred_region
    _
  $region5: #{_encoder_forward.7} parent=0 // pred_fallthru
    _
  // Predicated region
  $region6: #{_encoder_forward.7} parent=0 // pred_check
    _
  $region7: #{_encoder_forward.7} parent=0 // pred_check_branch
    %13 = sbr.rel (0) target = $region9
  $region8: #{_encoder_forward.7} parent=0 // pred_region
    _
  $region9: #{_encoder_forward.7} parent=0 // pred_fallthru
    _
  %v15 = vld [vmem:[%s0] sm:$0xff]
  %v16 = vld [vmem:[%s0 + $0x8] sm:$0xff]
  %v17 = vld [vmem:[%s0 + $0x10] sm:$0xff]
  %v18 = vld [vmem:[%s0 + $0x18] sm:$0xff]
  %v19 = vld [vmem:[%s0 + $0x20] sm:$0xff]
  %v20 = vld [vmem:[%s0 + $0x28] sm:$0xff]
  %v21 = vld [vmem:[%s0 + $0x30] sm:$0xff]
  %v22 = vld [vmem:[%s0 + $0x38] sm:$0xff]
  %v23 = vld [vmem:[%s0 + $0x40] sm:$0xff]
  %v24 = vld [vmem:[%s0 + $0x48] sm:$0xff]
  %v25 = vld [vmem:[%s0 + $0x50] sm:$0xff]
  %v26 = vld [vmem:[%s0 + $0x58] sm:$0xff]
  %v27 = vld [vmem:[%s0 + $0x60] sm:$0xff]
  %v28 = vld [vmem:[%s0 + $0x68] sm:$0xff]
  %v29 = vld [vmem:[%s0 + $0x70] sm:$0xff]
  %v30 = vld [vmem:[%s0 + $0x78] sm:$0xff]
  %v31 = vld [vmem:[%s1] sm:$0xf]
  %v32 = vld [vmem:[%s1 + $0x4] sm:$0xf]
  %v33 = vld [vmem:[%s1 + $0x8] sm:$0xf]
  %v34 = vld [vmem:[%s1 + $0xc] sm:$0xf]
  %v35 = vld [vmem:[%s1 + $0x10] sm:$0xf]
  %v36 = vld [vmem:[%s1 + $0x14] sm:$0xf]
  %v37 = vld [vmem:[%s1 + $0x18] sm:$0xf]
  %v38 = vld [vmem:[%s1 + $0x1c] sm:$0xf]
  %v39 = vld [vmem:[%s1 + $0x20] sm:$0xf]
  %v40 = vld [vmem:[%s1 + $0x24] sm:$0xf]
  %v41 = vld [vmem:[%s1 + $0x28] sm:$0xf]
  %v42 = vld [vmem:[%s1 + $0x2c] sm:$0xf]
  %v43 = vld [vmem:[%s1 + $0x30] sm:$0xf]
  %v44 = vld [vmem:[%s1 + $0x34] sm:$0xf]
  %v45 = vld [vmem:[%s1 + $0x38] sm:$0xf]
  %v46 = vld [vmem:[%s1 + $0x3c] sm:$0xf]
  %v47 = vld [vmem:[%s1 + $0x40] sm:$0xf]
  %v48 = vld [vmem:[%s1 + $0x44] sm:$0xf]
  %v49 = vld [vmem:[%s1 + $0x48] sm:$0xf]
  %v50 = vld [vmem:[%s1 + $0x4c] sm:$0xf]
  %v51 = vld [vmem:[%s1 + $0x50] sm:$0xf]
  %v52 = vld [vmem:[%s1 + $0x54] sm:$0xf]
  %v53 = vld [vmem:[%s1 + $0x58] sm:$0xf]
  %v54 = vld [vmem:[%s1 + $0x5c] sm:$0xf]
  %v55 = vld [vmem:[%s1 + $0x60] sm:$0xf]
  %v56 = vld [vmem:[%s1 + $0x64] sm:$0xf]
  %v57 = vld [vmem:[%s1 + $0x68] sm:$0xf]
  %v58 = vld [vmem:[%s1 + $0x6c] sm:$0xf]
  %v59 = vld [vmem:[%s1 + $0x70] sm:$0xf]
  %v60 = vld [vmem:[%s1 + $0x74] sm:$0xf]
  %v61 = vld [vmem:[%s1 + $0x78] sm:$0xf]
  %v62 = vld [vmem:[%s1 + $0x7c] sm:$0xf]
  %v63 = vld [vmem:[%s1 + $0x80] sm:$0xf]
  %v64 = vld [vmem:[%s1 + $0x84] sm:$0xf]
  %v65 = vld [vmem:[%s1 + $0x88] sm:$0xf]
  %v66 = vld [vmem:[%s1 + $0x8c] sm:$0xf]
  %v67 = vld [vmem:[%s1 + $0x90] sm:$0xf]
  %v68 = vld [vmem:[%s1 + $0x94] sm:$0xf]
  %v69 = vld [vmem:[%s1 + $0x98] sm:$0xf]
  %v70 = vld [vmem:[%s1 + $0x9c] sm:$0xf]
  %v71 = vld [vmem:[%s1 + $0xa0] sm:$0xf]
  %v72 = vld [vmem:[%s1 + $0xa4] sm:$0xf]
  %v73 = vld [vmem:[%s1 + $0xa8] sm:$0xf]
  %v74 = vld [vmem:[%s1 + $0xac] sm:$0xf]
  %v75 = vld [vmem:[%s1 + $0xb0] sm:$0xf]
  %v76 = vld [vmem:[%s1 + $0xb4] sm:$0xf]
  %v77 = vld [vmem:[%s1 + $0xb8] sm:$0xf]
  %v78 = vld [vmem:[%s1 + $0xbc] sm:$0xf]
  %v79 = vld [vmem:[%s1 + $0xc0] sm:$0xf]
  %v80 = vld [vmem:[%s1 + $0xc4] sm:$0xf]
  %v81 = vld [vmem:[%s1 + $0xc8] sm:$0xf]
  %v82 = vld [vmem:[%s1 + $0xcc] sm:$0xf]
  %v83 = vld [vmem:[%s1 + $0xd0] sm:$0xf]
  %v84 = vld [vmem:[%s1 + $0xd4] sm:$0xf]
  %v85 = vld [vmem:[%s1 + $0xd8] sm:$0xf]
  %v86 = vld [vmem:[%s1 + $0xdc] sm:$0xf]
  %v87 = vld [vmem:[%s1 + $0xe0] sm:$0xf]
  %v88 = vld [vmem:[%s1 + $0xe4] sm:$0xf]
  %v89 = vld [vmem:[%s1 + $0xe8] sm:$0xf]
  %v90 = vld [vmem:[%s1 + $0xec] sm:$0xf]
  %v91 = vld [vmem:[%s1 + $0xf0] sm:$0xf]
  %v92 = vld [vmem:[%s1 + $0xf4] sm:$0xf]
  %v93 = vld [vmem:[%s1 + $0xf8] sm:$0xf]
  %v94 = vld [vmem:[%s1 + $0xfc] sm:$0xf]
  %v111 = vunpack.c.l.b16 %v15
  %v112 = vunpack.c.h.b16 %v15
  %v113 = vunpack.c.l.b16 %v16
  %v114 = vunpack.c.h.b16 %v16
  %v115 = vunpack.c.l.b16 %v17
  %v116 = vunpack.c.h.b16 %v17
  %v117 = vunpack.c.l.b16 %v18
  %v118 = vunpack.c.h.b16 %v18
  %v119 = vunpack.c.l.b16 %v19
  %v120 = vunpack.c.h.b16 %v19
  %v121 = vunpack.c.l.b16 %v20
  %v122 = vunpack.c.h.b16 %v20
  %v123 = vunpack.c.l.b16 %v21
  %v124 = vunpack.c.h.b16 %v21
  %v125 = vunpack.c.l.b16 %v22
  %v126 = vunpack.c.h.b16 %v22
  %v127 = vunpack.c.l.b16 %v23
  %v128 = vunpack.c.h.b16 %v23
  %v129 = vunpack.c.l.b16 %v24
  %v130 = vunpack.c.h.b16 %v24
  %v131 = vunpack.c.l.b16 %v25
  %v132 = vunpack.c.h.b16 %v25
  %v133 = vunpack.c.l.b16 %v26
  %v134 = vunpack.c.h.b16 %v26
  %v135 = vunpack.c.l.b16 %v27
  %v136 = vunpack.c.h.b16 %v27
  %v137 = vunpack.c.l.b16 %v28
  %v138 = vunpack.c.h.b16 %v28
  %v139 = vunpack.c.l.b16 %v29
  %v140 = vunpack.c.h.b16 %v29
  %v141 = vunpack.c.l.b16 %v30
  %v142 = vunpack.c.h.b16 %v30
  %v143 = vpack.c.b16 %v115, %v111
  %v144 = vpack.c.b16 %v116, %v112
  %v145 = vpack.c.b16 %v117, %v113
  %v146 = vpack.c.b16 %v118, %v114
  %v147 = vpack.c.b16 %v123, %v119
  %v148 = vpack.c.b16 %v124, %v120
  %v149 = vpack.c.b16 %v125, %v121
  %v150 = vpack.c.b16 %v126, %v122
  %v151 = vpack.c.b16 %v131, %v127
  %v152 = vpack.c.b16 %v132, %v128
  %v153 = vpack.c.b16 %v133, %v129
  %v154 = vpack.c.b16 %v134, %v130
  %v155 = vpack.c.b16 %v139, %v135
  %v156 = vpack.c.b16 %v140, %v136
  %v157 = vpack.c.b16 %v141, %v137
  %v158 = vpack.c.b16 %v142, %v138
  %v239 = vunpack.c.l.b16 %v31
  %v240 = vunpack.c.l.b16 %v32
  %v241 = vunpack.c.l.b16 %v33
  %v242 = vunpack.c.l.b16 %v34
  %v243 = vunpack.c.l.b16 %v35
  %v244 = vunpack.c.l.b16 %v36
  %v245 = vunpack.c.l.b16 %v37
  %v246 = vunpack.c.l.b16 %v38
  %v247 = vunpack.c.l.b16 %v39
  %v248 = vunpack.c.l.b16 %v40
  %v249 = vunpack.c.l.b16 %v41
  %v250 = vunpack.c.l.b16 %v42
  %v251 = vunpack.c.l.b16 %v43
  %v252 = vunpack.c.l.b16 %v44
  %v253 = vunpack.c.l.b16 %v45
  %v254 = vunpack.c.l.b16 %v46
  %v255 = vunpack.c.l.b16 %v47
  %v256 = vunpack.c.l.b16 %v48
  %v257 = vunpack.c.l.b16 %v49
  %v258 = vunpack.c.l.b16 %v50
  %v259 = vunpack.c.l.b16 %v51
  %v260 = vunpack.c.l.b16 %v52
  %v261 = vunpack.c.l.b16 %v53
  %v262 = vunpack.c.l.b16 %v54
  %v263 = vunpack.c.l.b16 %v55
  %v264 = vunpack.c.l.b16 %v56
  %v265 = vunpack.c.l.b16 %v57
  %v266 = vunpack.c.l.b16 %v58
  %v267 = vunpack.c.l.b16 %v59
  %v268 = vunpack.c.l.b16 %v60
  %v269 = vunpack.c.l.b16 %v61
  %v270 = vunpack.c.l.b16 %v62
  %v271 = vunpack.c.l.b16 %v63
  %v272 = vunpack.c.l.b16 %v64
  %v273 = vunpack.c.l.b16 %v65
  %v274 = vunpack.c.l.b16 %v66
  %v275 = vunpack.c.l.b16 %v67
  %v276 = vunpack.c.l.b16 %v68
  %v277 = vunpack.c.l.b16 %v69
  %v278 = vunpack.c.l.b16 %v70
  %v279 = vunpack.c.l.b16 %v71
  %v280 = vunpack.c.l.b16 %v72
  %v281 = vunpack.c.l.b16 %v73
  %v282 = vunpack.c.l.b16 %v74
  %v283 = vunpack.c.l.b16 %v75
  %v284 = vunpack.c.l.b16 %v76
  %v285 = vunpack.c.l.b16 %v77
  %v286 = vunpack.c.l.b16 %v78
  %v287 = vunpack.c.l.b16 %v79
  %v288 = vunpack.c.l.b16 %v80
  %v289 = vunpack.c.l.b16 %v81
  %v290 = vunpack.c.l.b16 %v82
  %v291 = vunpack.c.l.b16 %v83
  %v292 = vunpack.c.l.b16 %v84
  %v293 = vunpack.c.l.b16 %v85
  %v294 = vunpack.c.l.b16 %v86
  %v295 = vunpack.c.l.b16 %v87
  %v296 = vunpack.c.l.b16 %v88
  %v297 = vunpack.c.l.b16 %v89
  %v298 = vunpack.c.l.b16 %v90
  %v299 = vunpack.c.l.b16 %v91
  %v300 = vunpack.c.l.b16 %v92
  %v301 = vunpack.c.l.b16 %v93
  %v302 = vunpack.c.l.b16 %v94
  %v303 = vpack.c.b16 %v240, %v239
  %v304 = vpack.c.b16 %v242, %v241
  %v305 = vpack.c.b16 %v244, %v243
  %v306 = vpack.c.b16 %v246, %v245
  %v307 = vpack.c.b16 %v248, %v247
  %v308 = vpack.c.b16 %v250, %v249
  %v309 = vpack.c.b16 %v252, %v251
  %v310 = vpack.c.b16 %v254, %v253
  %v311 = vpack.c.b16 %v256, %v255
  %v312 = vpack.c.b16 %v258, %v257
  %v313 = vpack.c.b16 %v260, %v259
  %v314 = vpack.c.b16 %v262, %v261
  %v315 = vpack.c.b16 %v264, %v263
  %v316 = vpack.c.b16 %v266, %v265
  %v317 = vpack.c.b16 %v268, %v267
  %v318 = vpack.c.b16 %v270, %v269
  %v319 = vpack.c.b16 %v272, %v271
  %v320 = vpack.c.b16 %v274, %v273
  %v321 = vpack.c.b16 %v276, %v275
  %v322 = vpack.c.b16 %v278, %v277
  %v323 = vpack.c.b16 %v280, %v279
  %v324 = vpack.c.b16 %v282, %v281
  %v325 = vpack.c.b16 %v284, %v283
  %v326 = vpack.c.b16 %v286, %v285
  %v327 = vpack.c.b16 %v288, %v287
  %v328 = vpack.c.b16 %v290, %v289
  %v329 = vpack.c.b16 %v292, %v291
  %v330 = vpack.c.b16 %v294, %v293
  %v331 = vpack.c.b16 %v296, %v295
  %v332 = vpack.c.b16 %v298, %v297
  %v333 = vpack.c.b16 %v300, %v299
  %v334 = vpack.c.b16 %v302, %v301
  %367 = vmatprep.subr.bf16.mxu0 0
  %368 = vmatpush1.bf16.msra.mxu0 %v310
  %369 = vmatprep.subr.bf16.mxu0 0
  %370 = vmatpush1.bf16.msra.mxu0 %v309
  %371 = vmatprep.subr.bf16.mxu0 0
  %372 = vmatpush1.bf16.msra.mxu0 %v308
  %373 = vmatprep.subr.bf16.mxu0 0
  %374 = vmatpush1.bf16.msra.mxu0 %v307
  %375 = vmatprep.subr.bf16.mxu0 0
  %376 = vmatpush1.bf16.msra.mxu0 %v306
  %377 = vmatprep.subr.bf16.mxu0 0
  %378 = vmatpush1.bf16.msra.mxu0 %v305
  %379 = vmatprep.subr.bf16.mxu0 0
  %380 = vmatpush1.bf16.msra.mxu0 %v304
  %381 = vmatprep.subr.bf16.mxu0 0
  %382 = vmatpush1.bf16.msra.mxu0 %v303
  %383 = vmatprep.subr.bf16.mxu0 0
  %384 = vmatpush2.bf16.msra.mxu0 %v318
  %385 = vmatprep.subr.bf16.mxu0 0
  %386 = vmatpush2.bf16.msra.mxu0 %v317
  %387 = vmatprep.subr.bf16.mxu0 0
  %388 = vmatpush2.bf16.msra.mxu0 %v316
  %389 = vmatprep.subr.bf16.mxu0 0
  %390 = vmatpush2.bf16.msra.mxu0 %v315
  %391 = vmatprep.subr.bf16.mxu0 0
  %392 = vmatpush2.bf16.msra.mxu0 %v314
  %393 = vmatprep.subr.bf16.mxu0 0
  %394 = vmatpush2.bf16.msra.mxu0 %v313
  %395 = vmatprep.subr.bf16.mxu0 0
  %396 = vmatpush2.bf16.msra.mxu0 %v312
  %397 = vmatprep.subr.bf16.mxu0 0
  %398 = vmatpush2.bf16.msra.mxu0 %v311
  %399 = vmatprep.mubr.bf16.mxu0 %v144
  %400 = vmatmul.mubr.bf16.gmra.mxu0 %v143
  %v401 = vpop.f32.mrf.mxu0
  %v402 = vadd.f32 0.0, %v401
  %v403 = vpop.f32.mrf.mxu0
  %v404 = vpop.f32.mrf.mxu0
  %v405 = vadd.f32 0.0, %v404
  %v406 = vpop.f32.mrf.mxu0
  %407 = vmatprep.mubr.bf16.mxu0 %v148
  %408 = vmatmul.mubr.bf16.gmra.mxu0 %v147
  %v409 = vpop.f32.mrf.mxu0
  %v410 = vadd.f32 0.0, %v409
  %v411 = vpop.f32.mrf.mxu0
  %v412 = vpop.f32.mrf.mxu0
  %v413 = vadd.f32 0.0, %v412
  %v414 = vpop.f32.mrf.mxu0
  %415 = vmatprep.mubr.bf16.mxu0 %v152
  %416 = vmatmul.mubr.bf16.gmra.mxu0 %v151
  %v417 = vpop.f32.mrf.mxu0
  %v418 = vadd.f32 0.0, %v417
  %v419 = vpop.f32.mrf.mxu0
  %v420 = vpop.f32.mrf.mxu0
  %v421 = vadd.f32 0.0, %v420
  %v422 = vpop.f32.mrf.mxu0
  %423 = vmatprep.mubr.bf16.mxu0 %v156
  %424 = vmatmul.mubr.bf16.gmra.mxu0 %v155
  %v425 = vpop.f32.mrf.mxu0
  %v426 = vadd.f32 0.0, %v425
  %v427 = vpop.f32.mrf.mxu0
  %v428 = vpop.f32.mrf.mxu0
  %v429 = vadd.f32 0.0, %v428
  %v430 = vpop.f32.mrf.mxu0
  %431 = vdwg.mxu0
  %432 = vmatprep.subr.bf16.mxu0 0
  %433 = vmatpush1.bf16.msra.mxu0 %v326
  %434 = vmatprep.subr.bf16.mxu0 0
  %435 = vmatpush1.bf16.msra.mxu0 %v325
  %436 = vmatprep.subr.bf16.mxu0 0
  %437 = vmatpush1.bf16.msra.mxu0 %v324
  %438 = vmatprep.subr.bf16.mxu0 0
  %439 = vmatpush1.bf16.msra.mxu0 %v323
  %440 = vmatprep.subr.bf16.mxu0 0
  %441 = vmatpush1.bf16.msra.mxu0 %v322
  %442 = vmatprep.subr.bf16.mxu0 0
  %443 = vmatpush1.bf16.msra.mxu0 %v321
  %444 = vmatprep.subr.bf16.mxu0 0
  %445 = vmatpush1.bf16.msra.mxu0 %v320
  %446 = vmatprep.subr.bf16.mxu0 0
  %447 = vmatpush1.bf16.msra.mxu0 %v319
  %448 = vmatprep.subr.bf16.mxu0 0
  %449 = vmatpush2.bf16.msra.mxu0 %v334
  %450 = vmatprep.subr.bf16.mxu0 0
  %451 = vmatpush2.bf16.msra.mxu0 %v333
  %452 = vmatprep.subr.bf16.mxu0 0
  %453 = vmatpush2.bf16.msra.mxu0 %v332
  %454 = vmatprep.subr.bf16.mxu0 0
  %455 = vmatpush2.bf16.msra.mxu0 %v331
  %456 = vmatprep.subr.bf16.mxu0 0
  %457 = vmatpush2.bf16.msra.mxu0 %v330
  %458 = vmatprep.subr.bf16.mxu0 0
  %459 = vmatpush2.bf16.msra.mxu0 %v329
  %460 = vmatprep.subr.bf16.mxu0 0
  %461 = vmatpush2.bf16.msra.mxu0 %v328
  %462 = vmatprep.subr.bf16.mxu0 0
  %463 = vmatpush2.bf16.msra.mxu0 %v327
  %464 = vmatprep.mubr.bf16.mxu0 %v146
  %465 = vmatmul.mubr.bf16.gmra.mxu0 %v145
  %v466 = vpop.f32.mrf.mxu0
  %v467 = vadd.f32 %v402, %v466
  %v468 = vpop.f32.mrf.mxu0
  %v469 = vpop.f32.mrf.mxu0
  %v470 = vadd.f32 %v405, %v469
  %v471 = vpop.f32.mrf.mxu0
  %472 = vmatprep.mubr.bf16.mxu0 %v150
  %473 = vmatmul.mubr.bf16.gmra.mxu0 %v149
  %v474 = vpop.f32.mrf.mxu0
  %v475 = vadd.f32 %v410, %v474
  %v476 = vpop.f32.mrf.mxu0
  %v477 = vpop.f32.mrf.mxu0
  %v478 = vadd.f32 %v413, %v477
  %v479 = vpop.f32.mrf.mxu0
  %480 = vmatprep.mubr.bf16.mxu0 %v154
  %481 = vmatmul.mubr.bf16.gmra.mxu0 %v153
  %v482 = vpop.f32.mrf.mxu0
  %v483 = vadd.f32 %v418, %v482
  %v484 = vpop.f32.mrf.mxu0
  %v485 = vpop.f32.mrf.mxu0
  %v486 = vadd.f32 %v421, %v485
  %v487 = vpop.f32.mrf.mxu0
  %488 = vmatprep.mubr.bf16.mxu0 %v158
  %489 = vmatmul.mubr.bf16.gmra.mxu0 %v157
  %v490 = vpop.f32.mrf.mxu0
  %v491 = vadd.f32 %v426, %v490
  %v492 = vpop.f32.mrf.mxu0
  %v493 = vpop.f32.mrf.mxu0
  %v494 = vadd.f32 %v429, %v493
  %v495 = vpop.f32.mrf.mxu0
  %496 = vdwg.mxu0
  %v497 = vpack.c.bf16 %v470, %v467
  %v498 = vpack.c.bf16 %v478, %v475
  %v499 = vpack.c.bf16 %v486, %v483
  %v500 = vpack.c.bf16 %v494, %v491
  %v505 = vunpack.c.l.b16 %v497
  %v506 = vunpack.c.h.b16 %v497
  %v507 = vunpack.c.l.b16 %v498
  %v508 = vunpack.c.h.b16 %v498
  %v509 = vunpack.c.l.b16 %v499
  %v510 = vunpack.c.h.b16 %v499
  %v511 = vunpack.c.l.b16 %v500
  %v512 = vunpack.c.h.b16 %v500
  %v513 = vpack.c.b16 %v505, %v505
  %v514 = vpack.c.b16 %v506, %v506
  %v515 = vpack.c.b16 %v507, %v507
  %v516 = vpack.c.b16 %v508, %v508
  %v517 = vpack.c.b16 %v509, %v509
  %v518 = vpack.c.b16 %v510, %v510
  %v519 = vpack.c.b16 %v511, %v511
  %v520 = vpack.c.b16 %v512, %v512
  %529 = vst [vmem:[%s2] sm:$0xf] %v513
  %530 = vst [vmem:[%s2 + $0x4] sm:$0xf] %v514
  %531 = vst [vmem:[%s2 + $0x8] sm:$0xf] %v515
  %532 = vst [vmem:[%s2 + $0xc] sm:$0xf] %v516
  %533 = vst [vmem:[%s2 + $0x10] sm:$0xf] %v517
  %534 = vst [vmem:[%s2 + $0x14] sm:$0xf] %v518
  %535 = vst [vmem:[%s2 + $0x18] sm:$0xf] %v519
  %536 = vst [vmem:[%s2 + $0x1c] sm:$0xf] %v520
  %v537 = vadd.f32 %v467, %v470
  %v538 = vadd.f32 %v537, %v475
  %v539 = vadd.f32 %v538, %v478
  %v540 = vadd.f32 %v539, %v483
  %v541 = vadd.f32 %v540, %v486
  %v542 = vadd.f32 %v541, %v491
  %v543 = vadd.f32 %v542, %v494
  %v544 = vrot.slane %v543, 4
  %v545 = vadd.f32 %v543, %v544
  %v546 = vrot.slane %v545, 2
  %v547 = vadd.f32 %v545, %v546
  %v548 = vrot.slane %v547, 1
  %v549 = vadd.f32 %v547, %v548
  %550 = vst [vmem:[%s3] sm:$0x1] %v549
  %v551 = vmul.f32 %v467, %v467
  %v552 = vmul.f32 %v470, %v470
  %v553 = vmul.f32 %v475, %v475
  %v554 = vmul.f32 %v478, %v478
  %v555 = vmul.f32 %v483, %v483
  %v556 = vmul.f32 %v486, %v486
  %v557 = vmul.f32 %v491, %v491
  %v558 = vmul.f32 %v494, %v494
  %v559 = vadd.f32 %v551, %v552
  %v560 = vadd.f32 %v559, %v553
  %v561 = vadd.f32 %v560, %v554
  %v562 = vadd.f32 %v561, %v555
  %v563 = vadd.f32 %v562, %v556
  %v564 = vadd.f32 %v563, %v557
  %v565 = vadd.f32 %v564, %v558
  %v566 = vrot.slane %v565, 4
  %v567 = vadd.f32 %v565, %v566
  %v568 = vrot.slane %v567, 2
  %v569 = vadd.f32 %v567, %v568
  %v570 = vrot.slane %v569, 1
  %v571 = vadd.f32 %v569, %v570
  %572 = vst [vmem:[%s4] sm:$0x1] %v571
  // Predicated region
  $region10: #{_encoder_forward.7} parent=0 // pred_check
    _
  $region11: #{_encoder_forward.7} parent=0 // pred_check_branch
    %574 = sbr.rel (0) target = $region13
  $region12: #{_encoder_forward.7} parent=0 // pred_region
    _
  $region13: #{_encoder_forward.7} parent=0 // pred_fallthru
    _
  // Predicated region
  $region14: #{_encoder_forward.7} parent=0 // pred_check
    _
  $region15: #{_encoder_forward.7} parent=0 // pred_check_branch
    %576 = sbr.rel (0) target = $region17
  $region16: #{_encoder_forward.7} parent=0 // pred_region
    _
  $region17: #{_encoder_forward.7} parent=0 // pred_fallthru
    _
  // Predicated region
  $region18: #{_encoder_forward.7} parent=0 // pred_check
    _
  $region19: #{_encoder_forward.7} parent=0 // pred_check_branch
    %578 = sbr.rel (0) target = $region21
  $region20: #{_encoder_forward.7} parent=0 // pred_region
    _
  $region21: #{_encoder_forward.7} parent=0 // pred_fallthru
    _
  // Predicated region
  $region22: #{_encoder_forward.7} parent=0 // pred_check
    _
  $region23: #{_encoder_forward.7} parent=0 // pred_check_branch
    %580 = sbr.rel (0) target = $region25
  $region24: #{_encoder_forward.7} parent=0 // pred_region
    _
  $region25: #{_encoder_forward.7} parent=0 // pred_fallthru
    _
  // Predicated region
  $region26: #{_encoder_forward.7} parent=0 // pred_check
    _
  $region27: #{_encoder_forward.7} parent=0 // pred_check_branch
    %582 = sbr.rel (0) target = $region29
  $region28: #{_encoder_forward.7} parent=0 // pred_region
    _
  $region29: #{_encoder_forward.7} parent=0 // pred_fallthru
    _
  // Predicated region
  $region30: #{_encoder_forward.7} parent=0 // pred_check
    _
  $region31: #{_encoder_forward.7} parent=0 // pred_check_branch
    %584 = sbr.rel (0) target = $region33
  $region32: #{_encoder_forward.7} parent=0 // pred_region
    _
  $region33: #{_encoder_forward.7} parent=0 // pred_fallthru
    _

// kernel: tile.17
$region0: #{tile.17}
  #allocation0 [shape = 's32[1]{0}', space=sflag, size = 0x4, scoped, tag = 'scoped memory for tile.17']
  %s0 = inlined_call_operand.vmem [shape: f32[128], index: 0, kind: input, shape index: {}]
  %s1 = inlined_call_operand.vmem [shape: f32[4,128], index: 1, kind: output, shape index: {}]
  // Predicated region
  $region2: #{tile.17} parent=0 // pred_check
    _
  $region3: #{tile.17} parent=0 // pred_check_branch
    %3 = sbr.rel (0) target = $region5
  $region4: #{tile.17} parent=0 // pred_region
    _
  $region5: #{tile.17} parent=0 // pred_fallthru
    _
  %v4 = vld [vmem:[%s0] ss:$0 sm:$0xff]
  %5 = vst [vmem:[%s1] sm:$0xf] %v4

// kernel: _encoder_forward.8
$region0: #{_encoder_forward.8}
  #allocation0 [shape = 'u32[]', space=smem, size = 0x4, offset = 0x4, fixed_abs, tag = 'smem constant byte address 0x4 - core index']
  #allocation1 [shape = 'u32[144,128]{1,0:T(1,128)}', space=vmem, size = 0x12000, scoped, tag = 'internal scratch']
  %s0 = inlined_call_operand.vmem [shape: bf16[16,512], index: 0, kind: input, shape index: {}]
  %s1 = inlined_call_operand.vmem [shape: bf16[512,128], index: 1, kind: input, shape index: {}]
  %s2 = inlined_call_operand.vmem [shape: bf16[16,128], index: 2, kind: output, shape index: {0}]
  %s3 = inlined_call_operand.vmem [shape: f32[1,1,1,128], index: 3, kind: output, shape index: {1}]
  %s4 = inlined_call_operand.vmem [shape: f32[1,1,1,128], index: 4, kind: output, shape index: {2}]
  %5 = xla_tuple %s2, %s3, %s4
  %s6 = sld [smem:[#allocation0]]
  $region34: #{_encoder_forward.8} parent=0
    _
  %s8 = ssub.s32 1, %s6
  %s9 = scalar_select 0, %s8, %s6
  // Predicated region
  $region2: #{_encoder_forward.8} parent=0 // pred_check
    _
  $region3: #{_encoder_forward.8} parent=0 // pred_check_branch
    %11 = sbr.rel (0) target = $region5
  $region4: #{_encoder_forward.8} parent=0 // pred_region
    _
  $region5: #{_encoder_forward.8} parent=0 // pred_fallthru
    _
  // Predicated region
  $region6: #{_encoder_forward.8} parent=0 // pred_check
    _
  $region7: #{_encoder_forward.8} parent=0 // pred_check_branch
    %13 = sbr.rel (0) target = $region9
  $region8: #{_encoder_forward.8} parent=0 // pred_region
    _
  $region9: #{_encoder_forward.8} parent=0 // pred_fallthru
    _
  %v15 = vld [vmem:[%s0] sm:$0xff]
  %v16 = vld [vmem:[%s0 + $0x8] sm:$0xff]
  %v17 = vld [vmem:[%s0 + $0x10] sm:$0xff]
  %v18 = vld [vmem:[%s0 + $0x18] sm:$0xff]
  %v19 = vld [vmem:[%s1] sm:$0xf]
  %v20 = vld [vmem:[%s1 + $0x4] sm:$0xf]
  %v21 = vld [vmem:[%s1 + $0x8] sm:$0xf]
  %v22 = vld [vmem:[%s1 + $0xc] sm:$0xf]
  %v23 = vld [vmem:[%s1 + $0x10] sm:$0xf]
  %v24 = vld [vmem:[%s1 + $0x14] sm:$0xf]
  %v25 = vld [vmem:[%s1 + $0x18] sm:$0xf]
  %v26 = vld [vmem:[%s1 + $0x1c] sm:$0xf]
  %v27 = vld [vmem:[%s1 + $0x20] sm:$0xf]
  %v28 = vld [vmem:[%s1 + $0x24] sm:$0xf]
  %v29 = vld [vmem:[%s1 + $0x28] sm:$0xf]
  %v30 = vld [vmem:[%s1 + $0x2c] sm:$0xf]
  %v31 = vld [vmem:[%s1 + $0x30] sm:$0xf]
  %v32 = vld [vmem:[%s1 + $0x34] sm:$0xf]
  %v33 = vld [vmem:[%s1 + $0x38] sm:$0xf]
  %v34 = vld [vmem:[%s1 + $0x3c] sm:$0xf]
  %v35 = vld [vmem:[%s1 + $0x40] sm:$0xf]
  %v36 = vld [vmem:[%s1 + $0x44] sm:$0xf]
  %v37 = vld [vmem:[%s1 + $0x48] sm:$0xf]
  %v38 = vld [vmem:[%s1 + $0x4c] sm:$0xf]
  %v39 = vld [vmem:[%s1 + $0x50] sm:$0xf]
  %v40 = vld [vmem:[%s1 + $0x54] sm:$0xf]
  %v41 = vld [vmem:[%s1 + $0x58] sm:$0xf]
  %v42 = vld [vmem:[%s1 + $0x5c] sm:$0xf]
  %v43 = vld [vmem:[%s1 + $0x60] sm:$0xf]
  %v44 = vld [vmem:[%s1 + $0x64] sm:$0xf]
  %v45 = vld [vmem:[%s1 + $0x68] sm:$0xf]
  %v46 = vld [vmem:[%s1 + $0x6c] sm:$0xf]
  %v47 = vld [vmem:[%s1 + $0x70] sm:$0xf]
  %v48 = vld [vmem:[%s1 + $0x74] sm:$0xf]
  %v49 = vld [vmem:[%s1 + $0x78] sm:$0xf]
  %v50 = vld [vmem:[%s1 + $0x7c] sm:$0xf]
  %v51 = vld [vmem:[%s1 + $0x80] sm:$0xf]
  %v52 = vld [vmem:[%s1 + $0x84] sm:$0xf]
  %v53 = vld [vmem:[%s1 + $0x88] sm:$0xf]
  %v54 = vld [vmem:[%s1 + $0x8c] sm:$0xf]
  %v55 = vld [vmem:[%s1 + $0x90] sm:$0xf]
  %v56 = vld [vmem:[%s1 + $0x94] sm:$0xf]
  %v57 = vld [vmem:[%s1 + $0x98] sm:$0xf]
  %v58 = vld [vmem:[%s1 + $0x9c] sm:$0xf]
  %v59 = vld [vmem:[%s1 + $0xa0] sm:$0xf]
  %v60 = vld [vmem:[%s1 + $0xa4] sm:$0xf]
  %v61 = vld [vmem:[%s1 + $0xa8] sm:$0xf]
  %v62 = vld [vmem:[%s1 + $0xac] sm:$0xf]
  %v63 = vld [vmem:[%s1 + $0xb0] sm:$0xf]
  %v64 = vld [vmem:[%s1 + $0xb4] sm:$0xf]
  %v65 = vld [vmem:[%s1 + $0xb8] sm:$0xf]
  %v66 = vld [vmem:[%s1 + $0xbc] sm:$0xf]
  %v67 = vld [vmem:[%s1 + $0xc0] sm:$0xf]
  %v68 = vld [vmem:[%s1 + $0xc4] sm:$0xf]
  %v69 = vld [vmem:[%s1 + $0xc8] sm:$0xf]
  %v70 = vld [vmem:[%s1 + $0xcc] sm:$0xf]
  %v71 = vld [vmem:[%s1 + $0xd0] sm:$0xf]
  %v72 = vld [vmem:[%s1 + $0xd4] sm:$0xf]
  %v73 = vld [vmem:[%s1 + $0xd8] sm:$0xf]
  %v74 = vld [vmem:[%s1 + $0xdc] sm:$0xf]
  %v75 = vld [vmem:[%s1 + $0xe0] sm:$0xf]
  %v76 = vld [vmem:[%s1 + $0xe4] sm:$0xf]
  %v77 = vld [vmem:[%s1 + $0xe8] sm:$0xf]
  %v78 = vld [vmem:[%s1 + $0xec] sm:$0xf]
  %v79 = vld [vmem:[%s1 + $0xf0] sm:$0xf]
  %v80 = vld [vmem:[%s1 + $0xf4] sm:$0xf]
  %v81 = vld [vmem:[%s1 + $0xf8] sm:$0xf]
  %v82 = vld [vmem:[%s1 + $0xfc] sm:$0xf]
  %v87 = vunpack.c.l.b16 %v15
  %v88 = vunpack.c.h.b16 %v15
  %v89 = vunpack.c.l.b16 %v16
  %v90 = vunpack.c.h.b16 %v16
  %v91 = vunpack.c.l.b16 %v17
  %v92 = vunpack.c.h.b16 %v17
  %v93 = vunpack.c.l.b16 %v18
  %v94 = vunpack.c.h.b16 %v18
  %v95 = vpack.c.b16 %v91, %v87
  %v96 = vpack.c.b16 %v92, %v88
  %v97 = vpack.c.b16 %v93, %v89
  %v98 = vpack.c.b16 %v94, %v90
  %v167 = vunpack.c.l.b16 %v19
  %v168 = vunpack.c.l.b16 %v20
  %v169 = vunpack.c.l.b16 %v21
  %v170 = vunpack.c.l.b16 %v22
  %v171 = vunpack.c.l.b16 %v23
  %v172 = vunpack.c.l.b16 %v24
  %v173 = vunpack.c.l.b16 %v25
  %v174 = vunpack.c.l.b16 %v26
  %v175 = vunpack.c.l.b16 %v27
  %v176 = vunpack.c.l.b16 %v28
  %v177 = vunpack.c.l.b16 %v29
  %v178 = vunpack.c.l.b16 %v30
  %v179 = vunpack.c.l.b16 %v31
  %v180 = vunpack.c.l.b16 %v32
  %v181 = vunpack.c.l.b16 %v33
  %v182 = vunpack.c.l.b16 %v34
  %v183 = vunpack.c.l.b16 %v35
  %v184 = vunpack.c.l.b16 %v36
  %v185 = vunpack.c.l.b16 %v37
  %v186 = vunpack.c.l.b16 %v38
  %v187 = vunpack.c.l.b16 %v39
  %v188 = vunpack.c.l.b16 %v40
  %v189 = vunpack.c.l.b16 %v41
  %v190 = vunpack.c.l.b16 %v42
  %v191 = vunpack.c.l.b16 %v43
  %v192 = vunpack.c.l.b16 %v44
  %v193 = vunpack.c.l.b16 %v45
  %v194 = vunpack.c.l.b16 %v46
  %v195 = vunpack.c.l.b16 %v47
  %v196 = vunpack.c.l.b16 %v48
  %v197 = vunpack.c.l.b16 %v49
  %v198 = vunpack.c.l.b16 %v50
  %v199 = vunpack.c.l.b16 %v51
  %v200 = vunpack.c.l.b16 %v52
  %v201 = vunpack.c.l.b16 %v53
  %v202 = vunpack.c.l.b16 %v54
  %v203 = vunpack.c.l.b16 %v55
  %v204 = vunpack.c.l.b16 %v56
  %v205 = vunpack.c.l.b16 %v57
  %v206 = vunpack.c.l.b16 %v58
  %v207 = vunpack.c.l.b16 %v59
  %v208 = vunpack.c.l.b16 %v60
  %v209 = vunpack.c.l.b16 %v61
  %v210 = vunpack.c.l.b16 %v62
  %v211 = vunpack.c.l.b16 %v63
  %v212 = vunpack.c.l.b16 %v64
  %v213 = vunpack.c.l.b16 %v65
  %v214 = vunpack.c.l.b16 %v66
  %v215 = vunpack.c.l.b16 %v67
  %v216 = vunpack.c.l.b16 %v68
  %v217 = vunpack.c.l.b16 %v69
  %v218 = vunpack.c.l.b16 %v70
  %v219 = vunpack.c.l.b16 %v71
  %v220 = vunpack.c.l.b16 %v72
  %v221 = vunpack.c.l.b16 %v73
  %v222 = vunpack.c.l.b16 %v74
  %v223 = vunpack.c.l.b16 %v75
  %v224 = vunpack.c.l.b16 %v76
  %v225 = vunpack.c.l.b16 %v77
  %v226 = vunpack.c.l.b16 %v78
  %v227 = vunpack.c.l.b16 %v79
  %v228 = vunpack.c.l.b16 %v80
  %v229 = vunpack.c.l.b16 %v81
  %v230 = vunpack.c.l.b16 %v82
  %v231 = vpack.c.b16 %v168, %v167
  %v232 = vpack.c.b16 %v170, %v169
  %v233 = vpack.c.b16 %v172, %v171
  %v234 = vpack.c.b16 %v174, %v173
  %v235 = vpack.c.b16 %v176, %v175
  %v236 = vpack.c.b16 %v178, %v177
  %v237 = vpack.c.b16 %v180, %v179
  %v238 = vpack.c.b16 %v182, %v181
  %v239 = vpack.c.b16 %v184, %v183
  %v240 = vpack.c.b16 %v186, %v185
  %v241 = vpack.c.b16 %v188, %v187
  %v242 = vpack.c.b16 %v190, %v189
  %v243 = vpack.c.b16 %v192, %v191
  %v244 = vpack.c.b16 %v194, %v193
  %v245 = vpack.c.b16 %v196, %v195
  %v246 = vpack.c.b16 %v198, %v197
  %v247 = vpack.c.b16 %v200, %v199
  %v248 = vpack.c.b16 %v202, %v201
  %v249 = vpack.c.b16 %v204, %v203
  %v250 = vpack.c.b16 %v206, %v205
  %v251 = vpack.c.b16 %v208, %v207
  %v252 = vpack.c.b16 %v210, %v209
  %v253 = vpack.c.b16 %v212, %v211
  %v254 = vpack.c.b16 %v214, %v213
  %v255 = vpack.c.b16 %v216, %v215
  %v256 = vpack.c.b16 %v218, %v217
  %v257 = vpack.c.b16 %v220, %v219
  %v258 = vpack.c.b16 %v222, %v221
  %v259 = vpack.c.b16 %v224, %v223
  %v260 = vpack.c.b16 %v226, %v225
  %v261 = vpack.c.b16 %v228, %v227
  %v262 = vpack.c.b16 %v230, %v229
  %295 = vmatprep.subr.bf16.mxu0 0
  %296 = vmatpush1.bf16.msra.mxu0 %v238
  %297 = vmatprep.subr.bf16.mxu0 0
  %298 = vmatpush1.bf16.msra.mxu0 %v237
  %299 = vmatprep.subr.bf16.mxu0 0
  %300 = vmatpush1.bf16.msra.mxu0 %v236
  %301 = vmatprep.subr.bf16.mxu0 0
  %302 = vmatpush1.bf16.msra.mxu0 %v235
  %303 = vmatprep.subr.bf16.mxu0 0
  %304 = vmatpush1.bf16.msra.mxu0 %v234
  %305 = vmatprep.subr.bf16.mxu0 0
  %306 = vmatpush1.bf16.msra.mxu0 %v233
  %307 = vmatprep.subr.bf16.mxu0 0
  %308 = vmatpush1.bf16.msra.mxu0 %v232
  %309 = vmatprep.subr.bf16.mxu0 0
  %310 = vmatpush1.bf16.msra.mxu0 %v231
  %311 = vmatprep.subr.bf16.mxu0 0
  %312 = vmatpush2.bf16.msra.mxu0 %v246
  %313 = vmatprep.subr.bf16.mxu0 0
  %314 = vmatpush2.bf16.msra.mxu0 %v245
  %315 = vmatprep.subr.bf16.mxu0 0
  %316 = vmatpush2.bf16.msra.mxu0 %v244
  %317 = vmatprep.subr.bf16.mxu0 0
  %318 = vmatpush2.bf16.msra.mxu0 %v243
  %319 = vmatprep.subr.bf16.mxu0 0
  %320 = vmatpush2.bf16.msra.mxu0 %v242
  %321 = vmatprep.subr.bf16.mxu0 0
  %322 = vmatpush2.bf16.msra.mxu0 %v241
  %323 = vmatprep.subr.bf16.mxu0 0
  %324 = vmatpush2.bf16.msra.mxu0 %v240
  %325 = vmatprep.subr.bf16.mxu0 0
  %326 = vmatpush2.bf16.msra.mxu0 %v239
  %327 = vmatprep.mubr.bf16.mxu0 %v96
  %328 = vmatmul.mubr.bf16.gmra.mxu0 %v95
  %v329 = vpop.f32.mrf.mxu0
  %v330 = vadd.f32 0.0, %v329
  %v331 = vpop.f32.mrf.mxu0
  %v332 = vpop.f32.mrf.mxu0
  %v333 = vadd.f32 0.0, %v332
  %v334 = vpop.f32.mrf.mxu0
  %335 = vdwg.mxu0
  %336 = vmatprep.subr.bf16.mxu0 0
  %337 = vmatpush1.bf16.msra.mxu0 %v254
  %338 = vmatprep.subr.bf16.mxu0 0
  %339 = vmatpush1.bf16.msra.mxu0 %v253
  %340 = vmatprep.subr.bf16.mxu0 0
  %341 = vmatpush1.bf16.msra.mxu0 %v252
  %342 = vmatprep.subr.bf16.mxu0 0
  %343 = vmatpush1.bf16.msra.mxu0 %v251
  %344 = vmatprep.subr.bf16.mxu0 0
  %345 = vmatpush1.bf16.msra.mxu0 %v250
  %346 = vmatprep.subr.bf16.mxu0 0
  %347 = vmatpush1.bf16.msra.mxu0 %v249
  %348 = vmatprep.subr.bf16.mxu0 0
  %349 = vmatpush1.bf16.msra.mxu0 %v248
  %350 = vmatprep.subr.bf16.mxu0 0
  %351 = vmatpush1.bf16.msra.mxu0 %v247
  %352 = vmatprep.subr.bf16.mxu0 0
  %353 = vmatpush2.bf16.msra.mxu0 %v262
  %354 = vmatprep.subr.bf16.mxu0 0
  %355 = vmatpush2.bf16.msra.mxu0 %v261
  %356 = vmatprep.subr.bf16.mxu0 0
  %357 = vmatpush2.bf16.msra.mxu0 %v260
  %358 = vmatprep.subr.bf16.mxu0 0
  %359 = vmatpush2.bf16.msra.mxu0 %v259
  %360 = vmatprep.subr.bf16.mxu0 0
  %361 = vmatpush2.bf16.msra.mxu0 %v258
  %362 = vmatprep.subr.bf16.mxu0 0
  %363 = vmatpush2.bf16.msra.mxu0 %v257
  %364 = vmatprep.subr.bf16.mxu0 0
  %365 = vmatpush2.bf16.msra.mxu0 %v256
  %366 = vmatprep.subr.bf16.mxu0 0
  %367 = vmatpush2.bf16.msra.mxu0 %v255
  %368 = vmatprep.mubr.bf16.mxu0 %v98
  %369 = vmatmul.mubr.bf16.gmra.mxu0 %v97
  %v370 = vpop.f32.mrf.mxu0
  %v371 = vadd.f32 %v330, %v370
  %v372 = vpop.f32.mrf.mxu0
  %v373 = vpop.f32.mrf.mxu0
  %v374 = vadd.f32 %v333, %v373
  %v375 = vpop.f32.mrf.mxu0
  %376 = vdwg.mxu0
  %v377 = vpack.c.bf16 %v374, %v371
  %v379 = vunpack.c.l.b16 %v377
  %v380 = vunpack.c.h.b16 %v377
  %v381 = vpack.c.b16 %v379, %v379
  %v382 = vpack.c.b16 %v380, %v380
  %385 = vst [vmem:[%s2] sm:$0xf] %v381
  %386 = vst [vmem:[%s2 + $0x4] sm:$0xf] %v382
  %v387 = vadd.f32 %v371, %v374
  %v388 = vrot.slane %v387, 4
  %v389 = vadd.f32 %v387, %v388
  %v390 = vrot.slane %v389, 2
  %v391 = vadd.f32 %v389, %v390
  %v392 = vrot.slane %v391, 1
  %v393 = vadd.f32 %v391, %v392
  %394 = vst [vmem:[%s3] sm:$0x1] %v393
  %v395 = vmul.f32 %v371, %v371
  %v396 = vmul.f32 %v374, %v374
  %v397 = vadd.f32 %v395, %v396
  %v398 = vrot.slane %v397, 4
  %v399 = vadd.f32 %v397, %v398
  %v400 = vrot.slane %v399, 2
  %v401 = vadd.f32 %v399, %v400
  %v402 = vrot.slane %v401, 1
  %v403 = vadd.f32 %v401, %v402
  %404 = vst [vmem:[%s4] sm:$0x1] %v403
  // Predicated region
  $region10: #{_encoder_forward.8} parent=0 // pred_check
    _
  $region11: #{_encoder_forward.8} parent=0 // pred_check_branch
    %406 = sbr.rel (0) target = $region13
  $region12: #{_encoder_forward.8} parent=0 // pred_region
    _
  $region13: #{_encoder_forward.8} parent=0 // pred_fallthru
    _
  // Predicated region
  $region14: #{_encoder_forward.8} parent=0 // pred_check
    _
  $region15: #{_encoder_forward.8} parent=0 // pred_check_branch
    %408 = sbr.rel (0) target = $region17
  $region16: #{_encoder_forward.8} parent=0 // pred_region
    _
  $region17: #{_encoder_forward.8} parent=0 // pred_fallthru
    _
  // Predicated region
  $region18: #{_encoder_forward.8} parent=0 // pred_check
    _
  $region19: #{_encoder_forward.8} parent=0 // pred_check_branch
    %410 = sbr.rel (0) target = $region21
  $region20: #{_encoder_forward.8} parent=0 // pred_region
    _
  $region21: #{_encoder_forward.8} parent=0 // pred_fallthru
    _
  // Predicated region
  $region22: #{_encoder_forward.8} parent=0 // pred_check
    _
  $region23: #{_encoder_forward.8} parent=0 // pred_check_branch
    %412 = sbr.rel (0) target = $region25
  $region24: #{_encoder_forward.8} parent=0 // pred_region
    _
  $region25: #{_encoder_forward.8} parent=0 // pred_fallthru
    _
  // Predicated region
  $region26: #{_encoder_forward.8} parent=0 // pred_check
    _
  $region27: #{_encoder_forward.8} parent=0 // pred_check_branch
    %414 = sbr.rel (0) target = $region29
  $region28: #{_encoder_forward.8} parent=0 // pred_region
    _
  $region29: #{_encoder_forward.8} parent=0 // pred_fallthru
    _
  // Predicated region
  $region30: #{_encoder_forward.8} parent=0 // pred_check
    _
  $region31: #{_encoder_forward.8} parent=0 // pred_check_branch
    %416 = sbr.rel (0) target = $region33
  $region32: #{_encoder_forward.8} parent=0 // pred_region
    _
  $region33: #{_encoder_forward.8} parent=0 // pred_fallthru
    _

// kernel: _encoder_forward.9
$region0: #{_encoder_forward.9}
  #allocation0 [shape = 'u32[]', space=smem, size = 0x4, offset = 0x4, fixed_abs, tag = 'smem constant byte address 0x4 - core index']
  #allocation1 [shape = 'u32[144,128]{1,0:T(1,128)}', space=vmem, size = 0x12000, scoped, tag = 'internal scratch']
  %s0 = inlined_call_operand.vmem [shape: bf16[4,512], index: 0, kind: input, shape index: {}]
  %s1 = inlined_call_operand.vmem [shape: f32[1,512], index: 1, kind: input, shape index: {}]
  %s2 = inlined_call_operand.vmem [shape: f32[1,512], index: 2, kind: input, shape index: {}]
  %s3 = inlined_call_operand.vmem [shape: bf16[512,128], index: 3, kind: input, shape index: {}]
  %s4 = inlined_call_operand.vmem [shape: f32[1,128], index: 4, kind: input, shape index: {}]
  %s5 = inlined_call_operand.hbm [shape: f32[4,128], index: 5, kind: output, shape index: {}]
  %s6 = sld [smem:[#allocation0]]
  $region30: #{_encoder_forward.9} parent=0
    _
  %s8 = ssub.s32 1, %s6
  %s9 = scalar_select 0, %s8, %s6
  $region1: #{_encoder_forward.9} parent=0
    #allocation2 [shape = 'u8[2048]{0}', space=vmem, size = 0x800, scoped, tag = 'output window, operand 0, single buffered']
    #allocation3 [shape = 's32[1]{0}', space=sflag, size = 0x4, scoped, tag = 'scoped memory for _encoder_forward.9']
    %10 = vsyncpa [#allocation3], 0
    // Predicated region
    $region2: #{_encoder_forward.9} parent=1 // pred_check
      _
    $region3: #{_encoder_forward.9} parent=1 // pred_check_branch
      %12 = sbr.rel (0) target = $region5
    $region4: #{_encoder_forward.9} parent=1 // pred_region
      _
    $region5: #{_encoder_forward.9} parent=1 // pred_fallthru
      _
    // Predicated region
    $region6: #{_encoder_forward.9} parent=1 // pred_check
      _
    $region7: #{_encoder_forward.9} parent=1 // pred_check_branch
      %14 = sbr.rel (0) target = $region9
    $region8: #{_encoder_forward.9} parent=1 // pred_region
      _
    $region9: #{_encoder_forward.9} parent=1 // pred_fallthru
      _
    // Predicated region
    $region10: #{_encoder_forward.9} parent=1 // pred_check
      _
    $region11: #{_encoder_forward.9} parent=1 // pred_check_branch
      %16 = sbr.rel (0) target = $region13
    $region12: #{_encoder_forward.9} parent=1 // pred_region
      _
    $region13: #{_encoder_forward.9} parent=1 // pred_fallthru
      _
    // Predicated region
    $region14: #{_encoder_forward.9} parent=1 // pred_check
      _
    $region15: #{_encoder_forward.9} parent=1 // pred_check_branch
      %18 = sbr.rel (0) target = $region17
    $region16: #{_encoder_forward.9} parent=1 // pred_region
      _
    $region17: #{_encoder_forward.9} parent=1 // pred_fallthru
      _
    // Predicated region
    $region18: #{_encoder_forward.9} parent=1 // pred_check
      _
    $region19: #{_encoder_forward.9} parent=1 // pred_check_branch
      %20 = sbr.rel (0) target = $region21
    $region20: #{_encoder_forward.9} parent=1 // pred_region
      _
    $region21: #{_encoder_forward.9} parent=1 // pred_fallthru
      _
    %v22 = vld [vmem:[%s0] sm:$0xff]
    %v23 = vunpack.c.l.bf16 %v22
    %v24 = vunpack.c.h.bf16 %v22
    %v25 = vld [vmem:[%s1] sm:$0xf]
    %v27 = vlaneseq
    %v28 = vshrl.u32 %v27, 7
    %v29 = vsub.s32 0, %v28
    %v30 = vrot.slane %v25, %v29
    %v31 = vlaneseq
    %v32 = vshrl.u32 %v31, 7
    %v33 = vsub.s32 1, %v32
    %v34 = vrot.slane %v25, %v33
    %v35 = vlaneseq
    %v36 = vshrl.u32 %v35, 7
    %v37 = vsub.s32 2, %v36
    %v38 = vrot.slane %v25, %v37
    %v39 = vlaneseq
    %v40 = vshrl.u32 %v39, 7
    %v41 = vsub.s32 3, %v40
    %v42 = vrot.slane %v25, %v41
    %v43 = vcombine.low %v30, %v34
    %v44 = vcombine.low %v38, %v42
    %v47 = vmul.f32 %v23, %v43
    %v48 = vmul.f32 %v24, %v44
    %v49 = vld [vmem:[%s2] sm:$0xf]
    %v51 = vlaneseq
    %v52 = vshrl.u32 %v51, 7
    %v53 = vsub.s32 0, %v52
    %v54 = vrot.slane %v49, %v53
    %v55 = vlaneseq
    %v56 = vshrl.u32 %v55, 7
    %v57 = vsub.s32 1, %v56
    %v58 = vrot.slane %v49, %v57
    %v59 = vlaneseq
    %v60 = vshrl.u32 %v59, 7
    %v61 = vsub.s32 2, %v60
    %v62 = vrot.slane %v49, %v61
    %v63 = vlaneseq
    %v64 = vshrl.u32 %v63, 7
    %v65 = vsub.s32 3, %v64
    %v66 = vrot.slane %v49, %v65
    %v67 = vcombine.low %v54, %v58
    %v68 = vcombine.low %v62, %v66
    %v71 = vadd.f32 %v47, %v67
    %v72 = vadd.f32 %v48, %v68
    %vm73 = vcmp.gt.f32.partialorder %v71, 0.0
    %vm74 = vcmp.gt.f32.partialorder %v72, 0.0
    %v75 = vmul.f32 %v71, 0.2
    %v76 = vmul.f32 %v72, 0.2
    %v77 = vsel %vm73, %v71, %v75
    %v78 = vsel %vm74, %v72, %v76
    %v81 = vcombine.high %v77, %v77
    %v82 = vcombine.high %v78, %v78
    %v85 = vpack.c.bf16 %v77, %v77
    %v86 = vpack.c.bf16 %v81, %v81
    %v87 = vpack.c.bf16 %v78, %v78
    %v88 = vpack.c.bf16 %v82, %v82
    %v89 = vld [vmem:[%s3] sm:$0xf]
    %v90 = vld [vmem:[%s3 + $0x4] sm:$0xf]
    %v91 = vld [vmem:[%s3 + $0x8] sm:$0xf]
    %v92 = vld [vmem:[%s3 + $0xc] sm:$0xf]
    %v93 = vld [vmem:[%s3 + $0x10] sm:$0xf]
    %v94 = vld [vmem:[%s3 + $0x14] sm:$0xf]
    %v95 = vld [vmem:[%s3 + $0x18] sm:$0xf]
    %v96 = vld [vmem:[%s3 + $0x1c] sm:$0xf]
    %v97 = vld [vmem:[%s3 + $0x20] sm:$0xf]
    %v98 = vld [vmem:[%s3 + $0x24] sm:$0xf]
    %v99 = vld [vmem:[%s3 + $0x28] sm:$0xf]
    %v100 = vld [vmem:[%s3 + $0x2c] sm:$0xf]
    %v101 = vld [vmem:[%s3 + $0x30] sm:$0xf]
    %v102 = vld [vmem:[%s3 + $0x34] sm:$0xf]
    %v103 = vld [vmem:[%s3 + $0x38] sm:$0xf]
    %v104 = vld [vmem:[%s3 + $0x3c] sm:$0xf]
    %v105 = vld [vmem:[%s3 + $0x40] sm:$0xf]
    %v106 = vld [vmem:[%s3 + $0x44] sm:$0xf]
    %v107 = vld [vmem:[%s3 + $0x48] sm:$0xf]
    %v108 = vld [vmem:[%s3 + $0x4c] sm:$0xf]
    %v109 = vld [vmem:[%s3 + $0x50] sm:$0xf]
    %v110 = vld [vmem:[%s3 + $0x54] sm:$0xf]
    %v111 = vld [vmem:[%s3 + $0x58] sm:$0xf]
    %v112 = vld [vmem:[%s3 + $0x5c] sm:$0xf]
    %v113 = vld [vmem:[%s3 + $0x60] sm:$0xf]
    %v114 = vld [vmem:[%s3 + $0x64] sm:$0xf]
    %v115 = vld [vmem:[%s3 + $0x68] sm:$0xf]
    %v116 = vld [vmem:[%s3 + $0x6c] sm:$0xf]
    %v117 = vld [vmem:[%s3 + $0x70] sm:$0xf]
    %v118 = vld [vmem:[%s3 + $0x74] sm:$0xf]
    %v119 = vld [vmem:[%s3 + $0x78] sm:$0xf]
    %v120 = vld [vmem:[%s3 + $0x7c] sm:$0xf]
    %v121 = vld [vmem:[%s3 + $0x80] sm:$0xf]
    %v122 = vld [vmem:[%s3 + $0x84] sm:$0xf]
    %v123 = vld [vmem:[%s3 + $0x88] sm:$0xf]
    %v124 = vld [vmem:[%s3 + $0x8c] sm:$0xf]
    %v125 = vld [vmem:[%s3 + $0x90] sm:$0xf]
    %v126 = vld [vmem:[%s3 + $0x94] sm:$0xf]
    %v127 = vld [vmem:[%s3 + $0x98] sm:$0xf]
    %v128 = vld [vmem:[%s3 + $0x9c] sm:$0xf]
    %v129 = vld [vmem:[%s3 + $0xa0] sm:$0xf]
    %v130 = vld [vmem:[%s3 + $0xa4] sm:$0xf]
    %v131 = vld [vmem:[%s3 + $0xa8] sm:$0xf]
    %v132 = vld [vmem:[%s3 + $0xac] sm:$0xf]
    %v133 = vld [vmem:[%s3 + $0xb0] sm:$0xf]
    %v134 = vld [vmem:[%s3 + $0xb4] sm:$0xf]
    %v135 = vld [vmem:[%s3 + $0xb8] sm:$0xf]
    %v136 = vld [vmem:[%s3 + $0xbc] sm:$0xf]
    %v137 = vld [vmem:[%s3 + $0xc0] sm:$0xf]
    %v138 = vld [vmem:[%s3 + $0xc4] sm:$0xf]
    %v139 = vld [vmem:[%s3 + $0xc8] sm:$0xf]
    %v140 = vld [vmem:[%s3 + $0xcc] sm:$0xf]
    %v141 = vld [vmem:[%s3 + $0xd0] sm:$0xf]
    %v142 = vld [vmem:[%s3 + $0xd4] sm:$0xf]
    %v143 = vld [vmem:[%s3 + $0xd8] sm:$0xf]
    %v144 = vld [vmem:[%s3 + $0xdc] sm:$0xf]
    %v145 = vld [vmem:[%s3 + $0xe0] sm:$0xf]
    %v146 = vld [vmem:[%s3 + $0xe4] sm:$0xf]
    %v147 = vld [vmem:[%s3 + $0xe8] sm:$0xf]
    %v148 = vld [vmem:[%s3 + $0xec] sm:$0xf]
    %v149 = vld [vmem:[%s3 + $0xf0] sm:$0xf]
    %v150 = vld [vmem:[%s3 + $0xf4] sm:$0xf]
    %v151 = vld [vmem:[%s3 + $0xf8] sm:$0xf]
    %v152 = vld [vmem:[%s3 + $0xfc] sm:$0xf]
    %v153 = vld [vmem:[%s4] sm:$0x1]
    %v155 = vlaneseq
    %v156 = vshrl.u32 %v155, 7
    %v157 = vsub.s32 0, %v156
    %v158 = vrot.slane %v153, %v157
    %v224 = vunpack.c.l.b16 %v89
    %v225 = vunpack.c.l.b16 %v90
    %v226 = vunpack.c.l.b16 %v91
    %v227 = vunpack.c.l.b16 %v92
    %v228 = vunpack.c.l.b16 %v93
    %v229 = vunpack.c.l.b16 %v94
    %v230 = vunpack.c.l.b16 %v95
    %v231 = vunpack.c.l.b16 %v96
    %v232 = vunpack.c.l.b16 %v97
    %v233 = vunpack.c.l.b16 %v98
    %v234 = vunpack.c.l.b16 %v99
    %v235 = vunpack.c.l.b16 %v100
    %v236 = vunpack.c.l.b16 %v101
    %v237 = vunpack.c.l.b16 %v102
    %v238 = vunpack.c.l.b16 %v103
    %v239 = vunpack.c.l.b16 %v104
    %v240 = vunpack.c.l.b16 %v105
    %v241 = vunpack.c.l.b16 %v106
    %v242 = vunpack.c.l.b16 %v107
    %v243 = vunpack.c.l.b16 %v108
    %v244 = vunpack.c.l.b16 %v109
    %v245 = vunpack.c.l.b16 %v110
    %v246 = vunpack.c.l.b16 %v111
    %v247 = vunpack.c.l.b16 %v112
    %v248 = vunpack.c.l.b16 %v113
    %v249 = vunpack.c.l.b16 %v114
    %v250 = vunpack.c.l.b16 %v115
    %v251 = vunpack.c.l.b16 %v116
    %v252 = vunpack.c.l.b16 %v117
    %v253 = vunpack.c.l.b16 %v118
    %v254 = vunpack.c.l.b16 %v119
    %v255 = vunpack.c.l.b16 %v120
    %v256 = vunpack.c.l.b16 %v121
    %v257 = vunpack.c.l.b16 %v122
    %v258 = vunpack.c.l.b16 %v123
    %v259 = vunpack.c.l.b16 %v124
    %v260 = vunpack.c.l.b16 %v125
    %v261 = vunpack.c.l.b16 %v126
    %v262 = vunpack.c.l.b16 %v127
    %v263 = vunpack.c.l.b16 %v128
    %v264 = vunpack.c.l.b16 %v129
    %v265 = vunpack.c.l.b16 %v130
    %v266 = vunpack.c.l.b16 %v131
    %v267 = vunpack.c.l.b16 %v132
    %v268 = vunpack.c.l.b16 %v133
    %v269 = vunpack.c.l.b16 %v134
    %v270 = vunpack.c.l.b16 %v135
    %v271 = vunpack.c.l.b16 %v136
    %v272 = vunpack.c.l.b16 %v137
    %v273 = vunpack.c.l.b16 %v138
    %v274 = vunpack.c.l.b16 %v139
    %v275 = vunpack.c.l.b16 %v140
    %v276 = vunpack.c.l.b16 %v141
    %v277 = vunpack.c.l.b16 %v142
    %v278 = vunpack.c.l.b16 %v143
    %v279 = vunpack.c.l.b16 %v144
    %v280 = vunpack.c.l.b16 %v145
    %v281 = vunpack.c.l.b16 %v146
    %v282 = vunpack.c.l.b16 %v147
    %v283 = vunpack.c.l.b16 %v148
    %v284 = vunpack.c.l.b16 %v149
    %v285 = vunpack.c.l.b16 %v150
    %v286 = vunpack.c.l.b16 %v151
    %v287 = vunpack.c.l.b16 %v152
    %v288 = vpack.c.b16 %v225, %v224
    %v289 = vpack.c.b16 %v227, %v226
    %v290 = vpack.c.b16 %v229, %v228
    %v291 = vpack.c.b16 %v231, %v230
    %v292 = vpack.c.b16 %v233, %v232
    %v293 = vpack.c.b16 %v235, %v234
    %v294 = vpack.c.b16 %v237, %v236
    %v295 = vpack.c.b16 %v239, %v238
    %v296 = vpack.c.b16 %v241, %v240
    %v297 = vpack.c.b16 %v243, %v242
    %v298 = vpack.c.b16 %v245, %v244
    %v299 = vpack.c.b16 %v247, %v246
    %v300 = vpack.c.b16 %v249, %v248
    %v301 = vpack.c.b16 %v251, %v250
    %v302 = vpack.c.b16 %v253, %v252
    %v303 = vpack.c.b16 %v255, %v254
    %v304 = vpack.c.b16 %v257, %v256
    %v305 = vpack.c.b16 %v259, %v258
    %v306 = vpack.c.b16 %v261, %v260
    %v307 = vpack.c.b16 %v263, %v262
    %v308 = vpack.c.b16 %v265, %v264
    %v309 = vpack.c.b16 %v267, %v266
    %v310 = vpack.c.b16 %v269, %v268
    %v311 = vpack.c.b16 %v271, %v270
    %v312 = vpack.c.b16 %v273, %v272
    %v313 = vpack.c.b16 %v275, %v274
    %v314 = vpack.c.b16 %v277, %v276
    %v315 = vpack.c.b16 %v279, %v278
    %v316 = vpack.c.b16 %v281, %v280
    %v317 = vpack.c.b16 %v283, %v282
    %v318 = vpack.c.b16 %v285, %v284
    %v319 = vpack.c.b16 %v287, %v286
    %352 = vmatprep.subr.bf16.mxu0 0
    %353 = vmatpush1.bf16.msra.mxu0 %v295
    %354 = vmatprep.subr.bf16.mxu0 0
    %355 = vmatpush1.bf16.msra.mxu0 %v294
    %356 = vmatprep.subr.bf16.mxu0 0
    %357 = vmatpush1.bf16.msra.mxu0 %v293
    %358 = vmatprep.subr.bf16.mxu0 0
    %359 = vmatpush1.bf16.msra.mxu0 %v292
    %360 = vmatprep.subr.bf16.mxu0 0
    %361 = vmatpush1.bf16.msra.mxu0 %v291
    %362 = vmatprep.subr.bf16.mxu0 0
    %363 = vmatpush1.bf16.msra.mxu0 %v290
    %364 = vmatprep.subr.bf16.mxu0 0
    %365 = vmatpush1.bf16.msra.mxu0 %v289
    %366 = vmatprep.subr.bf16.mxu0 0
    %367 = vmatpush1.bf16.msra.mxu0 %v288
    %368 = vmatprep.subr.bf16.mxu0 0
    %369 = vmatpush2.bf16.msra.mxu0 %v303
    %370 = vmatprep.subr.bf16.mxu0 0
    %371 = vmatpush2.bf16.msra.mxu0 %v302
    %372 = vmatprep.subr.bf16.mxu0 0
    %373 = vmatpush2.bf16.msra.mxu0 %v301
    %374 = vmatprep.subr.bf16.mxu0 0
    %375 = vmatpush2.bf16.msra.mxu0 %v300
    %376 = vmatprep.subr.bf16.mxu0 0
    %377 = vmatpush2.bf16.msra.mxu0 %v299
    %378 = vmatprep.subr.bf16.mxu0 0
    %379 = vmatpush2.bf16.msra.mxu0 %v298
    %380 = vmatprep.subr.bf16.mxu0 0
    %381 = vmatpush2.bf16.msra.mxu0 %v297
    %382 = vmatprep.subr.bf16.mxu0 0
    %383 = vmatpush2.bf16.msra.mxu0 %v296
    %384 = vmatprep.mubr.bf16.mxu0 %v86
    %385 = vmatmul.mubr.bf16.gmra.mxu0 %v85
    %v386 = vpop.f32.mrf.mxu0
    %v387 = vadd.f32 %v158, %v386
    %v388 = vpop.f32.mrf.mxu0
    %v389 = vpop.f32.mrf.mxu0
    %v390 = vpop.f32.mrf.mxu0
    %391 = vdwg.mxu0
    %392 = vmatprep.subr.bf16.mxu0 0
    %393 = vmatpush1.bf16.msra.mxu0 %v311
    %394 = vmatprep.subr.bf16.mxu0 0
    %395 = vmatpush1.bf16.msra.mxu0 %v310
    %396 = vmatprep.subr.bf16.mxu0 0
    %397 = vmatpush1.bf16.msra.mxu0 %v309
    %398 = vmatprep.subr.bf16.mxu0 0
    %399 = vmatpush1.bf16.msra.mxu0 %v308
    %400 = vmatprep.subr.bf16.mxu0 0
    %401 = vmatpush1.bf16.msra.mxu0 %v307
    %402 = vmatprep.subr.bf16.mxu0 0
    %403 = vmatpush1.bf16.msra.mxu0 %v306
    %404 = vmatprep.subr.bf16.mxu0 0
    %405 = vmatpush1.bf16.msra.mxu0 %v305
    %406 = vmatprep.subr.bf16.mxu0 0
    %407 = vmatpush1.bf16.msra.mxu0 %v304
    %408 = vmatprep.subr.bf16.mxu0 0
    %409 = vmatpush2.bf16.msra.mxu0 %v319
    %410 = vmatprep.subr.bf16.mxu0 0
    %411 = vmatpush2.bf16.msra.mxu0 %v318
    %412 = vmatprep.subr.bf16.mxu0 0
    %413 = vmatpush2.bf16.msra.mxu0 %v317
    %414 = vmatprep.subr.bf16.mxu0 0
    %415 = vmatpush2.bf16.msra.mxu0 %v316
    %416 = vmatprep.subr.bf16.mxu0 0
    %417 = vmatpush2.bf16.msra.mxu0 %v315
    %418 = vmatprep.subr.bf16.mxu0 0
    %419 = vmatpush2.bf16.msra.mxu0 %v314
    %420 = vmatprep.subr.bf16.mxu0 0
    %421 = vmatpush2.bf16.msra.mxu0 %v313
    %422 = vmatprep.subr.bf16.mxu0 0
    %423 = vmatpush2.bf16.msra.mxu0 %v312
    %424 = vmatprep.mubr.bf16.mxu0 %v88
    %425 = vmatmul.mubr.bf16.gmra.mxu0 %v87
    %v426 = vpop.f32.mrf.mxu0
    %v427 = vadd.f32 %v387, %v426
    %v428 = vpop.f32.mrf.mxu0
    %v429 = vpop.f32.mrf.mxu0
    %v430 = vpop.f32.mrf.mxu0
    %431 = vdwg.mxu0
    %432 = vst [vmem:[#allocation2] sm:$0xf] %v427
    // Predicated region
    $region22: #{_encoder_forward.9} parent=1 // pred_check
      _
    $region23: #{_encoder_forward.9} parent=1 // pred_check_branch
      %434 = sbr.rel (0) target = $region25
    $region24: #{_encoder_forward.9} parent=1 // pred_region
      %s436 = ssub.s32 64, 64
      %437 = vsyncadd [#allocation3], %s436
      %s439 = sshll.u32 [#allocation2], 4
      %s440 = int_to_ptr.vmem [resolvable:$true] %s439
      %442 = dma.vmem_to_hbm [thread:$0]  %s440, 64, %s5, [#allocation3]
    $region25: #{_encoder_forward.9} parent=1 // pred_fallthru
      _
    // Predicated region
    $region26: #{_encoder_forward.9} parent=1 // pred_check
      _
    $region27: #{_encoder_forward.9} parent=1 // pred_check_branch
      %444 = sbr.rel (0) target = $region29
    $region28: #{_encoder_forward.9} parent=1 // pred_region
      %445 = dma.done [#allocation3], 64
    $region29: #{_encoder_forward.9} parent=1 // pred_fallthru
      _
    %446 = vsyncpa [#allocation3], 1

</llo_original>
